<compile_context>
chip_gen: v6e
topology: v6e:2x2x1
jax: 0.10.0
libtpu: 0.0.40
codegen_flags: <defaults>
</compile_context>

<pallas_src>
import functools

import numpy as np
import jax
import jax.numpy as jnp
from jax import lax
from jax.experimental import pallas as pl
from jax.experimental.pallas import tpu as pltpu

# ---------------- scaled-down model hyper-params ----------------------------
D = 32            # feature dim d           (PyTorch: 1024)
FC_HIDDEN = 64    # classifier hidden       (PyTorch: 4096)
C1, C2 = 8, 16    # conv channels of the scaled-down backbone
CIN_PAD = 8       # conv1 input channels padded 3 -> 8 (lane-group stride)
IMG_H = IMG_W = 16
BN_EPS = 1e-5

_VMEM = pl.BlockSpec(memory_space=pltpu.MemorySpace.VMEM)


# ============================ Pallas kernels =================================

def _backbone_kernel(x_ref, w1_ref, b1_ref, w2_ref, b2_ref,
                     o_ref, xpad1_ref, xpad2_ref):
    """Fused conv1(3x3)+ReLU+pool2x2 -> conv2(3x3)+ReLU+pool2x2, one frame block.

    Activations keep (W, C) folded into the lane axis (lane = w*stride + c),
    so each conv is a single lane-dense MXU matmul against a Toeplitz-expanded
    weight.  W zero-padding is implicit in the weight; H zero-padding is two
    zero border rows in a VMEM scratch.  The 2x2 max-pool is value-level
    (lane roll compare for W, row-pair reduce for H); pooled W positions stay
    dilated in the lanes and downstream weight rows ignore the dead groups.
    """
    nb, h1, l1 = x_ref.shape          # (nb, 16, W*CIN_PAD)      = (8, 16, 128)
    lo1 = w1_ref.shape[1]             # W  * C1                  = 128
    l2 = xpad2_ref.shape[2]           # dilated conv2 input lanes = 128
    lo2 = w2_ref.shape[1]             # (W//2) * C2              = 128
    h2, h3 = h1 // 2, h1 // 4

    # ---------------- conv block 1 ----------------
    zrow1 = jnp.zeros((nb, 1, l1), jnp.float32)
    xpad1_ref[:, 0:1, :] = zrow1                         # H padding (top)
    xpad1_ref[:, h1 + 1:h1 + 2, :] = zrow1               # H padding (bottom)
    xpad1_ref[:, 1:h1 + 1, :] = x_ref[...]

    # one matmul: 3 row-shifted slabs lane-concatenated -> (nb*H, 3*128)
    cols1 = jnp.concatenate(
        [xpad1_ref[:, kh:kh + h1, :].reshape(nb * h1, l1) for kh in range(3)],
        axis=-1).astype(jnp.bfloat16)
    act1 = jnp.dot(cols1, w1_ref[...],
                   preferred_element_type=jnp.float32) + b1_ref[...]
    act1 = jnp.maximum(act1, 0.0)                        # (nb*16, 128), lanes (w, c1)

    # 2x2 max-pool: W via lane roll (+C1) compare, H via row-pair reduce.
    pw1 = jnp.maximum(act1, pltpu.roll(act1, lo1 - C1, 1))
    pool1 = jnp.max(pw1.reshape(nb * h2, 2, lo1), axis=1)   # (nb*8, 128) dilated

    # ---------------- conv block 2 (dilated input, group stride 2*C1) -------
    zrow2 = jnp.zeros((nb, 1, l2), jnp.float32)
    xpad2_ref[:, 0:1, :] = zrow2
    xpad2_ref[:, h2 + 1:h2 + 2, :] = zrow2
    xpad2_ref[:, 1:h2 + 1, :] = pool1.reshape(nb, h2, l2)

    cols2 = jnp.concatenate(
        [xpad2_ref[:, kh:kh + h2, :].reshape(nb * h2, l2) for kh in range(3)],
        axis=-1).astype(jnp.bfloat16)                    # (nb*8, 3*128)
    act2 = jnp.dot(cols2, w2_ref[...],
                   preferred_element_type=jnp.float32) + b2_ref[...]
    act2 = jnp.maximum(act2, 0.0)                        # (nb*8, 128), lanes (w, c2)

    pw2 = jnp.maximum(act2, pltpu.roll(act2, lo2 - C2, 1))
    pool2 = jnp.max(pw2.reshape(nb * h3, 2, lo2), axis=1)   # (nb*4, 128) dilated

    o_ref[...] = pool2.reshape(nb, h3, lo2)              # lane-dense output block


def _head_lstm_kernel(feat_ref, w1_ref, b1_ref, w2_ref, b2_ref, w3_ref, b3_ref,
                      g_ref, beta_ref, wih1_ref, whh1_ref, bl1_ref,
                      wih2_ref, whh2_ref, bl2_ref,
                      o_ref, xp_ref, h1_ref, *, n_frame, n_chunks):
    """fc1+ReLU -> fc2+ReLU -> fc3 -> BatchNorm1d -> 2-layer FrameLSTM over all
    torch.split chunks, fully fused (intermediates never leave VMEM/vregs).

    fc1 rows are pre-scattered at init so they consume the dilated conv-output
    layout directly.  LSTM gate columns are stored (i, f, o, g) so sigmoid is
    applied to one contiguous 3H slice and tanh to the H slice.  The recurrence
    is fully unrolled (n_frame static), recurrent weights are bf16 with f32
    accumulation, and chunks are batched along the sublane dim.
    """
    hd = whh1_ref.shape[0]
    T, nc = n_frame, n_chunks

    # ---- classifier head (dropout = identity) ----
    h = jnp.dot(feat_ref[...].astype(jnp.bfloat16), w1_ref[...],
                preferred_element_type=jnp.float32) + b1_ref[...]
    h = jnp.maximum(h, 0.0)
    h = jnp.dot(h.astype(jnp.bfloat16), w2_ref[...],
                preferred_element_type=jnp.float32) + b2_ref[...]
    h = jnp.maximum(h, 0.0)
    f = jnp.dot(h.astype(jnp.bfloat16), w3_ref[...],
                preferred_element_type=jnp.float32) + b3_ref[...]

    # ---- BatchNorm1d (train-mode batch statistics over all frames) ----
    mean = jnp.mean(f, axis=0, keepdims=True)
    var = jnp.mean(jnp.square(f - mean), axis=0, keepdims=True)
    f = (f - mean) * lax.rsqrt(var + BN_EPS) * g_ref[...] + beta_ref[...]

    def cell(gates, c_prev):
        sg = jax.nn.sigmoid(gates[:, :3 * hd])           # (i, f, o) gates only
        i_g = sg[:, 0 * hd:1 * hd]
        f_g = sg[:, 1 * hd:2 * hd]
        o_g = sg[:, 2 * hd:3 * hd]
        g_g = jnp.tanh(gates[:, 3 * hd:4 * hd])          # g gate only
        c_new = f_g * c_prev + i_g * g_g
        return o_g * jnp.tanh(c_new), c_new

    zeros = jnp.zeros((nc, hd), jnp.float32)

    # ---- LSTM layer 1: hoisted input projection, chunk-major rows (c, t) ----
    xp_ref[...] = jnp.dot(f.astype(jnp.bfloat16), wih1_ref[...],
                          preferred_element_type=jnp.float32) + bl1_ref[...]
    hs, cs = zeros, zeros
    for t in range(T):                                   # fully unrolled
        gates = xp_ref[pl.ds(t, nc, stride=T), :] + jnp.dot(
            hs.astype(jnp.bfloat16), whh1_ref[...],
            preferred_element_type=jnp.float32)
        hs, cs = cell(gates, cs)
        h1_ref[t * nc:(t + 1) * nc, :] = hs              # time-major layer-1 seq

    # ---- LSTM layer 2: consumes layer-1 sequence straight from VMEM ----
    xp_ref[...] = jnp.dot(h1_ref[...].astype(jnp.bfloat16), wih2_ref[...],
                          preferred_element_type=jnp.float32) + bl2_ref[...]
    hs, cs = zeros, zeros
    for t in range(T):
        gates = xp_ref[t * nc:(t + 1) * nc, :] + jnp.dot(
            hs.astype(jnp.bfloat16), whh2_ref[...],
            preferred_element_type=jnp.float32)
        hs, cs = cell(gates, cs)
        o_ref[t * nc:(t + 1) * nc, :] = hs               # time-major output


# ============================ wrappers =======================================

def backbone(x_lane, p, frames_per_block=8):
    """Fused conv1+conv2 pallas_call, gridded over >=2 parallel frame blocks."""
    n, h, l_in = x_lane.shape
    nb = min(frames_per_block, n)
    while n % nb:
        nb -= 1
    l_mid = p["conv2_w"].shape[0] // 3
    lo2 = p["conv2_w"].shape[1]
    h3 = h // 4
    return pl.pallas_call(
        _backbone_kernel,
        out_shape=jax.ShapeDtypeStruct((n, h3, lo2), jnp.float32),
        grid=(n // nb,),
        in_specs=[
            pl.BlockSpec((nb, h, l_in), lambda i: (i, 0, 0)),
            pl.BlockSpec(p["conv1_w"].shape, lambda i: (0, 0)),
            pl.BlockSpec(p["conv1_b"].shape, lambda i: (0, 0)),
            pl.BlockSpec(p["conv2_w"].shape, lambda i: (0, 0)),
            pl.BlockSpec(p["conv2_b"].shape, lambda i: (0, 0)),
        ],
        out_specs=pl.BlockSpec((nb, h3, lo2), lambda i: (i, 0, 0)),
        scratch_shapes=[
            pltpu.VMEM((nb, h + 2, l_in), jnp.float32),        # H-padded conv1 in
            pltpu.VMEM((nb, h // 2 + 2, l_mid), jnp.float32),  # H-padded conv2 in
        ],
        compiler_params=pltpu.CompilerParams(
            dimension_semantics=("parallel",)),
    )(x_lane, p["conv1_w"], p["conv1_b"], p["conv2_w"], p["conv2_b"])


def head_lstm(feat, p, n_frame, n_chunks):
    """Fused head(fcs+BN) + FrameLSTM over all chunks in ONE kernel.

    NOTE: grid-less because BatchNorm1d needs full-batch statistics; on v7x
    the LSTM chunk axis could be split into a separate 2-block parallel kernel
    if the head/BN were kept apart.
    """
    n = feat.shape[0]
    hd = D
    return pl.pallas_call(
        functools.partial(_head_lstm_kernel, n_frame=n_frame, n_chunks=n_chunks),
        out_shape=jax.ShapeDtypeStruct((n, hd), jnp.float32),
        in_specs=[_VMEM] * 15,
        out_specs=_VMEM,
        scratch_shapes=[
            pltpu.VMEM((n, 4 * hd), jnp.float32),   # hoisted gate projections
            pltpu.VMEM((n, hd), jnp.float32),       # layer-1 output sequence
        ],
    )(feat, p["fc1_w"], p["fc1_b"], p["fc2_w"], p["fc2_b"],
      p["fc3_w"], p["fc3_b"], p["bn_gamma"], p["bn_beta"],
      p["l1_wih"], p["l1_whh"], p["l1_b"],
      p["l2_wih"], p["l2_whh"], p["l2_b"])


def video_feature_network(x_nchw, p, n_frame):
    """VideoFeatureNetwork.forward: list of (n_frame, D) arrays per chunk."""
    n = x_nchw.shape[0]
    # NCHW -> lane-dense (N, H, W*CIN_PAD) conv layout (one tiny XLA relayout
    # of the raw input; all subsequent padding/reordering happens in-kernel).
    x = jnp.transpose(x_nchw, (0, 2, 3, 1))
    x = jnp.pad(x, ((0, 0), (0, 0), (0, 0), (0, CIN_PAD - x.shape[3])))
    x = x.reshape(n, x.shape[1], x.shape[2] * CIN_PAD)

    feat = backbone(x, p).reshape(n, -1)                 # (N, 4*128) dilated

    # TODO(synk): torch.split would yield a shorter final chunk when
    #             n % n_frame != 0; that case is not supported here.
    assert n % n_frame == 0
    nc = n // n_frame
    out_tm = head_lstm(feat, p, n_frame, nc)             # (n_frame*nc, D)
    out = out_tm.reshape(n_frame, nc, D)
    return [out[:, c, :] for c in range(nc)]


# ============================ parameter init =================================

def _uniform(key, shape, fan_in):
    bound = 1.0 / float(np.sqrt(fan_in))
    return jax.random.uniform(key, shape, jnp.float32, -bound, bound)


def _toeplitz_conv(w, b, w_spatial, in_stride, l_in):
    """Expand a (Cout, Cin, 3, 3) conv weight into a (3*l_in, w_spatial*Cout)
    matmul weight for the lane-folded layout (lane_in = w*in_stride + c).
    W zero-padding is implicit (missing rows); dilated/dead lane groups get
    all-zero rows and therefore never contribute."""
    w = np.asarray(w, np.float32)
    cout, cin = w.shape[0], w.shape[1]
    t = np.zeros((3 * l_in, w_spatial * cout), np.float32)
    for kh in range(3):
        for kw in range(3):
            wkk = w[:, :, kh, kw].T                      # (cin, cout)
            for wo in range(w_spatial):
                wi = wo + kw - 1
                if 0 <= wi < w_spatial:
                    r0 = kh * l_in + wi * in_stride
                    t[r0:r0 + cin, wo * cout:(wo + 1) * cout] = wkk
    brow = np.tile(np.asarray(b, np.float32), w_spatial)[None, :]
    return jnp.asarray(t, jnp.bfloat16), jnp.asarray(brow, jnp.float32)


def _expand_fc1(fc1):
    """Scatter fc1 rows (PyTorch (C,H,W)-flatten order) into the dilated
    conv-output feature layout: index = h*128 + w*(2*C2) + c."""
    fc1 = np.asarray(fc1, np.float32)                    # (C2*4*4, FC_HIDDEN)
    out = np.zeros((4 * 128, fc1.shape[1]), np.float32)
    for c in range(C2):
        for h in range(4):
            for w in range(4):
                out[h * 128 + w * (2 * C2) + c, :] = fc1[c * 16 + h * 4 + w, :]
    return jnp.asarray(out, jnp.bfloat16)


def init_params(key):
    ks = jax.random.split(key, 20)
    p = {}

    # conv base weights (PyTorch layout) -> Toeplitz matmul weights (bf16)
    w1 = _uniform(ks[0], (C1, 3, 3, 3), 3 * 9)
    b1 = _uniform(ks[1], (C1,), 3 * 9)
    w2 = _uniform(ks[2], (C2, C1, 3, 3), C1 * 9)
    b2 = _uniform(ks[3], (C2,), C1 * 9)
    p["conv1_w"], p["conv1_b"] = _toeplitz_conv(
        w1, b1, IMG_W, CIN_PAD, IMG_W * CIN_PAD)                   # (384, 128)
    p["conv2_w"], p["conv2_b"] = _toeplitz_conv(
        w2, b2, IMG_W // 2, 2 * C1, (IMG_W // 2) * (2 * C1))       # (384, 128)

    # classifier head; fc1 rows scattered to the dilated conv-output layout.
    flat = C2 * 4 * 4
    fc1 = _uniform(ks[4], (flat, FC_HIDDEN), flat)
    p["fc1_w"] = _expand_fc1(fc1)                                  # (512, 64)
    p["fc1_b"] = _uniform(ks[5], (1, FC_HIDDEN), flat)
    p["fc2_w"] = _uniform(ks[6], (FC_HIDDEN, FC_HIDDEN),
                          FC_HIDDEN).astype(jnp.bfloat16)
    p["fc2_b"] = _uniform(ks[7], (1, FC_HIDDEN), FC_HIDDEN)
    p["fc3_w"] = _uniform(ks[8], (FC_HIDDEN, D), FC_HIDDEN).astype(jnp.bfloat16)
    p["fc3_b"] = _uniform(ks[9], (1, D), FC_HIDDEN)
    p["bn_gamma"] = jnp.ones((1, D), jnp.float32)                  # BN weight=1
    p["bn_beta"] = jnp.zeros((1, D), jnp.float32)                  # BN bias=0

    # FrameLSTM: two nn.LSTM(D, D).  Weights stored pre-transposed (in, 4H),
    # bf16, gate columns in (i, f, o, g) order; biases = b_ih + b_hh (f32).
    def lstm_layer(k0, k1, k2, k3):
        wih = _uniform(k0, (D, 4 * D), D).astype(jnp.bfloat16)
        whh = _uniform(k1, (D, 4 * D), D).astype(jnp.bfloat16)
        b = _uniform(k2, (1, 4 * D), D) + _uniform(k3, (1, 4 * D), D)
        return wih, whh, b

    p["l1_wih"], p["l1_whh"], p["l1_b"] = lstm_layer(ks[10], ks[11], ks[12], ks[13])
    p["l2_wih"], p["l2_whh"], p["l2_b"] = lstm_layer(ks[14], ks[15], ks[16], ks[17])
    return p


# ================================ main =======================================

if __name__ == "__main__":
    key = jax.random.PRNGKey(0)
    k_param, k_input = jax.random.split(key)

    params = init_params(k_param)

    total_frames = 16        # batch of frames (multiple of n_frame)
    n_frame = 4              # chunk length fed to FrameLSTM
    x = jax.random.normal(k_input, (total_frames, 3, IMG_H, IMG_W), jnp.float32)

    fwd = jax.jit(functools.partial(video_feature_network, n_frame=n_frame))
    outs = jax.block_until_ready(fwd(x, params))

    assert len(outs) == total_frames // n_frame
    assert all(o.shape == (n_frame, D) for o in outs)
    assert all(bool(jnp.all(jnp.isfinite(o))) for o in outs)

    print("KERNEL_OK")
</pallas_src>

<mosaic_0001>
module attributes {stable_mosaic.version = 11 : i64} {
  func.func @_backbone_kernel(%arg0: i32, %arg1: memref<8x16x128xf32, #tpu.memory_space<vmem>>, %arg2: memref<384x128xbf16, #tpu.memory_space<vmem>>, %arg3: memref<1x128xf32, #tpu.memory_space<vmem>>, %arg4: memref<384x128xbf16, #tpu.memory_space<vmem>>, %arg5: memref<1x128xf32, #tpu.memory_space<vmem>>, %arg6: memref<8x4x128xf32, #tpu.memory_space<vmem>>, %arg7: memref<8x18x128xf32, #tpu.memory_space<vmem>>, %arg8: memref<8x10x128xf32, #tpu.memory_space<vmem>>) attributes {dimension_semantics = [#tpu.dimension_semantics<parallel>], iteration_bounds = array<i64: 2>, scalar_prefetch = 0 : i64, scratch_operands = 2 : i64, tpu.core_type = #tpu.core_type<tc>, window_params = [{transform_indices = @transform_0, window_bounds = array<i64: 8, 16, 128>}, {pipeline_mode = #tpu.pipeline_mode<synchronous>, transform_indices = @transform_1, window_bounds = array<i64: 384, 128>}, {pipeline_mode = #tpu.pipeline_mode<synchronous>, transform_indices = @transform_2, window_bounds = array<i64: 1, 128>}, {pipeline_mode = #tpu.pipeline_mode<synchronous>, transform_indices = @transform_3, window_bounds = array<i64: 384, 128>}, {pipeline_mode = #tpu.pipeline_mode<synchronous>, transform_indices = @transform_4, window_bounds = array<i64: 1, 128>}, {transform_indices = @transform_5, window_bounds = array<i64: 8, 4, 128>}]} {
    %cst = arith.constant 0.000000e+00 : f32
    %0 = vector.broadcast %cst : f32 to vector<8x1x128xf32>
    %c0 = arith.constant 0 : index
    %c0_0 = arith.constant 0 : index
    %c0_1 = arith.constant 0 : index
    %1 = vector.load %arg7[%c0, %c0_0, %c0_1] : memref<8x18x128xf32, #tpu.memory_space<vmem>>, vector<8x1x128xf32>
    tpu.vector_store %arg7[%c0, %c0_0, %c0_1], %0 {strides = array<i32>} : memref<8x18x128xf32, #tpu.memory_space<vmem>>, vector<8x1x128xf32>,
    %c0_2 = arith.constant 0 : index
    %c17 = arith.constant 17 : index
    %c0_3 = arith.constant 0 : index
    %2 = vector.load %arg7[%c0_2, %c17, %c0_3] : memref<8x18x128xf32, #tpu.memory_space<vmem>>, vector<8x1x128xf32>
    tpu.vector_store %arg7[%c0_2, %c17, %c0_3], %0 {strides = array<i32>} : memref<8x18x128xf32, #tpu.memory_space<vmem>>, vector<8x1x128xf32>,
    %c0_4 = arith.constant 0 : index
    %c0_5 = arith.constant 0 : index
    %c0_6 = arith.constant 0 : index
    %3 = vector.load %arg1[%c0_4, %c0_5, %c0_6] : memref<8x16x128xf32, #tpu.memory_space<vmem>>, vector<8x16x128xf32>
    %c0_7 = arith.constant 0 : index
    %c1 = arith.constant 1 : index
    %c0_8 = arith.constant 0 : index
    %4 = vector.load %arg7[%c0_7, %c1, %c0_8] : memref<8x18x128xf32, #tpu.memory_space<vmem>>, vector<8x16x128xf32>
    tpu.vector_store %arg7[%c0_7, %c1, %c0_8], %3 {strides = array<i32>} : memref<8x18x128xf32, #tpu.memory_space<vmem>>, vector<8x16x128xf32>,
    %c0_9 = arith.constant 0 : index
    %c0_10 = arith.constant 0 : index
    %c0_11 = arith.constant 0 : index
    %5 = vector.load %arg7[%c0_9, %c0_10, %c0_11] : memref<8x18x128xf32, #tpu.memory_space<vmem>>, vector<8x16x128xf32>
    %6 = vector.shape_cast %5 : vector<8x16x128xf32> to vector<128x128xf32>
    %c0_12 = arith.constant 0 : index
    %c1_13 = arith.constant 1 : index
    %c0_14 = arith.constant 0 : index
    %7 = vector.load %arg7[%c0_12, %c1_13, %c0_14] : memref<8x18x128xf32, #tpu.memory_space<vmem>>, vector<8x16x128xf32>
    %8 = vector.shape_cast %7 : vector<8x16x128xf32> to vector<128x128xf32>
    %c0_15 = arith.constant 0 : index
    %c2 = arith.constant 2 : index
    %c0_16 = arith.constant 0 : index
    %9 = vector.load %arg7[%c0_15, %c2, %c0_16] : memref<8x18x128xf32, #tpu.memory_space<vmem>>, vector<8x16x128xf32>
    %10 = vector.shape_cast %9 : vector<8x16x128xf32> to vector<128x128xf32>
    %11 = tpu.concatenate %6, %8, %10 in 1 : vector<128x128xf32>, vector<128x128xf32>, vector<128x128xf32> -> vector<128x384xf32>
    %12 = arith.truncf %11 : vector<128x384xf32> to vector<128x384xbf16>
    %c0_17 = arith.constant 0 : index
    %c0_18 = arith.constant 0 : index
    %13 = vector.load %arg2[%c0_17, %c0_18] : memref<384x128xbf16, #tpu.memory_space<vmem>>, vector<384x128xbf16>
    %cst_19 = arith.constant dense<0.000000e+00> : vector<128x128xf32>
    %14 = tpu.matmul %12, %13, %cst_19 {dimension_numbers = #tpu.dot_dimension_numbers<[1], [0], [0], [1], [0, 0, 1, 1], [], []>} : vector<128x384xbf16>, vector<384x128xbf16>, vector<128x128xf32> -> vector<128x128xf32>
    %c0_20 = arith.constant 0 : index
    %c0_21 = arith.constant 0 : index
    %15 = vector.load %arg3[%c0_20, %c0_21] : memref<1x128xf32, #tpu.memory_space<vmem>>, vector<1x128xf32>
    %16 = vector.broadcast %15 : vector<1x128xf32> to vector<128x128xf32>
    %17 = arith.addf %14, %16 : vector<128x128xf32>
    %cst_22 = arith.constant 0.000000e+00 : f32
    %18 = vector.broadcast %cst_22 : f32 to vector<128x128xf32>
    %19 = arith.maximumf %17, %18 : vector<128x128xf32>
    %c120_i32 = arith.constant 120 : i32
    %20 = tpu.dynamic_rotate %19 by %c120_i32 dim 1 : vector<128x128xf32>, i32 -> vector<128x128xf32>
    %21 = arith.maximumf %19, %20 : vector<128x128xf32>
    %22 = vector.shape_cast %21 : vector<128x128xf32> to vector<64x2x128xf32>
    %cst_23 = arith.constant dense<0xFF800000> : vector<64x128xf32>
    %23 = vector.multi_reduction <maximumf>, %22, %cst_23 [1] : vector<64x2x128xf32> to vector<64x128xf32>
    %cst_24 = arith.constant 0.000000e+00 : f32
    %24 = vector.broadcast %cst_24 : f32 to vector<8x1x128xf32>
    %c0_25 = arith.constant 0 : index
    %c0_26 = arith.constant 0 : index
    %c0_27 = arith.constant 0 : index
    %25 = vector.load %arg8[%c0_25, %c0_26, %c0_27] : memref<8x10x128xf32, #tpu.memory_space<vmem>>, vector<8x1x128xf32>
    tpu.vector_store %arg8[%c0_25, %c0_26, %c0_27], %24 {strides = array<i32>} : memref<8x10x128xf32, #tpu.memory_space<vmem>>, vector<8x1x128xf32>,
    %c0_28 = arith.constant 0 : index
    %c9 = arith.constant 9 : index
    %c0_29 = arith.constant 0 : index
    %26 = vector.load %arg8[%c0_28, %c9, %c0_29] : memref<8x10x128xf32, #tpu.memory_space<vmem>>, vector<8x1x128xf32>
    tpu.vector_store %arg8[%c0_28, %c9, %c0_29], %24 {strides = array<i32>} : memref<8x10x128xf32, #tpu.memory_space<vmem>>, vector<8x1x128xf32>,
    %27 = vector.shape_cast %23 : vector<64x128xf32> to vector<8x8x128xf32>
    %c0_30 = arith.constant 0 : index
    %c1_31 = arith.constant 1 : index
    %c0_32 = arith.constant 0 : index
    %28 = vector.load %arg8[%c0_30, %c1_31, %c0_32] : memref<8x10x128xf32, #tpu.memory_space<vmem>>, vector<8x8x128xf32>
    tpu.vector_store %arg8[%c0_30, %c1_31, %c0_32], %27 {strides = array<i32>} : memref<8x10x128xf32, #tpu.memory_space<vmem>>, vector<8x8x128xf32>,
    %c0_33 = arith.constant 0 : index
    %c0_34 = arith.constant 0 : index
    %c0_35 = arith.constant 0 : index
    %29 = vector.load %arg8[%c0_33, %c0_34, %c0_35] : memref<8x10x128xf32, #tpu.memory_space<vmem>>, vector<8x8x128xf32>
    %30 = vector.shape_cast %29 : vector<8x8x128xf32> to vector<64x128xf32>
    %c0_36 = arith.constant 0 : index
    %c1_37 = arith.constant 1 : index
    %c0_38 = arith.constant 0 : index
    %31 = vector.load %arg8[%c0_36, %c1_37, %c0_38] : memref<8x10x128xf32, #tpu.memory_space<vmem>>, vector<8x8x128xf32>
    %32 = vector.shape_cast %31 : vector<8x8x128xf32> to vector<64x128xf32>
    %c0_39 = arith.constant 0 : index
    %c2_40 = arith.constant 2 : index
    %c0_41 = arith.constant 0 : index
    %33 = vector.load %arg8[%c0_39, %c2_40, %c0_41] : memref<8x10x128xf32, #tpu.memory_space<vmem>>, vector<8x8x128xf32>
    %34 = vector.shape_cast %33 : vector<8x8x128xf32> to vector<64x128xf32>
    %35 = tpu.concatenate %30, %32, %34 in 1 : vector<64x128xf32>, vector<64x128xf32>, vector<64x128xf32> -> vector<64x384xf32>
    %36 = arith.truncf %35 : vector<64x384xf32> to vector<64x384xbf16>
    %c0_42 = arith.constant 0 : index
    %c0_43 = arith.constant 0 : index
    %37 = vector.load %arg4[%c0_42, %c0_43] : memref<384x128xbf16, #tpu.memory_space<vmem>>, vector<384x128xbf16>
    %cst_44 = arith.constant dense<0.000000e+00> : vector<64x128xf32>
    %38 = tpu.matmul %36, %37, %cst_44 {dimension_numbers = #tpu.dot_dimension_numbers<[1], [0], [0], [1], [0, 0, 1, 1], [], []>} : vector<64x384xbf16>, vector<384x128xbf16>, vector<64x128xf32> -> vector<64x128xf32>
    %c0_45 = arith.constant 0 : index
    %c0_46 = arith.constant 0 : index
    %39 = vector.load %arg5[%c0_45, %c0_46] : memref<1x128xf32, #tpu.memory_space<vmem>>, vector<1x128xf32>
    %40 = vector.broadcast %39 : vector<1x128xf32> to vector<64x128xf32>
    %41 = arith.addf %38, %40 : vector<64x128xf32>
    %cst_47 = arith.constant 0.000000e+00 : f32
    %42 = vector.broadcast %cst_47 : f32 to vector<64x128xf32>
    %43 = arith.maximumf %41, %42 : vector<64x128xf32>
    %c112_i32 = arith.constant 112 : i32
    %44 = tpu.dynamic_rotate %43 by %c112_i32 dim 1 : vector<64x128xf32>, i32 -> vector<64x128xf32>
    %45 = arith.maximumf %43, %44 : vector<64x128xf32>
    %46 = vector.shape_cast %45 : vector<64x128xf32> to vector<32x2x128xf32>
    %cst_48 = arith.constant dense<0xFF800000> : vector<32x128xf32>
    %47 = vector.multi_reduction <maximumf>, %46, %cst_48 [1] : vector<32x2x128xf32> to vector<32x128xf32>
    %48 = vector.shape_cast %47 : vector<32x128xf32> to vector<8x4x128xf32>
    %c0_49 = arith.constant 0 : index
    %c0_50 = arith.constant 0 : index
    %c0_51 = arith.constant 0 : index
    %49 = vector.load %arg6[%c0_49, %c0_50, %c0_51] : memref<8x4x128xf32, #tpu.memory_space<vmem>>, vector<8x4x128xf32>
    tpu.vector_store %arg6[%c0_49, %c0_50, %c0_51], %48 {strides = array<i32>} : memref<8x4x128xf32, #tpu.memory_space<vmem>>, vector<8x4x128xf32>,
    return
  }
  func.func @transform_0(%arg0: i32) -> (i32, i32, i32) {
    %c0_i32 = arith.constant 0 : i32
    %c0_i32_0 = arith.constant 0 : i32
    %c0_i32_1 = arith.constant 0 : i32
    return %arg0, %c0_i32, %c0_i32_0 : i32, i32, i32
  }
  func.func @transform_1(%arg0: i32) -> (i32, i32) {
    %c0_i32 = arith.constant 0 : i32
    %c0_i32_0 = arith.constant 0 : i32
    %c0_i32_1 = arith.constant 0 : i32
    return %c0_i32, %c0_i32_0 : i32, i32
  }
  func.func @transform_2(%arg0: i32) -> (i32, i32) {
    %c0_i32 = arith.constant 0 : i32
    %c0_i32_0 = arith.constant 0 : i32
    %c0_i32_1 = arith.constant 0 : i32
    return %c0_i32, %c0_i32_0 : i32, i32
  }
  func.func @transform_3(%arg0: i32) -> (i32, i32) {
    %c0_i32 = arith.constant 0 : i32
    %c0_i32_0 = arith.constant 0 : i32
    %c0_i32_1 = arith.constant 0 : i32
    return %c0_i32, %c0_i32_0 : i32, i32
  }
  func.func @transform_4(%arg0: i32) -> (i32, i32) {
    %c0_i32 = arith.constant 0 : i32
    %c0_i32_0 = arith.constant 0 : i32
    %c0_i32_1 = arith.constant 0 : i32
    return %c0_i32, %c0_i32_0 : i32, i32
  }
  func.func @transform_5(%arg0: i32) -> (i32, i32, i32) {
    %c0_i32 = arith.constant 0 : i32
    %c0_i32_0 = arith.constant 0 : i32
    %c0_i32_1 = arith.constant 0 : i32
    return %arg0, %c0_i32, %c0_i32_0 : i32, i32, i32
  }
}

module attributes {stable_mosaic.version = 11 : i64} {
  func.func @_head_lstm_kernel(%arg0: memref<16x512xf32, #tpu.memory_space<vmem>>, %arg1: memref<512x64xbf16, #tpu.memory_space<vmem>>, %arg2: memref<1x64xf32, #tpu.memory_space<vmem>>, %arg3: memref<64x64xbf16, #tpu.memory_space<vmem>>, %arg4: memref<1x64xf32, #tpu.memory_space<vmem>>, %arg5: memref<64x32xbf16, #tpu.memory_space<vmem>>, %arg6: memref<1x32xf32, #tpu.memory_space<vmem>>, %arg7: memref<1x32xf32, #tpu.memory_space<vmem>>, %arg8: memref<1x32xf32, #tpu.memory_space<vmem>>, %arg9: memref<32x128xbf16, #tpu.memory_space<vmem>>, %arg10: memref<32x128xbf16, #tpu.memory_space<vmem>>, %arg11: memref<1x128xf32, #tpu.memory_space<vmem>>, %arg12: memref<32x128xbf16, #tpu.memory_space<vmem>>, %arg13: memref<32x128xbf16, #tpu.memory_space<vmem>>, %arg14: memref<1x128xf32, #tpu.memory_space<vmem>>, %arg15: memref<16x32xf32, #tpu.memory_space<vmem>>, %arg16: memref<16x128xf32, #tpu.memory_space<vmem>>, %arg17: memref<16x32xf32, #tpu.memory_space<vmem>>) attributes {dimension_semantics = [], scalar_prefetch = 0 : i64, scratch_operands = 2 : i64, tpu.core_type = #tpu.core_type<tc>} {
    %c0 = arith.constant 0 : index
    %c0_0 = arith.constant 0 : index
    %0 = vector.load %arg0[%c0, %c0_0] : memref<16x512xf32, #tpu.memory_space<vmem>>, vector<16x512xf32>
    %1 = arith.truncf %0 : vector<16x512xf32> to vector<16x512xbf16>
    %c0_1 = arith.constant 0 : index
    %c0_2 = arith.constant 0 : index
    %2 = vector.load %arg1[%c0_1, %c0_2] : memref<512x64xbf16, #tpu.memory_space<vmem>>, vector<512x64xbf16>
    %cst = arith.constant dense<0.000000e+00> : vector<16x64xf32>
    %3 = tpu.matmul %1, %2, %cst {dimension_numbers = #tpu.dot_dimension_numbers<[1], [0], [0], [1], [0, 0, 1, 1], [], []>} : vector<16x512xbf16>, vector<512x64xbf16>, vector<16x64xf32> -> vector<16x64xf32>
    %c0_3 = arith.constant 0 : index
    %c0_4 = arith.constant 0 : index
    %4 = vector.load %arg2[%c0_3, %c0_4] : memref<1x64xf32, #tpu.memory_space<vmem>>, vector<1x64xf32>
    %5 = vector.broadcast %4 : vector<1x64xf32> to vector<16x64xf32>
    %6 = arith.addf %3, %5 : vector<16x64xf32>
    %cst_5 = arith.constant 0.000000e+00 : f32
    %7 = vector.broadcast %cst_5 : f32 to vector<16x64xf32>
    %8 = arith.maximumf %6, %7 : vector<16x64xf32>
    %9 = arith.truncf %8 : vector<16x64xf32> to vector<16x64xbf16>
    %c0_6 = arith.constant 0 : index
    %c0_7 = arith.constant 0 : index
    %10 = vector.load %arg3[%c0_6, %c0_7] : memref<64x64xbf16, #tpu.memory_space<vmem>>, vector<64x64xbf16>
    %cst_8 = arith.constant dense<0.000000e+00> : vector<16x64xf32>
    %11 = tpu.matmul %9, %10, %cst_8 {dimension_numbers = #tpu.dot_dimension_numbers<[1], [0], [0], [1], [0, 0, 1, 1], [], []>} : vector<16x64xbf16>, vector<64x64xbf16>, vector<16x64xf32> -> vector<16x64xf32>
    %c0_9 = arith.constant 0 : index
    %c0_10 = arith.constant 0 : index
    %12 = vector.load %arg4[%c0_9, %c0_10] : memref<1x64xf32, #tpu.memory_space<vmem>>, vector<1x64xf32>
    %13 = vector.broadcast %12 : vector<1x64xf32> to vector<16x64xf32>
    %14 = arith.addf %11, %13 : vector<16x64xf32>
    %cst_11 = arith.constant 0.000000e+00 : f32
    %15 = vector.broadcast %cst_11 : f32 to vector<16x64xf32>
    %16 = arith.maximumf %14, %15 : vector<16x64xf32>
    %17 = arith.truncf %16 : vector<16x64xf32> to vector<16x64xbf16>
    %c0_12 = arith.constant 0 : index
    %c0_13 = arith.constant 0 : index
    %18 = vector.load %arg5[%c0_12, %c0_13] : memref<64x32xbf16, #tpu.memory_space<vmem>>, vector<64x32xbf16>
    %cst_14 = arith.constant dense<0.000000e+00> : vector<16x32xf32>
    %19 = tpu.matmul %17, %18, %cst_14 {dimension_numbers = #tpu.dot_dimension_numbers<[1], [0], [0], [1], [0, 0, 1, 1], [], []>} : vector<16x64xbf16>, vector<64x32xbf16>, vector<16x32xf32> -> vector<16x32xf32>
    %c0_15 = arith.constant 0 : index
    %c0_16 = arith.constant 0 : index
    %20 = vector.load %arg6[%c0_15, %c0_16] : memref<1x32xf32, #tpu.memory_space<vmem>>, vector<1x32xf32>
    %21 = vector.broadcast %20 : vector<1x32xf32> to vector<16x32xf32>
    %22 = arith.addf %19, %21 : vector<16x32xf32>
    %cst_17 = arith.constant dense<0.000000e+00> : vector<32xf32>
    %23 = vector.multi_reduction <add>, %22, %cst_17 [0] : vector<16x32xf32> to vector<32xf32>
    %24 = vector.shape_cast %23 : vector<32xf32> to vector<1x32xf32>
    %cst_18 = arith.constant 1.600000e+01 : f32
    %25 = vector.broadcast %cst_18 : f32 to vector<1x32xf32>
    %26 = arith.divf %24, %25 : vector<1x32xf32>
    %27 = vector.broadcast %26 : vector<1x32xf32> to vector<16x32xf32>
    %28 = arith.subf %22, %27 : vector<16x32xf32>
    %29 = arith.mulf %28, %28 : vector<16x32xf32>
    %cst_19 = arith.constant dense<0.000000e+00> : vector<32xf32>
    %30 = vector.multi_reduction <add>, %29, %cst_19 [0] : vector<16x32xf32> to vector<32xf32>
    %31 = vector.shape_cast %30 : vector<32xf32> to vector<1x32xf32>
    %cst_20 = arith.constant 1.600000e+01 : f32
    %32 = vector.broadcast %cst_20 : f32 to vector<1x32xf32>
    %33 = arith.divf %31, %32 : vector<1x32xf32>
    %34 = vector.broadcast %26 : vector<1x32xf32> to vector<16x32xf32>
    %35 = arith.subf %22, %34 : vector<16x32xf32>
    %cst_21 = arith.constant 9.99999974E-6 : f32
    %36 = vector.broadcast %cst_21 : f32 to vector<1x32xf32>
    %37 = arith.addf %33, %36 : vector<1x32xf32>
    %38 = math.rsqrt %37 : vector<1x32xf32>
    %39 = vector.broadcast %38 : vector<1x32xf32> to vector<16x32xf32>
    %40 = arith.mulf %35, %39 : vector<16x32xf32>
    %c0_22 = arith.constant 0 : index
    %c0_23 = arith.constant 0 : index
    %41 = vector.load %arg7[%c0_22, %c0_23] : memref<1x32xf32, #tpu.memory_space<vmem>>, vector<1x32xf32>
    %42 = vector.broadcast %41 : vector<1x32xf32> to vector<16x32xf32>
    %43 = arith.mulf %40, %42 : vector<16x32xf32>
    %c0_24 = arith.constant 0 : index
    %c0_25 = arith.constant 0 : index
    %44 = vector.load %arg8[%c0_24, %c0_25] : memref<1x32xf32, #tpu.memory_space<vmem>>, vector<1x32xf32>
    %45 = vector.broadcast %44 : vector<1x32xf32> to vector<16x32xf32>
    %46 = arith.addf %43, %45 : vector<16x32xf32>
    %cst_26 = arith.constant 0.000000e+00 : f32
    %47 = vector.broadcast %cst_26 : f32 to vector<4x32xf32>
    %48 = arith.truncf %46 : vector<16x32xf32> to vector<16x32xbf16>
    %c0_27 = arith.constant 0 : index
    %c0_28 = arith.constant 0 : index
    %49 = vector.load %arg9[%c0_27, %c0_28] : memref<32x128xbf16, #tpu.memory_space<vmem>>, vector<32x128xbf16>
    %cst_29 = arith.constant dense<0.000000e+00> : vector<16x128xf32>
    %50 = tpu.matmul %48, %49, %cst_29 {dimension_numbers = #tpu.dot_dimension_numbers<[1], [0], [0], [1], [0, 0, 1, 1], [], []>} : vector<16x32xbf16>, vector<32x128xbf16>, vector<16x128xf32> -> vector<16x128xf32>
    %c0_30 = arith.constant 0 : index
    %c0_31 = arith.constant 0 : index
    %51 = vector.load %arg11[%c0_30, %c0_31] : memref<1x128xf32, #tpu.memory_space<vmem>>, vector<1x128xf32>
    %52 = vector.broadcast %51 : vector<1x128xf32> to vector<16x128xf32>
    %53 = arith.addf %50, %52 : vector<16x128xf32>
    %c0_32 = arith.constant 0 : index
    %c0_33 = arith.constant 0 : index
    %54 = vector.load %arg16[%c0_32, %c0_33] : memref<16x128xf32, #tpu.memory_space<vmem>>, vector<16x128xf32>
    tpu.vector_store %arg16[%c0_32, %c0_33], %53 {strides = array<i32>} : memref<16x128xf32, #tpu.memory_space<vmem>>, vector<16x128xf32>,
    %c0_34 = arith.constant 0 : index
    %c0_35 = arith.constant 0 : index
    %55 = tpu.strided_load %arg16[%c0_34, %c0_35] {strides = array<i32: 4, 1>} : memref<16x128xf32, #tpu.memory_space<vmem>>, vector<4x128xf32>
    %56 = arith.truncf %47 : vector<4x32xf32> to vector<4x32xbf16>
    %c0_36 = arith.constant 0 : index
    %c0_37 = arith.constant 0 : index
    %57 = vector.load %arg10[%c0_36, %c0_37] : memref<32x128xbf16, #tpu.memory_space<vmem>>, vector<32x128xbf16>
    %cst_38 = arith.constant dense<0.000000e+00> : vector<4x128xf32>
    %58 = tpu.matmul %56, %57, %cst_38 {dimension_numbers = #tpu.dot_dimension_numbers<[1], [0], [0], [1], [0, 0, 1, 1], [], []>} : vector<4x32xbf16>, vector<32x128xbf16>, vector<4x128xf32> -> vector<4x128xf32>
    %59 = arith.addf %55, %58 : vector<4x128xf32>
    %60 = vector.extract_strided_slice %59 {offsets = [0, 0], sizes = [4, 96], strides = [1, 1]} : vector<4x128xf32> to vector<4x96xf32>
    %61 = arith.negf %60 : vector<4x96xf32>
    %62 = math.exp %61 : vector<4x96xf32>
    %cst_39 = arith.constant 1.000000e+00 : f32
    %63 = vector.broadcast %cst_39 : f32 to vector<4x96xf32>
    %64 = arith.addf %63, %62 : vector<4x96xf32>
    %65 = arith.divf %63, %64 : vector<4x96xf32>
    %66 = vector.extract_strided_slice %65 {offsets = [0, 0], sizes = [4, 32], strides = [1, 1]} : vector<4x96xf32> to vector<4x32xf32>
    %67 = vector.extract_strided_slice %65 {offsets = [0, 32], sizes = [4, 32], strides = [1, 1]} : vector<4x96xf32> to vector<4x32xf32>
    %68 = vector.extract_strided_slice %65 {offsets = [0, 64], sizes = [4, 32], strides = [1, 1]} : vector<4x96xf32> to vector<4x32xf32>
    %69 = vector.extract_strided_slice %59 {offsets = [0, 96], sizes = [4, 32], strides = [1, 1]} : vector<4x128xf32> to vector<4x32xf32>
    %70 = math.tanh %69 : vector<4x32xf32>
    %71 = arith.mulf %67, %47 : vector<4x32xf32>
    %72 = arith.mulf %66, %70 : vector<4x32xf32>
    %73 = arith.addf %71, %72 : vector<4x32xf32>
    %74 = math.tanh %73 : vector<4x32xf32>
    %75 = arith.mulf %68, %74 : vector<4x32xf32>
    %c0_40 = arith.constant 0 : index
    %c0_41 = arith.constant 0 : index
    %76 = vector.load %arg17[%c0_40, %c0_41] : memref<16x32xf32, #tpu.memory_space<vmem>>, vector<4x32xf32>
    tpu.vector_store %arg17[%c0_40, %c0_41], %75 {strides = array<i32>} : memref<16x32xf32, #tpu.memory_space<vmem>>, vector<4x32xf32>,
    %c1 = arith.constant 1 : index
    %c0_42 = arith.constant 0 : index
    %77 = tpu.strided_load %arg16[%c1, %c0_42] {strides = array<i32: 4, 1>} : memref<16x128xf32, #tpu.memory_space<vmem>>, vector<4x128xf32>
    %78 = arith.truncf %75 : vector<4x32xf32> to vector<4x32xbf16>
    %c0_43 = arith.constant 0 : index
    %c0_44 = arith.constant 0 : index
    %79 = vector.load %arg10[%c0_43, %c0_44] : memref<32x128xbf16, #tpu.memory_space<vmem>>, vector<32x128xbf16>
    %cst_45 = arith.constant dense<0.000000e+00> : vector<4x128xf32>
    %80 = tpu.matmul %78, %79, %cst_45 {dimension_numbers = #tpu.dot_dimension_numbers<[1], [0], [0], [1], [0, 0, 1, 1], [], []>} : vector<4x32xbf16>, vector<32x128xbf16>, vector<4x128xf32> -> vector<4x128xf32>
    %81 = arith.addf %77, %80 : vector<4x128xf32>
    %82 = vector.extract_strided_slice %81 {offsets = [0, 0], sizes = [4, 96], strides = [1, 1]} : vector<4x128xf32> to vector<4x96xf32>
    %83 = arith.negf %82 : vector<4x96xf32>
    %84 = math.exp %83 : vector<4x96xf32>
    %cst_46 = arith.constant 1.000000e+00 : f32
    %85 = vector.broadcast %cst_46 : f32 to vector<4x96xf32>
    %86 = arith.addf %85, %84 : vector<4x96xf32>
    %87 = arith.divf %85, %86 : vector<4x96xf32>
    %88 = vector.extract_strided_slice %87 {offsets = [0, 0], sizes = [4, 32], strides = [1, 1]} : vector<4x96xf32> to vector<4x32xf32>
    %89 = vector.extract_strided_slice %87 {offsets = [0, 32], sizes = [4, 32], strides = [1, 1]} : vector<4x96xf32> to vector<4x32xf32>
    %90 = vector.extract_strided_slice %87 {offsets = [0, 64], sizes = [4, 32], strides = [1, 1]} : vector<4x96xf32> to vector<4x32xf32>
    %91 = vector.extract_strided_slice %81 {offsets = [0, 96], sizes = [4, 32], strides = [1, 1]} : vector<4x128xf32> to vector<4x32xf32>
    %92 = math.tanh %91 : vector<4x32xf32>
    %93 = arith.mulf %89, %73 : vector<4x32xf32>
    %94 = arith.mulf %88, %92 : vector<4x32xf32>
    %95 = arith.addf %93, %94 : vector<4x32xf32>
    %96 = math.tanh %95 : vector<4x32xf32>
    %97 = arith.mulf %90, %96 : vector<4x32xf32>
    %c4 = arith.constant 4 : index
    %c0_47 = arith.constant 0 : index
    %98 = vector.load %arg17[%c4, %c0_47] : memref<16x32xf32, #tpu.memory_space<vmem>>, vector<4x32xf32>
    tpu.vector_store %arg17[%c4, %c0_47], %97 {strides = array<i32>} : memref<16x32xf32, #tpu.memory_space<vmem>>, vector<4x32xf32>,
    %c2 = arith.constant 2 : index
    %c0_48 = arith.constant 0 : index
    %99 = tpu.strided_load %arg16[%c2, %c0_48] {strides = array<i32: 4, 1>} : memref<16x128xf32, #tpu.memory_space<vmem>>, vector<4x128xf32>
    %100 = arith.truncf %97 : vector<4x32xf32> to vector<4x32xbf16>
    %c0_49 = arith.constant 0 : index
    %c0_50 = arith.constant 0 : index
    %101 = vector.load %arg10[%c0_49, %c0_50] : memref<32x128xbf16, #tpu.memory_space<vmem>>, vector<32x128xbf16>
    %cst_51 = arith.constant dense<0.000000e+00> : vector<4x128xf32>
    %102 = tpu.matmul %100, %101, %cst_51 {dimension_numbers = #tpu.dot_dimension_numbers<[1], [0], [0], [1], [0, 0, 1, 1], [], []>} : vector<4x32xbf16>, vector<32x128xbf16>, vector<4x128xf32> -> vector<4x128xf32>
    %103 = arith.addf %99, %102 : vector<4x128xf32>
    %104 = vector.extract_strided_slice %103 {offsets = [0, 0], sizes = [4, 96], strides = [1, 1]} : vector<4x128xf32> to vector<4x96xf32>
    %105 = arith.negf %104 : vector<4x96xf32>
    %106 = math.exp %105 : vector<4x96xf32>
    %cst_52 = arith.constant 1.000000e+00 : f32
    %107 = vector.broadcast %cst_52 : f32 to vector<4x96xf32>
    %108 = arith.addf %107, %106 : vector<4x96xf32>
    %109 = arith.divf %107, %108 : vector<4x96xf32>
    %110 = vector.extract_strided_slice %109 {offsets = [0, 0], sizes = [4, 32], strides = [1, 1]} : vector<4x96xf32> to vector<4x32xf32>
    %111 = vector.extract_strided_slice %109 {offsets = [0, 32], sizes = [4, 32], strides = [1, 1]} : vector<4x96xf32> to vector<4x32xf32>
    %112 = vector.extract_strided_slice %109 {offsets = [0, 64], sizes = [4, 32], strides = [1, 1]} : vector<4x96xf32> to vector<4x32xf32>
    %113 = vector.extract_strided_slice %103 {offsets = [0, 96], sizes = [4, 32], strides = [1, 1]} : vector<4x128xf32> to vector<4x32xf32>
    %114 = math.tanh %113 : vector<4x32xf32>
    %115 = arith.mulf %111, %95 : vector<4x32xf32>
    %116 = arith.mulf %110, %114 : vector<4x32xf32>
    %117 = arith.addf %115, %116 : vector<4x32xf32>
    %118 = math.tanh %117 : vector<4x32xf32>
    %119 = arith.mulf %112, %118 : vector<4x32xf32>
    %c8 = arith.constant 8 : index
    %c0_53 = arith.constant 0 : index
    %120 = vector.load %arg17[%c8, %c0_53] : memref<16x32xf32, #tpu.memory_space<vmem>>, vector<4x32xf32>
    tpu.vector_store %arg17[%c8, %c0_53], %119 {strides = array<i32>} : memref<16x32xf32, #tpu.memory_space<vmem>>, vector<4x32xf32>,
    %c3 = arith.constant 3 : index
    %c0_54 = arith.constant 0 : index
    %121 = tpu.strided_load %arg16[%c3, %c0_54] {strides = array<i32: 4, 1>} : memref<16x128xf32, #tpu.memory_space<vmem>>, vector<4x128xf32>
    %122 = arith.truncf %119 : vector<4x32xf32> to vector<4x32xbf16>
    %c0_55 = arith.constant 0 : index
    %c0_56 = arith.constant 0 : index
    %123 = vector.load %arg10[%c0_55, %c0_56] : memref<32x128xbf16, #tpu.memory_space<vmem>>, vector<32x128xbf16>
    %cst_57 = arith.constant dense<0.000000e+00> : vector<4x128xf32>
    %124 = tpu.matmul %122, %123, %cst_57 {dimension_numbers = #tpu.dot_dimension_numbers<[1], [0], [0], [1], [0, 0, 1, 1], [], []>} : vector<4x32xbf16>, vector<32x128xbf16>, vector<4x128xf32> -> vector<4x128xf32>
    %125 = arith.addf %121, %124 : vector<4x128xf32>
    %126 = vector.extract_strided_slice %125 {offsets = [0, 0], sizes = [4, 96], strides = [1, 1]} : vector<4x128xf32> to vector<4x96xf32>
    %127 = arith.negf %126 : vector<4x96xf32>
    %128 = math.exp %127 : vector<4x96xf32>
    %cst_58 = arith.constant 1.000000e+00 : f32
    %129 = vector.broadcast %cst_58 : f32 to vector<4x96xf32>
    %130 = arith.addf %129, %128 : vector<4x96xf32>
    %131 = arith.divf %129, %130 : vector<4x96xf32>
    %132 = vector.extract_strided_slice %131 {offsets = [0, 0], sizes = [4, 32], strides = [1, 1]} : vector<4x96xf32> to vector<4x32xf32>
    %133 = vector.extract_strided_slice %131 {offsets = [0, 32], sizes = [4, 32], strides = [1, 1]} : vector<4x96xf32> to vector<4x32xf32>
    %134 = vector.extract_strided_slice %131 {offsets = [0, 64], sizes = [4, 32], strides = [1, 1]} : vector<4x96xf32> to vector<4x32xf32>
    %135 = vector.extract_strided_slice %125 {offsets = [0, 96], sizes = [4, 32], strides = [1, 1]} : vector<4x128xf32> to vector<4x32xf32>
    %136 = math.tanh %135 : vector<4x32xf32>
    %137 = arith.mulf %133, %117 : vector<4x32xf32>
    %138 = arith.mulf %132, %136 : vector<4x32xf32>
    %139 = arith.addf %137, %138 : vector<4x32xf32>
    %140 = math.tanh %139 : vector<4x32xf32>
    %141 = arith.mulf %134, %140 : vector<4x32xf32>
    %c12 = arith.constant 12 : index
    %c0_59 = arith.constant 0 : index
    %142 = vector.load %arg17[%c12, %c0_59] : memref<16x32xf32, #tpu.memory_space<vmem>>, vector<4x32xf32>
    tpu.vector_store %arg17[%c12, %c0_59], %141 {strides = array<i32>} : memref<16x32xf32, #tpu.memory_space<vmem>>, vector<4x32xf32>,
    %c0_60 = arith.constant 0 : index
    %c0_61 = arith.constant 0 : index
    %143 = vector.load %arg17[%c0_60, %c0_61] : memref<16x32xf32, #tpu.memory_space<vmem>>, vector<16x32xf32>
    %144 = arith.truncf %143 : vector<16x32xf32> to vector<16x32xbf16>
    %c0_62 = arith.constant 0 : index
    %c0_63 = arith.constant 0 : index
    %145 = vector.load %arg12[%c0_62, %c0_63] : memref<32x128xbf16, #tpu.memory_space<vmem>>, vector<32x128xbf16>
    %cst_64 = arith.constant dense<0.000000e+00> : vector<16x128xf32>
    %146 = tpu.matmul %144, %145, %cst_64 {dimension_numbers = #tpu.dot_dimension_numbers<[1], [0], [0], [1], [0, 0, 1, 1], [], []>} : vector<16x32xbf16>, vector<32x128xbf16>, vector<16x128xf32> -> vector<16x128xf32>
    %c0_65 = arith.constant 0 : index
    %c0_66 = arith.constant 0 : index
    %147 = vector.load %arg14[%c0_65, %c0_66] : memref<1x128xf32, #tpu.memory_space<vmem>>, vector<1x128xf32>
    %148 = vector.broadcast %147 : vector<1x128xf32> to vector<16x128xf32>
    %149 = arith.addf %146, %148 : vector<16x128xf32>
    %c0_67 = arith.constant 0 : index
    %c0_68 = arith.constant 0 : index
    %150 = vector.load %arg16[%c0_67, %c0_68] : memref<16x128xf32, #tpu.memory_space<vmem>>, vector<16x128xf32>
    tpu.vector_store %arg16[%c0_67, %c0_68], %149 {strides = array<i32>} : memref<16x128xf32, #tpu.memory_space<vmem>>, vector<16x128xf32>,
    %c0_69 = arith.constant 0 : index
    %c0_70 = arith.constant 0 : index
    %151 = vector.load %arg16[%c0_69, %c0_70] : memref<16x128xf32, #tpu.memory_space<vmem>>, vector<4x128xf32>
    %152 = arith.truncf %47 : vector<4x32xf32> to vector<4x32xbf16>
    %c0_71 = arith.constant 0 : index
    %c0_72 = arith.constant 0 : index
    %153 = vector.load %arg13[%c0_71, %c0_72] : memref<32x128xbf16, #tpu.memory_space<vmem>>, vector<32x128xbf16>
    %cst_73 = arith.constant dense<0.000000e+00> : vector<4x128xf32>
    %154 = tpu.matmul %152, %153, %cst_73 {dimension_numbers = #tpu.dot_dimension_numbers<[1], [0], [0], [1], [0, 0, 1, 1], [], []>} : vector<4x32xbf16>, vector<32x128xbf16>, vector<4x128xf32> -> vector<4x128xf32>
    %155 = arith.addf %151, %154 : vector<4x128xf32>
    %156 = vector.extract_strided_slice %155 {offsets = [0, 0], sizes = [4, 96], strides = [1, 1]} : vector<4x128xf32> to vector<4x96xf32>
    %157 = arith.negf %156 : vector<4x96xf32>
    %158 = math.exp %157 : vector<4x96xf32>
    %cst_74 = arith.constant 1.000000e+00 : f32
    %159 = vector.broadcast %cst_74 : f32 to vector<4x96xf32>
    %160 = arith.addf %159, %158 : vector<4x96xf32>
    %161 = arith.divf %159, %160 : vector<4x96xf32>
    %162 = vector.extract_strided_slice %161 {offsets = [0, 0], sizes = [4, 32], strides = [1, 1]} : vector<4x96xf32> to vector<4x32xf32>
    %163 = vector.extract_strided_slice %161 {offsets = [0, 32], sizes = [4, 32], strides = [1, 1]} : vector<4x96xf32> to vector<4x32xf32>
    %164 = vector.extract_strided_slice %161 {offsets = [0, 64], sizes = [4, 32], strides = [1, 1]} : vector<4x96xf32> to vector<4x32xf32>
    %165 = vector.extract_strided_slice %155 {offsets = [0, 96], sizes = [4, 32], strides = [1, 1]} : vector<4x128xf32> to vector<4x32xf32>
    %166 = math.tanh %165 : vector<4x32xf32>
    %167 = arith.mulf %163, %47 : vector<4x32xf32>
    %168 = arith.mulf %162, %166 : vector<4x32xf32>
    %169 = arith.addf %167, %168 : vector<4x32xf32>
    %170 = math.tanh %169 : vector<4x32xf32>
    %171 = arith.mulf %164, %170 : vector<4x32xf32>
    %c0_75 = arith.constant 0 : index
    %c0_76 = arith.constant 0 : index
    %172 = vector.load %arg15[%c0_75, %c0_76] : memref<16x32xf32, #tpu.memory_space<vmem>>, vector<4x32xf32>
    tpu.vector_store %arg15[%c0_75, %c0_76], %171 {strides = array<i32>} : memref<16x32xf32, #tpu.memory_space<vmem>>, vector<4x32xf32>,
    %c4_77 = arith.constant 4 : index
    %c0_78 = arith.constant 0 : index
    %173 = vector.load %arg16[%c4_77, %c0_78] : memref<16x128xf32, #tpu.memory_space<vmem>>, vector<4x128xf32>
    %174 = arith.truncf %171 : vector<4x32xf32> to vector<4x32xbf16>
    %c0_79 = arith.constant 0 : index
    %c0_80 = arith.constant 0 : index
    %175 = vector.load %arg13[%c0_79, %c0_80] : memref<32x128xbf16, #tpu.memory_space<vmem>>, vector<32x128xbf16>
    %cst_81 = arith.constant dense<0.000000e+00> : vector<4x128xf32>
    %176 = tpu.matmul %174, %175, %cst_81 {dimension_numbers = #tpu.dot_dimension_numbers<[1], [0], [0], [1], [0, 0, 1, 1], [], []>} : vector<4x32xbf16>, vector<32x128xbf16>, vector<4x128xf32> -> vector<4x128xf32>
    %177 = arith.addf %173, %176 : vector<4x128xf32>
    %178 = vector.extract_strided_slice %177 {offsets = [0, 0], sizes = [4, 96], strides = [1, 1]} : vector<4x128xf32> to vector<4x96xf32>
    %179 = arith.negf %178 : vector<4x96xf32>
    %180 = math.exp %179 : vector<4x96xf32>
    %cst_82 = arith.constant 1.000000e+00 : f32
    %181 = vector.broadcast %cst_82 : f32 to vector<4x96xf32>
    %182 = arith.addf %181, %180 : vector<4x96xf32>
    %183 = arith.divf %181, %182 : vector<4x96xf32>
    %184 = vector.extract_strided_slice %183 {offsets = [0, 0], sizes = [4, 32], strides = [1, 1]} : vector<4x96xf32> to vector<4x32xf32>
    %185 = vector.extract_strided_slice %183 {offsets = [0, 32], sizes = [4, 32], strides = [1, 1]} : vector<4x96xf32> to vector<4x32xf32>
    %186 = vector.extract_strided_slice %183 {offsets = [0, 64], sizes = [4, 32], strides = [1, 1]} : vector<4x96xf32> to vector<4x32xf32>
    %187 = vector.extract_strided_slice %177 {offsets = [0, 96], sizes = [4, 32], strides = [1, 1]} : vector<4x128xf32> to vector<4x32xf32>
    %188 = math.tanh %187 : vector<4x32xf32>
    %189 = arith.mulf %185, %169 : vector<4x32xf32>
    %190 = arith.mulf %184, %188 : vector<4x32xf32>
    %191 = arith.addf %189, %190 : vector<4x32xf32>
    %192 = math.tanh %191 : vector<4x32xf32>
    %193 = arith.mulf %186, %192 : vector<4x32xf32>
    %c4_83 = arith.constant 4 : index
    %c0_84 = arith.constant 0 : index
    %194 = vector.load %arg15[%c4_83, %c0_84] : memref<16x32xf32, #tpu.memory_space<vmem>>, vector<4x32xf32>
    tpu.vector_store %arg15[%c4_83, %c0_84], %193 {strides = array<i32>} : memref<16x32xf32, #tpu.memory_space<vmem>>, vector<4x32xf32>,
    %c8_85 = arith.constant 8 : index
    %c0_86 = arith.constant 0 : index
    %195 = vector.load %arg16[%c8_85, %c0_86] : memref<16x128xf32, #tpu.memory_space<vmem>>, vector<4x128xf32>
    %196 = arith.truncf %193 : vector<4x32xf32> to vector<4x32xbf16>
    %c0_87 = arith.constant 0 : index
    %c0_88 = arith.constant 0 : index
    %197 = vector.load %arg13[%c0_87, %c0_88] : memref<32x128xbf16, #tpu.memory_space<vmem>>, vector<32x128xbf16>
    %cst_89 = arith.constant dense<0.000000e+00> : vector<4x128xf32>
    %198 = tpu.matmul %196, %197, %cst_89 {dimension_numbers = #tpu.dot_dimension_numbers<[1], [0], [0], [1], [0, 0, 1, 1], [], []>} : vector<4x32xbf16>, vector<32x128xbf16>, vector<4x128xf32> -> vector<4x128xf32>
    %199 = arith.addf %195, %198 : vector<4x128xf32>
    %200 = vector.extract_strided_slice %199 {offsets = [0, 0], sizes = [4, 96], strides = [1, 1]} : vector<4x128xf32> to vector<4x96xf32>
    %201 = arith.negf %200 : vector<4x96xf32>
    %202 = math.exp %201 : vector<4x96xf32>
    %cst_90 = arith.constant 1.000000e+00 : f32
    %203 = vector.broadcast %cst_90 : f32 to vector<4x96xf32>
    %204 = arith.addf %203, %202 : vector<4x96xf32>
    %205 = arith.divf %203, %204 : vector<4x96xf32>
    %206 = vector.extract_strided_slice %205 {offsets = [0, 0], sizes = [4, 32], strides = [1, 1]} : vector<4x96xf32> to vector<4x32xf32>
    %207 = vector.extract_strided_slice %205 {offsets = [0, 32], sizes = [4, 32], strides = [1, 1]} : vector<4x96xf32> to vector<4x32xf32>
    %208 = vector.extract_strided_slice %205 {offsets = [0, 64], sizes = [4, 32], strides = [1, 1]} : vector<4x96xf32> to vector<4x32xf32>
    %209 = vector.extract_strided_slice %199 {offsets = [0, 96], sizes = [4, 32], strides = [1, 1]} : vector<4x128xf32> to vector<4x32xf32>
    %210 = math.tanh %209 : vector<4x32xf32>
    %211 = arith.mulf %207, %191 : vector<4x32xf32>
    %212 = arith.mulf %206, %210 : vector<4x32xf32>
    %213 = arith.addf %211, %212 : vector<4x32xf32>
    %214 = math.tanh %213 : vector<4x32xf32>
    %215 = arith.mulf %208, %214 : vector<4x32xf32>
    %c8_91 = arith.constant 8 : index
    %c0_92 = arith.constant 0 : index
    %216 = vector.load %arg15[%c8_91, %c0_92] : memref<16x32xf32, #tpu.memory_space<vmem>>, vector<4x32xf32>
    tpu.vector_store %arg15[%c8_91, %c0_92], %215 {strides = array<i32>} : memref<16x32xf32, #tpu.memory_space<vmem>>, vector<4x32xf32>,
    %c12_93 = arith.constant 12 : index
    %c0_94 = arith.constant 0 : index
    %217 = vector.load %arg16[%c12_93, %c0_94] : memref<16x128xf32, #tpu.memory_space<vmem>>, vector<4x128xf32>
    %218 = arith.truncf %215 : vector<4x32xf32> to vector<4x32xbf16>
    %c0_95 = arith.constant 0 : index
    %c0_96 = arith.constant 0 : index
    %219 = vector.load %arg13[%c0_95, %c0_96] : memref<32x128xbf16, #tpu.memory_space<vmem>>, vector<32x128xbf16>
    %cst_97 = arith.constant dense<0.000000e+00> : vector<4x128xf32>
    %220 = tpu.matmul %218, %219, %cst_97 {dimension_numbers = #tpu.dot_dimension_numbers<[1], [0], [0], [1], [0, 0, 1, 1], [], []>} : vector<4x32xbf16>, vector<32x128xbf16>, vector<4x128xf32> -> vector<4x128xf32>
    %221 = arith.addf %217, %220 : vector<4x128xf32>
    %222 = vector.extract_strided_slice %221 {offsets = [0, 0], sizes = [4, 96], strides = [1, 1]} : vector<4x128xf32> to vector<4x96xf32>
    %223 = arith.negf %222 : vector<4x96xf32>
    %224 = math.exp %223 : vector<4x96xf32>
    %cst_98 = arith.constant 1.000000e+00 : f32
    %225 = vector.broadcast %cst_98 : f32 to vector<4x96xf32>
    %226 = arith.addf %225, %224 : vector<4x96xf32>
    %227 = arith.divf %225, %226 : vector<4x96xf32>
    %228 = vector.extract_strided_slice %227 {offsets = [0, 0], sizes = [4, 32], strides = [1, 1]} : vector<4x96xf32> to vector<4x32xf32>
    %229 = vector.extract_strided_slice %227 {offsets = [0, 32], sizes = [4, 32], strides = [1, 1]} : vector<4x96xf32> to vector<4x32xf32>
    %230 = vector.extract_strided_slice %227 {offsets = [0, 64], sizes = [4, 32], strides = [1, 1]} : vector<4x96xf32> to vector<4x32xf32>
    %231 = vector.extract_strided_slice %221 {offsets = [0, 96], sizes = [4, 32], strides = [1, 1]} : vector<4x128xf32> to vector<4x32xf32>
    %232 = math.tanh %231 : vector<4x32xf32>
    %233 = arith.mulf %229, %213 : vector<4x32xf32>
    %234 = arith.mulf %228, %232 : vector<4x32xf32>
    %235 = arith.addf %233, %234 : vector<4x32xf32>
    %236 = math.tanh %235 : vector<4x32xf32>
    %237 = arith.mulf %230, %236 : vector<4x32xf32>
    %c12_99 = arith.constant 12 : index
    %c0_100 = arith.constant 0 : index
    %238 = vector.load %arg15[%c12_99, %c0_100] : memref<16x32xf32, #tpu.memory_space<vmem>>, vector<4x32xf32>
    tpu.vector_store %arg15[%c12_99, %c0_100], %237 {strides = array<i32>} : memref<16x32xf32, #tpu.memory_space<vmem>>, vector<4x32xf32>,
    return
  }
}

</mosaic_0001>

<llo_original>
// kernel: video_feature_network.2
$region0: #{video_feature_network.2}
  #allocation0 [shape = 'u32[]', space=smem, size = 0x4, offset = 0x4, fixed_abs, tag = 'smem constant byte address 0x4 - core index']
  #allocation1 [shape = 'u32[144,128]{1,0:T(1,128)}', space=vmem, size = 0x12000, scoped, tag = 'internal scratch']
  #allocation2 [shape = 'f32[8,18,128]{2,1,0:T(8,128)}', space=vmem, size = 0x18000, scoped, tag = 'scratch operand']
  #allocation3 [shape = 'f32[8,10,128]{2,1,0:T(8,128)}', space=vmem, size = 0x10000, scoped, tag = 'scratch operand']
  %s0 = inlined_call_operand.vmem [shape: f32[16,16,128], index: 0, kind: input, shape index: {}]
  %s1 = inlined_call_operand.vmem [shape: bf16[384,128], index: 1, kind: input, shape index: {}]
  %s2 = inlined_call_operand.vmem [shape: f32[1,128], index: 2, kind: input, shape index: {}]
  %s3 = inlined_call_operand.vmem [shape: bf16[384,128], index: 3, kind: input, shape index: {}]
  %s4 = inlined_call_operand.vmem [shape: f32[1,128], index: 4, kind: input, shape index: {}]
  %s5 = inlined_call_operand.vmem [shape: f32[16,4,128], index: 5, kind: output, shape index: {}]
  %s6 = sld [smem:[#allocation0]]
  $region53: #{video_feature_network.2} parent=0
    _
  %s8 = ssub.s32 1, %s6
  %s9 = scalar_select 0, %s8, %s6
  loop: start=0, step=1, limit=4
  $region2: #{video_feature_network.2} parent=0 // loop_pre_header
    _
  $region3: #{video_feature_network.2} parent=0 // loop_header
    %s11 = sphi 0, %s15
    %p12 = scmp.ge.s32.totalorder %s11, 4
    %s21 = sphi 0, %s23
    %s24 = sphi 0, %s21
    %s25 = sphi 0, %s24
    %s41 = sphi 0, %s25
    %s45 = sphi 0, %s45
    %s47 = sphi 0, %s45
    %s48 = sphi 0, %s47
    %s62 = sphi 0, %s48
    %s66 = sphi 0, %s66
    %s68 = sphi 0, %s66
    %s69 = sphi 0, %s68
    %s83 = sphi 0, %s69
    %s87 = sphi 0, %s87
    %s89 = sphi 0, %s87
    %s90 = sphi 0, %s89
    %s104 = sphi 0, %s90
    %s108 = sphi 0, %s108
    %s110 = sphi 0, %s108
    %s111 = sphi 0, %s110
    %s125 = sphi 0, %s111
    %s131 = sphi 0, %s133
    %s134 = sphi 0, %s131
    %s135 = sphi 0, %s134
    %s151 = sphi 0, %s135
  $region4: #{video_feature_network.2} parent=0 // loop_header_branch
    %14 = sbr.rel (%p12) target = $region8
  $region5: #{video_feature_network.2} parent=0 // loop_body
    %s16 = ssub.s32 %s11, 1
    %s17 = ssub.s32 %s11, 2
    %s18 = sadd.s32 %s11, 1
    %s19 = ssub.s32 %s11, %s18
    %p20 = scmp.eq.s32.totalorder %s19, 0
    %s22 = sadd.s32 %s21, 1
    %s23 = scalar_select %p20, %s21, %s22
    %p26 = pneg %p20
    %p27 = scmp.eq.s32.totalorder %s11, 1
    %p28 = por %p26, %p27
    %p29 = scmp.ne.s32.totalorder %s21, %s24
    %p30 = scmp.eq.s32.totalorder %s11, 0
    %p31 = por %p29, %p30
    %p32 = scmp.ne.s32.totalorder %s21, %s24
    %p33 = scmp.eq.s32.totalorder %s16, 1
    %p34 = por %p32, %p33
    %p35 = scmp.ne.s32.totalorder %s24, %s25
    %p36 = scmp.eq.s32.totalorder %s16, 0
    %p37 = por %p35, %p36
    %p38 = scmp.ne.s32.totalorder %s24, %s25
    %p39 = scmp.eq.s32.totalorder %s17, 1
    %p40 = por %p38, %p39
    %p42 = scmp.ne.s32.totalorder %s25, %s41
    %p43 = scmp.eq.s32.totalorder %s17, 0
    %p44 = por %p42, %p43
    %s46 = sadd.s32 %s45, 1
    %p49 = scmp.eq.s32.totalorder %s11, 1
    %p50 = scmp.ne.s32.totalorder %s45, %s47
    %p51 = scmp.eq.s32.totalorder %s11, 0
    %p52 = por %p50, %p51
    %p53 = scmp.ne.s32.totalorder %s45, %s47
    %p54 = scmp.eq.s32.totalorder %s16, 1
    %p55 = por %p53, %p54
    %p56 = scmp.ne.s32.totalorder %s47, %s48
    %p57 = scmp.eq.s32.totalorder %s16, 0
    %p58 = por %p56, %p57
    %p59 = scmp.ne.s32.totalorder %s47, %s48
    %p60 = scmp.eq.s32.totalorder %s17, 1
    %p61 = por %p59, %p60
    %p63 = scmp.ne.s32.totalorder %s48, %s62
    %p64 = scmp.eq.s32.totalorder %s17, 0
    %p65 = por %p63, %p64
    %s67 = sadd.s32 %s66, 1
    %p70 = scmp.eq.s32.totalorder %s11, 1
    %p71 = scmp.ne.s32.totalorder %s66, %s68
    %p72 = scmp.eq.s32.totalorder %s11, 0
    %p73 = por %p71, %p72
    %p74 = scmp.ne.s32.totalorder %s66, %s68
    %p75 = scmp.eq.s32.totalorder %s16, 1
    %p76 = por %p74, %p75
    %p77 = scmp.ne.s32.totalorder %s68, %s69
    %p78 = scmp.eq.s32.totalorder %s16, 0
    %p79 = por %p77, %p78
    %p80 = scmp.ne.s32.totalorder %s68, %s69
    %p81 = scmp.eq.s32.totalorder %s17, 1
    %p82 = por %p80, %p81
    %p84 = scmp.ne.s32.totalorder %s69, %s83
    %p85 = scmp.eq.s32.totalorder %s17, 0
    %p86 = por %p84, %p85
    %s88 = sadd.s32 %s87, 1
    %p91 = scmp.eq.s32.totalorder %s11, 1
    %p92 = scmp.ne.s32.totalorder %s87, %s89
    %p93 = scmp.eq.s32.totalorder %s11, 0
    %p94 = por %p92, %p93
    %p95 = scmp.ne.s32.totalorder %s87, %s89
    %p96 = scmp.eq.s32.totalorder %s16, 1
    %p97 = por %p95, %p96
    %p98 = scmp.ne.s32.totalorder %s89, %s90
    %p99 = scmp.eq.s32.totalorder %s16, 0
    %p100 = por %p98, %p99
    %p101 = scmp.ne.s32.totalorder %s89, %s90
    %p102 = scmp.eq.s32.totalorder %s17, 1
    %p103 = por %p101, %p102
    %p105 = scmp.ne.s32.totalorder %s90, %s104
    %p106 = scmp.eq.s32.totalorder %s17, 0
    %p107 = por %p105, %p106
    %s109 = sadd.s32 %s108, 1
    %p112 = scmp.eq.s32.totalorder %s11, 1
    %p113 = scmp.ne.s32.totalorder %s108, %s110
    %p114 = scmp.eq.s32.totalorder %s11, 0
    %p115 = por %p113, %p114
    %p116 = scmp.ne.s32.totalorder %s108, %s110
    %p117 = scmp.eq.s32.totalorder %s16, 1
    %p118 = por %p116, %p117
    %p119 = scmp.ne.s32.totalorder %s110, %s111
    %p120 = scmp.eq.s32.totalorder %s16, 0
    %p121 = por %p119, %p120
    %p122 = scmp.ne.s32.totalorder %s110, %s111
    %p123 = scmp.eq.s32.totalorder %s17, 1
    %p124 = por %p122, %p123
    %p126 = scmp.ne.s32.totalorder %s111, %s125
    %p127 = scmp.eq.s32.totalorder %s17, 0
    %p128 = por %p126, %p127
    %s129 = ssub.s32 %s11, %s18
    %p130 = scmp.eq.s32.totalorder %s129, 0
    %s132 = sadd.s32 %s131, 1
    %s133 = scalar_select %p130, %s131, %s132
    %p136 = pneg %p130
    %p137 = scmp.eq.s32.totalorder %s11, 1
    %p138 = por %p136, %p137
    %p139 = scmp.ne.s32.totalorder %s131, %s134
    %p140 = scmp.eq.s32.totalorder %s11, 0
    %p141 = por %p139, %p140
    %p142 = scmp.ne.s32.totalorder %s131, %s134
    %p143 = scmp.eq.s32.totalorder %s16, 1
    %p144 = por %p142, %p143
    %p145 = scmp.ne.s32.totalorder %s134, %s135
    %p146 = scmp.eq.s32.totalorder %s16, 0
    %p147 = por %p145, %p146
    %p148 = scmp.ne.s32.totalorder %s134, %s135
    %p149 = scmp.eq.s32.totalorder %s17, 1
    %p150 = por %p148, %p149
    %p152 = scmp.ne.s32.totalorder %s135, %s151
    %p153 = scmp.eq.s32.totalorder %s17, 0
    %p154 = por %p152, %p153
    %p155 = scmp.le.s32.totalorder 1, %s11
    %p156 = scmp.lt.s32.totalorder %s11, 3
    %p157 = pnand %p155, %p156
    %p158 = pneg %p157
    // Predicated region
    $region9: #{video_feature_network.2} parent=5 // pred_check
      _
    $region10: #{video_feature_network.2} parent=5 // pred_check_branch
      %160 = sbr.rel (%p157) target = $region12
    $region11: #{video_feature_network.2} parent=5 // pred_region
      %s161 = ssub.s32 %s11, 1
      // Predicated region
      $region13: #{video_feature_network.2} parent=11 // pred_check
        %p162 = pneg %p58
      $region14: #{video_feature_network.2} parent=11 // pred_check_branch
        %164 = sbr.rel (%p162) target = $region16
      $region15: #{video_feature_network.2} parent=11 // pred_region
        _
      $region16: #{video_feature_network.2} parent=11 // pred_fallthru
        _
      // Predicated region
      $region17: #{video_feature_network.2} parent=11 // pred_check
        %p165 = pneg %p79
      $region18: #{video_feature_network.2} parent=11 // pred_check_branch
        %167 = sbr.rel (%p165) target = $region20
      $region19: #{video_feature_network.2} parent=11 // pred_region
        _
      $region20: #{video_feature_network.2} parent=11 // pred_fallthru
        _
      // Predicated region
      $region21: #{video_feature_network.2} parent=11 // pred_check
        %p168 = pneg %p100
      $region22: #{video_feature_network.2} parent=11 // pred_check_branch
        %170 = sbr.rel (%p168) target = $region24
      $region23: #{video_feature_network.2} parent=11 // pred_region
        _
      $region24: #{video_feature_network.2} parent=11 // pred_fallthru
        _
      // Predicated region
      $region25: #{video_feature_network.2} parent=11 // pred_check
        %p171 = pneg %p121
      $region26: #{video_feature_network.2} parent=11 // pred_check_branch
        %173 = sbr.rel (%p171) target = $region28
      $region27: #{video_feature_network.2} parent=11 // pred_region
        _
      $region28: #{video_feature_network.2} parent=11 // pred_fallthru
        _
    $region12: #{video_feature_network.2} parent=5 // pred_fallthru
      _
    %p174 = scmp.lt.s32.totalorder %s11, 2
    // Predicated region
    $region29: #{video_feature_network.2} parent=5 // pred_check
      %p175 = pneg %p174
    $region30: #{video_feature_network.2} parent=5 // pred_check_branch
      %177 = sbr.rel (%p175) target = $region32
    $region31: #{video_feature_network.2} parent=5 // pred_region
      // Predicated region
      $region33: #{video_feature_network.2} parent=31 // pred_check
        %p178 = pneg %p31
      $region34: #{video_feature_network.2} parent=31 // pred_check_branch
        %180 = sbr.rel (%p178) target = $region36
      $region35: #{video_feature_network.2} parent=31 // pred_region
        %s181 = smul.u32 8, %s11
        %p182 = scmp.lt.s32.totalorder %s181, 15
        %s183 = scalar_select %p182, %s181, 15
        %s184 = smul.addr %s183, 2
        %s185 = smul.addr %s184, 8
        %s186 = scalar_lea.vmem %s0, %s185
        %s187 = smul.u32 8, %s11
      $region36: #{video_feature_network.2} parent=31 // pred_fallthru
        _
    $region32: #{video_feature_network.2} parent=5 // pred_fallthru
      _
    %p188 = scmp.le.s32.totalorder 1, %s11
    %p189 = scmp.lt.s32.totalorder %s11, 3
    %p190 = pnand %p188, %p189
    %p191 = pneg %p190
    // Predicated region
    $region37: #{video_feature_network.2} parent=5 // pred_check
      _
    $region38: #{video_feature_network.2} parent=5 // pred_check_branch
      %193 = sbr.rel (%p190) target = $region40
    $region39: #{video_feature_network.2} parent=5 // pred_region
      %s194 = ssub.s32 %s11, 1
      %s195 = smul.u32 8, %s16
      %p196 = scmp.lt.s32.totalorder %s195, 15
      %s197 = scalar_select %p196, %s195, 15
      %s198 = smul.addr %s197, 2
      %s199 = smul.addr %s198, 8
      %s200 = scalar_lea.vmem %s0, %s199
      %p201 = pneg %p37
      %p202 = pneg %p34
      %p203 = pneg %p58
      %p204 = pneg %p55
      %p205 = pneg %p79
      %p206 = pneg %p76
      %p207 = pneg %p100
      %p208 = pneg %p97
      %p209 = pneg %p121
      %p210 = pneg %p118
      %p211 = pneg %p147
      %p212 = pneg %p144
      %s213 = smul.u32 8, %s16
      %p214 = scmp.lt.s32.totalorder %s213, 15
      %s215 = scalar_select %p214, %s213, 15
      %s216 = smul.addr %s215, 4
      %s217 = scalar_lea.vmem %s5, %s216
      %s218 = smul.u32 8, %s16
      %p219 = scmp.lt.s32.totalorder %s218, 15
      %s220 = scalar_select %p219, %s218, 15
      %s221 = smul.addr %s220, 2
      %s222 = smul.addr %s221, 8
      %s223 = scalar_lea.vmem %s0, %s222
      %s224 = smul.u32 8, %s16
      %s225 = smul.u32 8, %s16
      %p226 = scmp.lt.s32.totalorder %s225, 15
      %s227 = scalar_select %p226, %s225, 15
      %s228 = smul.addr %s227, 4
      %s229 = scalar_lea.vmem %s5, %s228
      %s230 = smul.u32 8, %s16
      %232 = vst [vmem:[#allocation2] sm:$0x1] 0.0
      %233 = vst [vmem:[#allocation2 + $0x18] sm:$0x1] 0.0
      %234 = vst [vmem:[#allocation2 + $0x30] sm:$0x1] 0.0
      %235 = vst [vmem:[#allocation2 + $0x48] sm:$0x1] 0.0
      %236 = vst [vmem:[#allocation2 + $0x60] sm:$0x1] 0.0
      %237 = vst [vmem:[#allocation2 + $0x78] sm:$0x1] 0.0
      %238 = vst [vmem:[#allocation2 + $0x90] sm:$0x1] 0.0
      %239 = vst [vmem:[#allocation2 + $0xa8] sm:$0x1] 0.0
      %240 = vst [vmem:[#allocation2 + $0x11] sm:$0x1] 0.0
      %241 = vst [vmem:[#allocation2 + $0x29] sm:$0x1] 0.0
      %242 = vst [vmem:[#allocation2 + $0x41] sm:$0x1] 0.0
      %243 = vst [vmem:[#allocation2 + $0x59] sm:$0x1] 0.0
      %244 = vst [vmem:[#allocation2 + $0x71] sm:$0x1] 0.0
      %245 = vst [vmem:[#allocation2 + $0x89] sm:$0x1] 0.0
      %246 = vst [vmem:[#allocation2 + $0xa1] sm:$0x1] 0.0
      %247 = vst [vmem:[#allocation2 + $0xb9] sm:$0x1] 0.0
      %v248 = vld [vmem:[%s223] sm:$0xff]
      %v249 = vld [vmem:[%s223 + $0x8] sm:$0xff]
      %v250 = vld [vmem:[%s223 + $0x10] sm:$0xff]
      %v251 = vld [vmem:[%s223 + $0x18] sm:$0xff]
      %v252 = vld [vmem:[%s223 + $0x20] sm:$0xff]
      %v253 = vld [vmem:[%s223 + $0x28] sm:$0xff]
      %v254 = vld [vmem:[%s223 + $0x30] sm:$0xff]
      %v255 = vld [vmem:[%s223 + $0x38] sm:$0xff]
      %v256 = vld [vmem:[%s223 + $0x40] sm:$0xff]
      %v257 = vld [vmem:[%s223 + $0x48] sm:$0xff]
      %v258 = vld [vmem:[%s223 + $0x50] sm:$0xff]
      %v259 = vld [vmem:[%s223 + $0x58] sm:$0xff]
      %v260 = vld [vmem:[%s223 + $0x60] sm:$0xff]
      %v261 = vld [vmem:[%s223 + $0x68] sm:$0xff]
      %v262 = vld [vmem:[%s223 + $0x70] sm:$0xff]
      %v263 = vld [vmem:[%s223 + $0x78] sm:$0xff]
      %264 = vst [vmem:[#allocation2 + $0x1] sm:$0xff] %v248
      %265 = vst [vmem:[#allocation2 + $0x9] sm:$0xff] %v249
      %266 = vst [vmem:[#allocation2 + $0x19] sm:$0xff] %v250
      %267 = vst [vmem:[#allocation2 + $0x21] sm:$0xff] %v251
      %268 = vst [vmem:[#allocation2 + $0x31] sm:$0xff] %v252
      %269 = vst [vmem:[#allocation2 + $0x39] sm:$0xff] %v253
      %270 = vst [vmem:[#allocation2 + $0x49] sm:$0xff] %v254
      %271 = vst [vmem:[#allocation2 + $0x51] sm:$0xff] %v255
      %272 = vst [vmem:[#allocation2 + $0x61] sm:$0xff] %v256
      %273 = vst [vmem:[#allocation2 + $0x69] sm:$0xff] %v257
      %274 = vst [vmem:[#allocation2 + $0x79] sm:$0xff] %v258
      %275 = vst [vmem:[#allocation2 + $0x81] sm:$0xff] %v259
      %276 = vst [vmem:[#allocation2 + $0x91] sm:$0xff] %v260
      %277 = vst [vmem:[#allocation2 + $0x99] sm:$0xff] %v261
      %278 = vst [vmem:[#allocation2 + $0xa9] sm:$0xff] %v262
      %279 = vst [vmem:[#allocation2 + $0xb1] sm:$0xff] %v263
      %v280 = vld [vmem:[#allocation2] sm:$0xff]
      %v281 = vld [vmem:[#allocation2 + $0x8] sm:$0xff]
      %v282 = vld [vmem:[#allocation2 + $0x18] sm:$0xff]
      %v283 = vld [vmem:[#allocation2 + $0x20] sm:$0xff]
      %v284 = vld [vmem:[#allocation2 + $0x30] sm:$0xff]
      %v285 = vld [vmem:[#allocation2 + $0x38] sm:$0xff]
      %v286 = vld [vmem:[#allocation2 + $0x48] sm:$0xff]
      %v287 = vld [vmem:[#allocation2 + $0x50] sm:$0xff]
      %v288 = vld [vmem:[#allocation2 + $0x60] sm:$0xff]
      %v289 = vld [vmem:[#allocation2 + $0x68] sm:$0xff]
      %v290 = vld [vmem:[#allocation2 + $0x78] sm:$0xff]
      %v291 = vld [vmem:[#allocation2 + $0x80] sm:$0xff]
      %v292 = vld [vmem:[#allocation2 + $0x90] sm:$0xff]
      %v293 = vld [vmem:[#allocation2 + $0x98] sm:$0xff]
      %v294 = vld [vmem:[#allocation2 + $0xa8] sm:$0xff]
      %v295 = vld [vmem:[#allocation2 + $0xb0] sm:$0xff]
      %v296 = vld [vmem:[#allocation2 + $0x1] sm:$0xff]
      %v297 = vld [vmem:[#allocation2 + $0x9] sm:$0xff]
      %v298 = vld [vmem:[#allocation2 + $0x19] sm:$0xff]
      %v299 = vld [vmem:[#allocation2 + $0x21] sm:$0xff]
      %v300 = vld [vmem:[#allocation2 + $0x31] sm:$0xff]
      %v301 = vld [vmem:[#allocation2 + $0x39] sm:$0xff]
      %v302 = vld [vmem:[#allocation2 + $0x49] sm:$0xff]
      %v303 = vld [vmem:[#allocation2 + $0x51] sm:$0xff]
      %v304 = vld [vmem:[#allocation2 + $0x61] sm:$0xff]
      %v305 = vld [vmem:[#allocation2 + $0x69] sm:$0xff]
      %v306 = vld [vmem:[#allocation2 + $0x79] sm:$0xff]
      %v307 = vld [vmem:[#allocation2 + $0x81] sm:$0xff]
      %v308 = vld [vmem:[#allocation2 + $0x91] sm:$0xff]
      %v309 = vld [vmem:[#allocation2 + $0x99] sm:$0xff]
      %v310 = vld [vmem:[#allocation2 + $0xa9] sm:$0xff]
      %v311 = vld [vmem:[#allocation2 + $0xb1] sm:$0xff]
      %v312 = vld [vmem:[#allocation2 + $0x2] sm:$0xff]
      %v313 = vld [vmem:[#allocation2 + $0xa] sm:$0xff]
      %v314 = vld [vmem:[#allocation2 + $0x1a] sm:$0xff]
      %v315 = vld [vmem:[#allocation2 + $0x22] sm:$0xff]
      %v316 = vld [vmem:[#allocation2 + $0x32] sm:$0xff]
      %v317 = vld [vmem:[#allocation2 + $0x3a] sm:$0xff]
      %v318 = vld [vmem:[#allocation2 + $0x4a] sm:$0xff]
      %v319 = vld [vmem:[#allocation2 + $0x52] sm:$0xff]
      %v320 = vld [vmem:[#allocation2 + $0x62] sm:$0xff]
      %v321 = vld [vmem:[#allocation2 + $0x6a] sm:$0xff]
      %v322 = vld [vmem:[#allocation2 + $0x7a] sm:$0xff]
      %v323 = vld [vmem:[#allocation2 + $0x82] sm:$0xff]
      %v324 = vld [vmem:[#allocation2 + $0x92] sm:$0xff]
      %v325 = vld [vmem:[#allocation2 + $0x9a] sm:$0xff]
      %v326 = vld [vmem:[#allocation2 + $0xaa] sm:$0xff]
      %v327 = vld [vmem:[#allocation2 + $0xb2] sm:$0xff]
      %v328 = vpack.c.bf16 %v281, %v280
      %v329 = vpack.c.bf16 %v297, %v296
      %v330 = vpack.c.bf16 %v313, %v312
      %v331 = vpack.c.bf16 %v283, %v282
      %v332 = vpack.c.bf16 %v299, %v298
      %v333 = vpack.c.bf16 %v315, %v314
      %v334 = vpack.c.bf16 %v285, %v284
      %v335 = vpack.c.bf16 %v301, %v300
      %v336 = vpack.c.bf16 %v317, %v316
      %v337 = vpack.c.bf16 %v287, %v286
      %v338 = vpack.c.bf16 %v303, %v302
      %v339 = vpack.c.bf16 %v319, %v318
      %v340 = vpack.c.bf16 %v289, %v288
      %v341 = vpack.c.bf16 %v305, %v304
      %v342 = vpack.c.bf16 %v321, %v320
      %v343 = vpack.c.bf16 %v291, %v290
      %v344 = vpack.c.bf16 %v307, %v306
      %v345 = vpack.c.bf16 %v323, %v322
      %v346 = vpack.c.bf16 %v293, %v292
      %v347 = vpack.c.bf16 %v309, %v308
      %v348 = vpack.c.bf16 %v325, %v324
      %v349 = vpack.c.bf16 %v295, %v294
      %v350 = vpack.c.bf16 %v311, %v310
      %v351 = vpack.c.bf16 %v327, %v326
      %v352 = vld [vmem:[%s1] sm:$0xf]
      %v353 = vld [vmem:[%s1 + $0x4] sm:$0xf]
      %v354 = vld [vmem:[%s1 + $0x8] sm:$0xf]
      %v355 = vld [vmem:[%s1 + $0xc] sm:$0xf]
      %v356 = vld [vmem:[%s1 + $0x10] sm:$0xf]
      %v357 = vld [vmem:[%s1 + $0x14] sm:$0xf]
      %v358 = vld [vmem:[%s1 + $0x18] sm:$0xf]
      %v359 = vld [vmem:[%s1 + $0x1c] sm:$0xf]
      %v360 = vld [vmem:[%s1 + $0x20] sm:$0xf]
      %v361 = vld [vmem:[%s1 + $0x24] sm:$0xf]
      %v362 = vld [vmem:[%s1 + $0x28] sm:$0xf]
      %v363 = vld [vmem:[%s1 + $0x2c] sm:$0xf]
      %v364 = vld [vmem:[%s1 + $0x30] sm:$0xf]
      %v365 = vld [vmem:[%s1 + $0x34] sm:$0xf]
      %v366 = vld [vmem:[%s1 + $0x38] sm:$0xf]
      %v367 = vld [vmem:[%s1 + $0x3c] sm:$0xf]
      %v368 = vld [vmem:[%s1 + $0x40] sm:$0xf]
      %v369 = vld [vmem:[%s1 + $0x44] sm:$0xf]
      %v370 = vld [vmem:[%s1 + $0x48] sm:$0xf]
      %v371 = vld [vmem:[%s1 + $0x4c] sm:$0xf]
      %v372 = vld [vmem:[%s1 + $0x50] sm:$0xf]
      %v373 = vld [vmem:[%s1 + $0x54] sm:$0xf]
      %v374 = vld [vmem:[%s1 + $0x58] sm:$0xf]
      %v375 = vld [vmem:[%s1 + $0x5c] sm:$0xf]
      %v376 = vld [vmem:[%s1 + $0x60] sm:$0xf]
      %v377 = vld [vmem:[%s1 + $0x64] sm:$0xf]
      %v378 = vld [vmem:[%s1 + $0x68] sm:$0xf]
      %v379 = vld [vmem:[%s1 + $0x6c] sm:$0xf]
      %v380 = vld [vmem:[%s1 + $0x70] sm:$0xf]
      %v381 = vld [vmem:[%s1 + $0x74] sm:$0xf]
      %v382 = vld [vmem:[%s1 + $0x78] sm:$0xf]
      %v383 = vld [vmem:[%s1 + $0x7c] sm:$0xf]
      %v384 = vld [vmem:[%s1 + $0x80] sm:$0xf]
      %v385 = vld [vmem:[%s1 + $0x84] sm:$0xf]
      %v386 = vld [vmem:[%s1 + $0x88] sm:$0xf]
      %v387 = vld [vmem:[%s1 + $0x8c] sm:$0xf]
      %v388 = vld [vmem:[%s1 + $0x90] sm:$0xf]
      %v389 = vld [vmem:[%s1 + $0x94] sm:$0xf]
      %v390 = vld [vmem:[%s1 + $0x98] sm:$0xf]
      %v391 = vld [vmem:[%s1 + $0x9c] sm:$0xf]
      %v392 = vld [vmem:[%s1 + $0xa0] sm:$0xf]
      %v393 = vld [vmem:[%s1 + $0xa4] sm:$0xf]
      %v394 = vld [vmem:[%s1 + $0xa8] sm:$0xf]
      %v395 = vld [vmem:[%s1 + $0xac] sm:$0xf]
      %v396 = vld [vmem:[%s1 + $0xb0] sm:$0xf]
      %v397 = vld [vmem:[%s1 + $0xb4] sm:$0xf]
      %v398 = vld [vmem:[%s1 + $0xb8] sm:$0xf]
      %v399 = vld [vmem:[%s1 + $0xbc] sm:$0xf]
      %v400 = vld [vmem:[%s2] sm:$0x1]
      %v402 = vlaneseq
      %v403 = vshrl.u32 %v402, 7
      %v404 = vsub.s32 0, %v403
      %v405 = vrot.slane %v400, %v404
      %v455 = vunpack.c.l.b16 %v352
      %v456 = vunpack.c.l.b16 %v353
      %v457 = vunpack.c.l.b16 %v354
      %v458 = vunpack.c.l.b16 %v355
      %v459 = vunpack.c.l.b16 %v356
      %v460 = vunpack.c.l.b16 %v357
      %v461 = vunpack.c.l.b16 %v358
      %v462 = vunpack.c.l.b16 %v359
      %v463 = vunpack.c.l.b16 %v360
      %v464 = vunpack.c.l.b16 %v361
      %v465 = vunpack.c.l.b16 %v362
      %v466 = vunpack.c.l.b16 %v363
      %v467 = vunpack.c.l.b16 %v364
      %v468 = vunpack.c.l.b16 %v365
      %v469 = vunpack.c.l.b16 %v366
      %v470 = vunpack.c.l.b16 %v367
      %v471 = vunpack.c.l.b16 %v368
      %v472 = vunpack.c.l.b16 %v369
      %v473 = vunpack.c.l.b16 %v370
      %v474 = vunpack.c.l.b16 %v371
      %v475 = vunpack.c.l.b16 %v372
      %v476 = vunpack.c.l.b16 %v373
      %v477 = vunpack.c.l.b16 %v374
      %v478 = vunpack.c.l.b16 %v375
      %v479 = vunpack.c.l.b16 %v376
      %v480 = vunpack.c.l.b16 %v377
      %v481 = vunpack.c.l.b16 %v378
      %v482 = vunpack.c.l.b16 %v379
      %v483 = vunpack.c.l.b16 %v380
      %v484 = vunpack.c.l.b16 %v381
      %v485 = vunpack.c.l.b16 %v382
      %v486 = vunpack.c.l.b16 %v383
      %v487 = vunpack.c.l.b16 %v384
      %v488 = vunpack.c.l.b16 %v385
      %v489 = vunpack.c.l.b16 %v386
      %v490 = vunpack.c.l.b16 %v387
      %v491 = vunpack.c.l.b16 %v388
      %v492 = vunpack.c.l.b16 %v389
      %v493 = vunpack.c.l.b16 %v390
      %v494 = vunpack.c.l.b16 %v391
      %v495 = vunpack.c.l.b16 %v392
      %v496 = vunpack.c.l.b16 %v393
      %v497 = vunpack.c.l.b16 %v394
      %v498 = vunpack.c.l.b16 %v395
      %v499 = vunpack.c.l.b16 %v396
      %v500 = vunpack.c.l.b16 %v397
      %v501 = vunpack.c.l.b16 %v398
      %v502 = vunpack.c.l.b16 %v399
      %v503 = vpack.c.b16 %v456, %v455
      %v504 = vpack.c.b16 %v458, %v457
      %v505 = vpack.c.b16 %v460, %v459
      %v506 = vpack.c.b16 %v462, %v461
      %v507 = vpack.c.b16 %v464, %v463
      %v508 = vpack.c.b16 %v466, %v465
      %v509 = vpack.c.b16 %v468, %v467
      %v510 = vpack.c.b16 %v470, %v469
      %v511 = vpack.c.b16 %v472, %v471
      %v512 = vpack.c.b16 %v474, %v473
      %v513 = vpack.c.b16 %v476, %v475
      %v514 = vpack.c.b16 %v478, %v477
      %v515 = vpack.c.b16 %v480, %v479
      %v516 = vpack.c.b16 %v482, %v481
      %v517 = vpack.c.b16 %v484, %v483
      %v518 = vpack.c.b16 %v486, %v485
      %v519 = vpack.c.b16 %v488, %v487
      %v520 = vpack.c.b16 %v490, %v489
      %v521 = vpack.c.b16 %v492, %v491
      %v522 = vpack.c.b16 %v494, %v493
      %v523 = vpack.c.b16 %v496, %v495
      %v524 = vpack.c.b16 %v498, %v497
      %v525 = vpack.c.b16 %v500, %v499
      %v526 = vpack.c.b16 %v502, %v501
      %551 = vmatprep.subr.bf16.mxu0 0
      %552 = vmatpush1.bf16.msra.mxu0 %v510
      %553 = vmatprep.subr.bf16.mxu0 0
      %554 = vmatpush1.bf16.msra.mxu0 %v509
      %555 = vmatprep.subr.bf16.mxu0 0
      %556 = vmatpush1.bf16.msra.mxu0 %v508
      %557 = vmatprep.subr.bf16.mxu0 0
      %558 = vmatpush1.bf16.msra.mxu0 %v507
      %559 = vmatprep.subr.bf16.mxu0 0
      %560 = vmatpush1.bf16.msra.mxu0 %v506
      %561 = vmatprep.subr.bf16.mxu0 0
      %562 = vmatpush1.bf16.msra.mxu0 %v505
      %563 = vmatprep.subr.bf16.mxu0 0
      %564 = vmatpush1.bf16.msra.mxu0 %v504
      %565 = vmatprep.subr.bf16.mxu0 0
      %566 = vmatpush1.bf16.msra.mxu0 %v503
      %567 = vmatprep.subr.bf16.mxu0 0
      %568 = vmatpush2.bf16.msra.mxu0 %v518
      %569 = vmatprep.subr.bf16.mxu0 0
      %570 = vmatpush2.bf16.msra.mxu0 %v517
      %571 = vmatprep.subr.bf16.mxu0 0
      %572 = vmatpush2.bf16.msra.mxu0 %v516
      %573 = vmatprep.subr.bf16.mxu0 0
      %574 = vmatpush2.bf16.msra.mxu0 %v515
      %575 = vmatprep.subr.bf16.mxu0 0
      %576 = vmatpush2.bf16.msra.mxu0 %v514
      %577 = vmatprep.subr.bf16.mxu0 0
      %578 = vmatpush2.bf16.msra.mxu0 %v513
      %579 = vmatprep.subr.bf16.mxu0 0
      %580 = vmatpush2.bf16.msra.mxu0 %v512
      %581 = vmatprep.subr.bf16.mxu0 0
      %582 = vmatpush2.bf16.msra.mxu0 %v511
      %583 = vmatprep.mubr.bf16.mxu0 %v329
      %584 = vmatmul.mubr.bf16.gmra.mxu0 %v328
      %v585 = vpop.f32.mrf.mxu0
      %v586 = vadd.f32 %v405, %v585
      %v587 = vpop.f32.mrf.mxu0
      %v588 = vpop.f32.mrf.mxu0
      %v589 = vadd.f32 %v405, %v588
      %v590 = vpop.f32.mrf.mxu0
      %591 = vmatprep.mubr.bf16.mxu0 %v332
      %592 = vmatmul.mubr.bf16.gmra.mxu0 %v331
      %v593 = vpop.f32.mrf.mxu0
      %v594 = vadd.f32 %v405, %v593
      %v595 = vpop.f32.mrf.mxu0
      %v596 = vpop.f32.mrf.mxu0
      %v597 = vadd.f32 %v405, %v596
      %v598 = vpop.f32.mrf.mxu0
      %599 = vmatprep.mubr.bf16.mxu0 %v335
      %600 = vmatmul.mubr.bf16.gmra.mxu0 %v334
      %v601 = vpop.f32.mrf.mxu0
      %v602 = vadd.f32 %v405, %v601
      %v603 = vpop.f32.mrf.mxu0
      %v604 = vpop.f32.mrf.mxu0
      %v605 = vadd.f32 %v405, %v604
      %v606 = vpop.f32.mrf.mxu0
      %607 = vmatprep.mubr.bf16.mxu0 %v338
      %608 = vmatmul.mubr.bf16.gmra.mxu0 %v337
      %v609 = vpop.f32.mrf.mxu0
      %v610 = vadd.f32 %v405, %v609
      %v611 = vpop.f32.mrf.mxu0
      %v612 = vpop.f32.mrf.mxu0
      %v613 = vadd.f32 %v405, %v612
      %v614 = vpop.f32.mrf.mxu0
      %615 = vmatprep.mubr.bf16.mxu0 %v341
      %616 = vmatmul.mubr.bf16.gmra.mxu0 %v340
      %v617 = vpop.f32.mrf.mxu0
      %v618 = vadd.f32 %v405, %v617
      %v619 = vpop.f32.mrf.mxu0
      %v620 = vpop.f32.mrf.mxu0
      %v621 = vadd.f32 %v405, %v620
      %v622 = vpop.f32.mrf.mxu0
      %623 = vmatprep.mubr.bf16.mxu0 %v344
      %624 = vmatmul.mubr.bf16.gmra.mxu0 %v343
      %v625 = vpop.f32.mrf.mxu0
      %v626 = vadd.f32 %v405, %v625
      %v627 = vpop.f32.mrf.mxu0
      %v628 = vpop.f32.mrf.mxu0
      %v629 = vadd.f32 %v405, %v628
      %v630 = vpop.f32.mrf.mxu0
      %631 = vmatprep.mubr.bf16.mxu0 %v347
      %632 = vmatmul.mubr.bf16.gmra.mxu0 %v346
      %v633 = vpop.f32.mrf.mxu0
      %v634 = vadd.f32 %v405, %v633
      %v635 = vpop.f32.mrf.mxu0
      %v636 = vpop.f32.mrf.mxu0
      %v637 = vadd.f32 %v405, %v636
      %v638 = vpop.f32.mrf.mxu0
      %639 = vmatprep.mubr.bf16.mxu0 %v350
      %640 = vmatmul.mubr.bf16.gmra.mxu0 %v349
      %v641 = vpop.f32.mrf.mxu0
      %v642 = vadd.f32 %v405, %v641
      %v643 = vpop.f32.mrf.mxu0
      %v644 = vpop.f32.mrf.mxu0
      %v645 = vadd.f32 %v405, %v644
      %v646 = vpop.f32.mrf.mxu0
      %647 = vdwg.mxu0
      %648 = vmatprep.subr.bf16.mxu0 0
      %649 = vmatpush1.bf16.msra.mxu0 %v526
      %650 = vmatprep.subr.bf16.mxu0 0
      %651 = vmatpush1.bf16.msra.mxu0 %v525
      %652 = vmatprep.subr.bf16.mxu0 0
      %653 = vmatpush1.bf16.msra.mxu0 %v524
      %654 = vmatprep.subr.bf16.mxu0 0
      %655 = vmatpush1.bf16.msra.mxu0 %v523
      %656 = vmatprep.subr.bf16.mxu0 0
      %657 = vmatpush1.bf16.msra.mxu0 %v522
      %658 = vmatprep.subr.bf16.mxu0 0
      %659 = vmatpush1.bf16.msra.mxu0 %v521
      %660 = vmatprep.subr.bf16.mxu0 0
      %661 = vmatpush1.bf16.msra.mxu0 %v520
      %662 = vmatprep.subr.bf16.mxu0 0
      %663 = vmatpush1.bf16.msra.mxu0 %v519
      %664 = vmatprep.subr.bf16.mxu0 0
      %665 = vmatpush2.bf16.msra.mxu0 0
      %666 = vmatprep.subr.bf16.mxu0 0
      %667 = vmatpush2.bf16.msra.mxu0 0
      %668 = vmatprep.subr.bf16.mxu0 0
      %669 = vmatpush2.bf16.msra.mxu0 0
      %670 = vmatprep.subr.bf16.mxu0 0
      %671 = vmatpush2.bf16.msra.mxu0 0
      %672 = vmatprep.subr.bf16.mxu0 0
      %673 = vmatpush2.bf16.msra.mxu0 0
      %674 = vmatprep.subr.bf16.mxu0 0
      %675 = vmatpush2.bf16.msra.mxu0 0
      %676 = vmatprep.subr.bf16.mxu0 0
      %677 = vmatpush2.bf16.msra.mxu0 0
      %678 = vmatprep.subr.bf16.mxu0 0
      %679 = vmatpush2.bf16.msra.mxu0 0
      %680 = vmatprep.mubr.bf16.mxu0 0
      %681 = vmatmul.mubr.bf16.gmra.mxu0 %v330
      %v682 = vpop.f32.mrf.mxu0
      %v683 = vadd.f32 %v586, %v682
      %v684 = vpop.f32.mrf.mxu0
      %v685 = vpop.f32.mrf.mxu0
      %v686 = vadd.f32 %v589, %v685
      %v687 = vpop.f32.mrf.mxu0
      %688 = vmatprep.mubr.bf16.mxu0 0
      %689 = vmatmul.mubr.bf16.gmra.mxu0 %v333
      %v690 = vpop.f32.mrf.mxu0
      %v691 = vadd.f32 %v594, %v690
      %v692 = vpop.f32.mrf.mxu0
      %v693 = vpop.f32.mrf.mxu0
      %v694 = vadd.f32 %v597, %v693
      %v695 = vpop.f32.mrf.mxu0
      %696 = vmatprep.mubr.bf16.mxu0 0
      %697 = vmatmul.mubr.bf16.gmra.mxu0 %v336
      %v698 = vpop.f32.mrf.mxu0
      %v699 = vadd.f32 %v602, %v698
      %v700 = vpop.f32.mrf.mxu0
      %v701 = vpop.f32.mrf.mxu0
      %v702 = vadd.f32 %v605, %v701
      %v703 = vpop.f32.mrf.mxu0
      %704 = vmatprep.mubr.bf16.mxu0 0
      %705 = vmatmul.mubr.bf16.gmra.mxu0 %v339
      %v706 = vpop.f32.mrf.mxu0
      %v707 = vadd.f32 %v610, %v706
      %v708 = vpop.f32.mrf.mxu0
      %v709 = vpop.f32.mrf.mxu0
      %v710 = vadd.f32 %v613, %v709
      %v711 = vpop.f32.mrf.mxu0
      %712 = vmatprep.mubr.bf16.mxu0 0
      %713 = vmatmul.mubr.bf16.gmra.mxu0 %v342
      %v714 = vpop.f32.mrf.mxu0
      %v715 = vadd.f32 %v618, %v714
      %v716 = vpop.f32.mrf.mxu0
      %v717 = vpop.f32.mrf.mxu0
      %v718 = vadd.f32 %v621, %v717
      %v719 = vpop.f32.mrf.mxu0
      %720 = vmatprep.mubr.bf16.mxu0 0
      %721 = vmatmul.mubr.bf16.gmra.mxu0 %v345
      %v722 = vpop.f32.mrf.mxu0
      %v723 = vadd.f32 %v626, %v722
      %v724 = vpop.f32.mrf.mxu0
      %v725 = vpop.f32.mrf.mxu0
      %v726 = vadd.f32 %v629, %v725
      %v727 = vpop.f32.mrf.mxu0
      %728 = vmatprep.mubr.bf16.mxu0 0
      %729 = vmatmul.mubr.bf16.gmra.mxu0 %v348
      %v730 = vpop.f32.mrf.mxu0
      %v731 = vadd.f32 %v634, %v730
      %v732 = vpop.f32.mrf.mxu0
      %v733 = vpop.f32.mrf.mxu0
      %v734 = vadd.f32 %v637, %v733
      %v735 = vpop.f32.mrf.mxu0
      %736 = vmatprep.mubr.bf16.mxu0 0
      %737 = vmatmul.mubr.bf16.gmra.mxu0 %v351
      %v738 = vpop.f32.mrf.mxu0
      %v739 = vadd.f32 %v642, %v738
      %v740 = vpop.f32.mrf.mxu0
      %v741 = vpop.f32.mrf.mxu0
      %v742 = vadd.f32 %v645, %v741
      %v743 = vpop.f32.mrf.mxu0
      %744 = vdwg.mxu0
      %v745 = vmax.f32 %v683, 0.0
      %v746 = vmax.f32 %v686, 0.0
      %v747 = vmax.f32 %v691, 0.0
      %v748 = vmax.f32 %v694, 0.0
      %v749 = vmax.f32 %v699, 0.0
      %v750 = vmax.f32 %v702, 0.0
      %v751 = vmax.f32 %v707, 0.0
      %v752 = vmax.f32 %v710, 0.0
      %v753 = vmax.f32 %v715, 0.0
      %v754 = vmax.f32 %v718, 0.0
      %v755 = vmax.f32 %v723, 0.0
      %v756 = vmax.f32 %v726, 0.0
      %v757 = vmax.f32 %v731, 0.0
      %v758 = vmax.f32 %v734, 0.0
      %v759 = vmax.f32 %v739, 0.0
      %v760 = vmax.f32 %v742, 0.0
      %761 = vrot.lane.b32.xlu0 %v745, 120
      %v762 = vpop.permute.xlu0 %761
      %763 = vrot.lane.b32.xlu0 %v746, 120
      %v764 = vpop.permute.xlu0 %763
      %765 = vrot.lane.b32.xlu0 %v747, 120
      %v766 = vpop.permute.xlu0 %765
      %767 = vrot.lane.b32.xlu0 %v748, 120
      %v768 = vpop.permute.xlu0 %767
      %769 = vrot.lane.b32.xlu0 %v749, 120
      %v770 = vpop.permute.xlu0 %769
      %771 = vrot.lane.b32.xlu0 %v750, 120
      %v772 = vpop.permute.xlu0 %771
      %773 = vrot.lane.b32.xlu0 %v751, 120
      %v774 = vpop.permute.xlu0 %773
      %775 = vrot.lane.b32.xlu0 %v752, 120
      %v776 = vpop.permute.xlu0 %775
      %777 = vrot.lane.b32.xlu0 %v753, 120
      %v778 = vpop.permute.xlu0 %777
      %779 = vrot.lane.b32.xlu0 %v754, 120
      %v780 = vpop.permute.xlu0 %779
      %781 = vrot.lane.b32.xlu0 %v755, 120
      %v782 = vpop.permute.xlu0 %781
      %783 = vrot.lane.b32.xlu0 %v756, 120
      %v784 = vpop.permute.xlu0 %783
      %785 = vrot.lane.b32.xlu0 %v757, 120
      %v786 = vpop.permute.xlu0 %785
      %787 = vrot.lane.b32.xlu0 %v758, 120
      %v788 = vpop.permute.xlu0 %787
      %789 = vrot.lane.b32.xlu0 %v759, 120
      %v790 = vpop.permute.xlu0 %789
      %791 = vrot.lane.b32.xlu0 %v760, 120
      %v792 = vpop.permute.xlu0 %791
      %v793 = vmax.f32 %v745, %v762
      %v794 = vmax.f32 %v746, %v764
      %v795 = vmax.f32 %v747, %v766
      %v796 = vmax.f32 %v748, %v768
      %v797 = vmax.f32 %v749, %v770
      %v798 = vmax.f32 %v750, %v772
      %v799 = vmax.f32 %v751, %v774
      %v800 = vmax.f32 %v752, %v776
      %v801 = vmax.f32 %v753, %v778
      %v802 = vmax.f32 %v754, %v780
      %v803 = vmax.f32 %v755, %v782
      %v804 = vmax.f32 %v756, %v784
      %v805 = vmax.f32 %v757, %v786
      %v806 = vmax.f32 %v758, %v788
      %v807 = vmax.f32 %v759, %v790
      %v808 = vmax.f32 %v760, %v792
      %v825 = vcombine.high %v793, %v793
      %v827 = vunpack.c.l.s4 1983009808
      %v828 = vunpack.c.0.s8 %v827
      %v829 = vlaneseq
      %v830 = vshrl.u32 %v829, 7
      %v831 = vsub.s32 %v828, %v830
      %v832 = vrot.slane %v793, %v831
      %v834 = vunpack.c.l.s4 1983009808
      %v835 = vunpack.c.0.s8 %v834
      %v836 = vlaneseq
      %v837 = vshrl.u32 %v836, 7
      %v838 = vsub.s32 %v835, %v837
      %v839 = vrot.slane %v825, %v838
      %v840 = vcombine.high %v832, %v832
      %v841 = vcombine.high %v839, %v839
      %v842 = vcombine.high %v794, %v794
      %v844 = vunpack.c.l.s4 1983009808
      %v845 = vunpack.c.0.s8 %v844
      %v846 = vlaneseq
      %v847 = vshrl.u32 %v846, 7
      %v848 = vsub.s32 %v845, %v847
      %v849 = vrot.slane %v794, %v848
      %v851 = vunpack.c.l.s4 1983009808
      %v852 = vunpack.c.0.s8 %v851
      %v853 = vlaneseq
      %v854 = vshrl.u32 %v853, 7
      %v855 = vsub.s32 %v852, %v854
      %v856 = vrot.slane %v842, %v855
      %v857 = vcombine.high %v849, %v849
      %v858 = vcombine.high %v856, %v856
      %v859 = vcombine.high %v795, %v795
      %v861 = vunpack.c.l.s4 1983009808
      %v862 = vunpack.c.0.s8 %v861
      %v863 = vlaneseq
      %v864 = vshrl.u32 %v863, 7
      %v865 = vsub.s32 %v862, %v864
      %v866 = vrot.slane %v795, %v865
      %v868 = vunpack.c.l.s4 1983009808
      %v869 = vunpack.c.0.s8 %v868
      %v870 = vlaneseq
      %v871 = vshrl.u32 %v870, 7
      %v872 = vsub.s32 %v869, %v871
      %v873 = vrot.slane %v859, %v872
      %v874 = vcombine.high %v866, %v866
      %v875 = vcombine.high %v873, %v873
      %v876 = vcombine.high %v796, %v796
      %v878 = vunpack.c.l.s4 1983009808
      %v879 = vunpack.c.0.s8 %v878
      %v880 = vlaneseq
      %v881 = vshrl.u32 %v880, 7
      %v882 = vsub.s32 %v879, %v881
      %v883 = vrot.slane %v796, %v882
      %v885 = vunpack.c.l.s4 1983009808
      %v886 = vunpack.c.0.s8 %v885
      %v887 = vlaneseq
      %v888 = vshrl.u32 %v887, 7
      %v889 = vsub.s32 %v886, %v888
      %v890 = vrot.slane %v876, %v889
      %v891 = vcombine.high %v883, %v883
      %v892 = vcombine.high %v890, %v890
      %v893 = vcombine.high %v797, %v797
      %v895 = vunpack.c.l.s4 1983009808
      %v896 = vunpack.c.0.s8 %v895
      %v897 = vlaneseq
      %v898 = vshrl.u32 %v897, 7
      %v899 = vsub.s32 %v896, %v898
      %v900 = vrot.slane %v797, %v899
      %v902 = vunpack.c.l.s4 1983009808
      %v903 = vunpack.c.0.s8 %v902
      %v904 = vlaneseq
      %v905 = vshrl.u32 %v904, 7
      %v906 = vsub.s32 %v903, %v905
      %v907 = vrot.slane %v893, %v906
      %v908 = vcombine.high %v900, %v900
      %v909 = vcombine.high %v907, %v907
      %v910 = vcombine.high %v798, %v798
      %v912 = vunpack.c.l.s4 1983009808
      %v913 = vunpack.c.0.s8 %v912
      %v914 = vlaneseq
      %v915 = vshrl.u32 %v914, 7
      %v916 = vsub.s32 %v913, %v915
      %v917 = vrot.slane %v798, %v916
      %v919 = vunpack.c.l.s4 1983009808
      %v920 = vunpack.c.0.s8 %v919
      %v921 = vlaneseq
      %v922 = vshrl.u32 %v921, 7
      %v923 = vsub.s32 %v920, %v922
      %v924 = vrot.slane %v910, %v923
      %v925 = vcombine.high %v917, %v917
      %v926 = vcombine.high %v924, %v924
      %v927 = vcombine.high %v799, %v799
      %v929 = vunpack.c.l.s4 1983009808
      %v930 = vunpack.c.0.s8 %v929
      %v931 = vlaneseq
      %v932 = vshrl.u32 %v931, 7
      %v933 = vsub.s32 %v930, %v932
      %v934 = vrot.slane %v799, %v933
      %v936 = vunpack.c.l.s4 1983009808
      %v937 = vunpack.c.0.s8 %v936
      %v938 = vlaneseq
      %v939 = vshrl.u32 %v938, 7
      %v940 = vsub.s32 %v937, %v939
      %v941 = vrot.slane %v927, %v940
      %v942 = vcombine.high %v934, %v934
      %v943 = vcombine.high %v941, %v941
      %v944 = vcombine.high %v800, %v800
      %v946 = vunpack.c.l.s4 1983009808
      %v947 = vunpack.c.0.s8 %v946
      %v948 = vlaneseq
      %v949 = vshrl.u32 %v948, 7
      %v950 = vsub.s32 %v947, %v949
      %v951 = vrot.slane %v800, %v950
      %v953 = vunpack.c.l.s4 1983009808
      %v954 = vunpack.c.0.s8 %v953
      %v955 = vlaneseq
      %v956 = vshrl.u32 %v955, 7
      %v957 = vsub.s32 %v954, %v956
      %v958 = vrot.slane %v944, %v957
      %v959 = vcombine.high %v951, %v951
      %v960 = vcombine.high %v958, %v958
      %v961 = vcombine.high %v801, %v801
      %v963 = vunpack.c.l.s4 1983009808
      %v964 = vunpack.c.0.s8 %v963
      %v965 = vlaneseq
      %v966 = vshrl.u32 %v965, 7
      %v967 = vsub.s32 %v964, %v966
      %v968 = vrot.slane %v801, %v967
      %v970 = vunpack.c.l.s4 1983009808
      %v971 = vunpack.c.0.s8 %v970
      %v972 = vlaneseq
      %v973 = vshrl.u32 %v972, 7
      %v974 = vsub.s32 %v971, %v973
      %v975 = vrot.slane %v961, %v974
      %v976 = vcombine.high %v968, %v968
      %v977 = vcombine.high %v975, %v975
      %v978 = vcombine.high %v802, %v802
      %v980 = vunpack.c.l.s4 1983009808
      %v981 = vunpack.c.0.s8 %v980
      %v982 = vlaneseq
      %v983 = vshrl.u32 %v982, 7
      %v984 = vsub.s32 %v981, %v983
      %v985 = vrot.slane %v802, %v984
      %v987 = vunpack.c.l.s4 1983009808
      %v988 = vunpack.c.0.s8 %v987
      %v989 = vlaneseq
      %v990 = vshrl.u32 %v989, 7
      %v991 = vsub.s32 %v988, %v990
      %v992 = vrot.slane %v978, %v991
      %v993 = vcombine.high %v985, %v985
      %v994 = vcombine.high %v992, %v992
      %v995 = vcombine.high %v803, %v803
      %v997 = vunpack.c.l.s4 1983009808
      %v998 = vunpack.c.0.s8 %v997
      %v999 = vlaneseq
      %v1000 = vshrl.u32 %v999, 7
      %v1001 = vsub.s32 %v998, %v1000
      %v1002 = vrot.slane %v803, %v1001
      %v1004 = vunpack.c.l.s4 1983009808
      %v1005 = vunpack.c.0.s8 %v1004
      %v1006 = vlaneseq
      %v1007 = vshrl.u32 %v1006, 7
      %v1008 = vsub.s32 %v1005, %v1007
      %v1009 = vrot.slane %v995, %v1008
      %v1010 = vcombine.high %v1002, %v1002
      %v1011 = vcombine.high %v1009, %v1009
      %v1012 = vcombine.high %v804, %v804
      %v1014 = vunpack.c.l.s4 1983009808
      %v1015 = vunpack.c.0.s8 %v1014
      %v1016 = vlaneseq
      %v1017 = vshrl.u32 %v1016, 7
      %v1018 = vsub.s32 %v1015, %v1017
      %v1019 = vrot.slane %v804, %v1018
      %v1021 = vunpack.c.l.s4 1983009808
      %v1022 = vunpack.c.0.s8 %v1021
      %v1023 = vlaneseq
      %v1024 = vshrl.u32 %v1023, 7
      %v1025 = vsub.s32 %v1022, %v1024
      %v1026 = vrot.slane %v1012, %v1025
      %v1027 = vcombine.high %v1019, %v1019
      %v1028 = vcombine.high %v1026, %v1026
      %v1029 = vcombine.high %v805, %v805
      %v1031 = vunpack.c.l.s4 1983009808
      %v1032 = vunpack.c.0.s8 %v1031
      %v1033 = vlaneseq
      %v1034 = vshrl.u32 %v1033, 7
      %v1035 = vsub.s32 %v1032, %v1034
      %v1036 = vrot.slane %v805, %v1035
      %v1038 = vunpack.c.l.s4 1983009808
      %v1039 = vunpack.c.0.s8 %v1038
      %v1040 = vlaneseq
      %v1041 = vshrl.u32 %v1040, 7
      %v1042 = vsub.s32 %v1039, %v1041
      %v1043 = vrot.slane %v1029, %v1042
      %v1044 = vcombine.high %v1036, %v1036
      %v1045 = vcombine.high %v1043, %v1043
      %v1046 = vcombine.high %v806, %v806
      %v1048 = vunpack.c.l.s4 1983009808
      %v1049 = vunpack.c.0.s8 %v1048
      %v1050 = vlaneseq
      %v1051 = vshrl.u32 %v1050, 7
      %v1052 = vsub.s32 %v1049, %v1051
      %v1053 = vrot.slane %v806, %v1052
      %v1055 = vunpack.c.l.s4 1983009808
      %v1056 = vunpack.c.0.s8 %v1055
      %v1057 = vlaneseq
      %v1058 = vshrl.u32 %v1057, 7
      %v1059 = vsub.s32 %v1056, %v1058
      %v1060 = vrot.slane %v1046, %v1059
      %v1061 = vcombine.high %v1053, %v1053
      %v1062 = vcombine.high %v1060, %v1060
      %v1063 = vcombine.high %v807, %v807
      %v1065 = vunpack.c.l.s4 1983009808
      %v1066 = vunpack.c.0.s8 %v1065
      %v1067 = vlaneseq
      %v1068 = vshrl.u32 %v1067, 7
      %v1069 = vsub.s32 %v1066, %v1068
      %v1070 = vrot.slane %v807, %v1069
      %v1072 = vunpack.c.l.s4 1983009808
      %v1073 = vunpack.c.0.s8 %v1072
      %v1074 = vlaneseq
      %v1075 = vshrl.u32 %v1074, 7
      %v1076 = vsub.s32 %v1073, %v1075
      %v1077 = vrot.slane %v1063, %v1076
      %v1078 = vcombine.high %v1070, %v1070
      %v1079 = vcombine.high %v1077, %v1077
      %v1080 = vcombine.high %v808, %v808
      %v1082 = vunpack.c.l.s4 1983009808
      %v1083 = vunpack.c.0.s8 %v1082
      %v1084 = vlaneseq
      %v1085 = vshrl.u32 %v1084, 7
      %v1086 = vsub.s32 %v1083, %v1085
      %v1087 = vrot.slane %v808, %v1086
      %v1089 = vunpack.c.l.s4 1983009808
      %v1090 = vunpack.c.0.s8 %v1089
      %v1091 = vlaneseq
      %v1092 = vshrl.u32 %v1091, 7
      %v1093 = vsub.s32 %v1090, %v1092
      %v1094 = vrot.slane %v1080, %v1093
      %v1095 = vcombine.high %v1087, %v1087
      %v1096 = vcombine.high %v1094, %v1094
      %vm1161 = vcmask 1041408
      %v1162 = vsel %vm1161, %v832, -inf
      %v1163 = vrot.slane %v1162, 4
      %v1164 = vmax.f32 %v1162, %v1163
      %v1165 = vrot.slane %v1164, 2
      %v1166 = vmax.f32 %v1164, %v1165
      %v1167 = vrot.slane %v1166, 1
      %v1168 = vmax.f32 %v1166, %v1167
      %v1169 = vsel %vm1161, %v840, -inf
      %v1170 = vrot.slane %v1169, 4
      %v1171 = vmax.f32 %v1169, %v1170
      %v1172 = vrot.slane %v1171, 2
      %v1173 = vmax.f32 %v1171, %v1172
      %v1174 = vrot.slane %v1173, 1
      %v1175 = vmax.f32 %v1173, %v1174
      %v1176 = vsel %vm1161, %v839, -inf
      %v1177 = vrot.slane %v1176, 4
      %v1178 = vmax.f32 %v1176, %v1177
      %v1179 = vrot.slane %v1178, 2
      %v1180 = vmax.f32 %v1178, %v1179
      %v1181 = vrot.slane %v1180, 1
      %v1182 = vmax.f32 %v1180, %v1181
      %v1183 = vsel %vm1161, %v841, -inf
      %v1184 = vrot.slane %v1183, 4
      %v1185 = vmax.f32 %v1183, %v1184
      %v1186 = vrot.slane %v1185, 2
      %v1187 = vmax.f32 %v1185, %v1186
      %v1188 = vrot.slane %v1187, 1
      %v1189 = vmax.f32 %v1187, %v1188
      %v1190 = vsel %vm1161, %v849, -inf
      %v1191 = vrot.slane %v1190, 4
      %v1192 = vmax.f32 %v1190, %v1191
      %v1193 = vrot.slane %v1192, 2
      %v1194 = vmax.f32 %v1192, %v1193
      %v1195 = vrot.slane %v1194, 1
      %v1196 = vmax.f32 %v1194, %v1195
      %v1197 = vsel %vm1161, %v857, -inf
      %v1198 = vrot.slane %v1197, 4
      %v1199 = vmax.f32 %v1197, %v1198
      %v1200 = vrot.slane %v1199, 2
      %v1201 = vmax.f32 %v1199, %v1200
      %v1202 = vrot.slane %v1201, 1
      %v1203 = vmax.f32 %v1201, %v1202
      %v1204 = vsel %vm1161, %v856, -inf
      %v1205 = vrot.slane %v1204, 4
      %v1206 = vmax.f32 %v1204, %v1205
      %v1207 = vrot.slane %v1206, 2
      %v1208 = vmax.f32 %v1206, %v1207
      %v1209 = vrot.slane %v1208, 1
      %v1210 = vmax.f32 %v1208, %v1209
      %v1211 = vsel %vm1161, %v858, -inf
      %v1212 = vrot.slane %v1211, 4
      %v1213 = vmax.f32 %v1211, %v1212
      %v1214 = vrot.slane %v1213, 2
      %v1215 = vmax.f32 %v1213, %v1214
      %v1216 = vrot.slane %v1215, 1
      %v1217 = vmax.f32 %v1215, %v1216
      %v1218 = vsel %vm1161, %v866, -inf
      %v1219 = vrot.slane %v1218, 4
      %v1220 = vmax.f32 %v1218, %v1219
      %v1221 = vrot.slane %v1220, 2
      %v1222 = vmax.f32 %v1220, %v1221
      %v1223 = vrot.slane %v1222, 1
      %v1224 = vmax.f32 %v1222, %v1223
      %v1225 = vsel %vm1161, %v874, -inf
      %v1226 = vrot.slane %v1225, 4
      %v1227 = vmax.f32 %v1225, %v1226
      %v1228 = vrot.slane %v1227, 2
      %v1229 = vmax.f32 %v1227, %v1228
      %v1230 = vrot.slane %v1229, 1
      %v1231 = vmax.f32 %v1229, %v1230
      %v1232 = vsel %vm1161, %v873, -inf
      %v1233 = vrot.slane %v1232, 4
      %v1234 = vmax.f32 %v1232, %v1233
      %v1235 = vrot.slane %v1234, 2
      %v1236 = vmax.f32 %v1234, %v1235
      %v1237 = vrot.slane %v1236, 1
      %v1238 = vmax.f32 %v1236, %v1237
      %v1239 = vsel %vm1161, %v875, -inf
      %v1240 = vrot.slane %v1239, 4
      %v1241 = vmax.f32 %v1239, %v1240
      %v1242 = vrot.slane %v1241, 2
      %v1243 = vmax.f32 %v1241, %v1242
      %v1244 = vrot.slane %v1243, 1
      %v1245 = vmax.f32 %v1243, %v1244
      %v1246 = vsel %vm1161, %v883, -inf
      %v1247 = vrot.slane %v1246, 4
      %v1248 = vmax.f32 %v1246, %v1247
      %v1249 = vrot.slane %v1248, 2
      %v1250 = vmax.f32 %v1248, %v1249
      %v1251 = vrot.slane %v1250, 1
      %v1252 = vmax.f32 %v1250, %v1251
      %v1253 = vsel %vm1161, %v891, -inf
      %v1254 = vrot.slane %v1253, 4
      %v1255 = vmax.f32 %v1253, %v1254
      %v1256 = vrot.slane %v1255, 2
      %v1257 = vmax.f32 %v1255, %v1256
      %v1258 = vrot.slane %v1257, 1
      %v1259 = vmax.f32 %v1257, %v1258
      %v1260 = vsel %vm1161, %v890, -inf
      %v1261 = vrot.slane %v1260, 4
      %v1262 = vmax.f32 %v1260, %v1261
      %v1263 = vrot.slane %v1262, 2
      %v1264 = vmax.f32 %v1262, %v1263
      %v1265 = vrot.slane %v1264, 1
      %v1266 = vmax.f32 %v1264, %v1265
      %v1267 = vsel %vm1161, %v892, -inf
      %v1268 = vrot.slane %v1267, 4
      %v1269 = vmax.f32 %v1267, %v1268
      %v1270 = vrot.slane %v1269, 2
      %v1271 = vmax.f32 %v1269, %v1270
      %v1272 = vrot.slane %v1271, 1
      %v1273 = vmax.f32 %v1271, %v1272
      %v1274 = vsel %vm1161, %v900, -inf
      %v1275 = vrot.slane %v1274, 4
      %v1276 = vmax.f32 %v1274, %v1275
      %v1277 = vrot.slane %v1276, 2
      %v1278 = vmax.f32 %v1276, %v1277
      %v1279 = vrot.slane %v1278, 1
      %v1280 = vmax.f32 %v1278, %v1279
      %v1281 = vsel %vm1161, %v908, -inf
      %v1282 = vrot.slane %v1281, 4
      %v1283 = vmax.f32 %v1281, %v1282
      %v1284 = vrot.slane %v1283, 2
      %v1285 = vmax.f32 %v1283, %v1284
      %v1286 = vrot.slane %v1285, 1
      %v1287 = vmax.f32 %v1285, %v1286
      %v1288 = vsel %vm1161, %v907, -inf
      %v1289 = vrot.slane %v1288, 4
      %v1290 = vmax.f32 %v1288, %v1289
      %v1291 = vrot.slane %v1290, 2
      %v1292 = vmax.f32 %v1290, %v1291
      %v1293 = vrot.slane %v1292, 1
      %v1294 = vmax.f32 %v1292, %v1293
      %v1295 = vsel %vm1161, %v909, -inf
      %v1296 = vrot.slane %v1295, 4
      %v1297 = vmax.f32 %v1295, %v1296
      %v1298 = vrot.slane %v1297, 2
      %v1299 = vmax.f32 %v1297, %v1298
      %v1300 = vrot.slane %v1299, 1
      %v1301 = vmax.f32 %v1299, %v1300
      %v1302 = vsel %vm1161, %v917, -inf
      %v1303 = vrot.slane %v1302, 4
      %v1304 = vmax.f32 %v1302, %v1303
      %v1305 = vrot.slane %v1304, 2
      %v1306 = vmax.f32 %v1304, %v1305
      %v1307 = vrot.slane %v1306, 1
      %v1308 = vmax.f32 %v1306, %v1307
      %v1309 = vsel %vm1161, %v925, -inf
      %v1310 = vrot.slane %v1309, 4
      %v1311 = vmax.f32 %v1309, %v1310
      %v1312 = vrot.slane %v1311, 2
      %v1313 = vmax.f32 %v1311, %v1312
      %v1314 = vrot.slane %v1313, 1
      %v1315 = vmax.f32 %v1313, %v1314
      %v1316 = vsel %vm1161, %v924, -inf
      %v1317 = vrot.slane %v1316, 4
      %v1318 = vmax.f32 %v1316, %v1317
      %v1319 = vrot.slane %v1318, 2
      %v1320 = vmax.f32 %v1318, %v1319
      %v1321 = vrot.slane %v1320, 1
      %v1322 = vmax.f32 %v1320, %v1321
      %v1323 = vsel %vm1161, %v926, -inf
      %v1324 = vrot.slane %v1323, 4
      %v1325 = vmax.f32 %v1323, %v1324
      %v1326 = vrot.slane %v1325, 2
      %v1327 = vmax.f32 %v1325, %v1326
      %v1328 = vrot.slane %v1327, 1
      %v1329 = vmax.f32 %v1327, %v1328
      %v1330 = vsel %vm1161, %v934, -inf
      %v1331 = vrot.slane %v1330, 4
      %v1332 = vmax.f32 %v1330, %v1331
      %v1333 = vrot.slane %v1332, 2
      %v1334 = vmax.f32 %v1332, %v1333
      %v1335 = vrot.slane %v1334, 1
      %v1336 = vmax.f32 %v1334, %v1335
      %v1337 = vsel %vm1161, %v942, -inf
      %v1338 = vrot.slane %v1337, 4
      %v1339 = vmax.f32 %v1337, %v1338
      %v1340 = vrot.slane %v1339, 2
      %v1341 = vmax.f32 %v1339, %v1340
      %v1342 = vrot.slane %v1341, 1
      %v1343 = vmax.f32 %v1341, %v1342
      %v1344 = vsel %vm1161, %v941, -inf
      %v1345 = vrot.slane %v1344, 4
      %v1346 = vmax.f32 %v1344, %v1345
      %v1347 = vrot.slane %v1346, 2
      %v1348 = vmax.f32 %v1346, %v1347
      %v1349 = vrot.slane %v1348, 1
      %v1350 = vmax.f32 %v1348, %v1349
      %v1351 = vsel %vm1161, %v943, -inf
      %v1352 = vrot.slane %v1351, 4
      %v1353 = vmax.f32 %v1351, %v1352
      %v1354 = vrot.slane %v1353, 2
      %v1355 = vmax.f32 %v1353, %v1354
      %v1356 = vrot.slane %v1355, 1
      %v1357 = vmax.f32 %v1355, %v1356
      %v1358 = vsel %vm1161, %v951, -inf
      %v1359 = vrot.slane %v1358, 4
      %v1360 = vmax.f32 %v1358, %v1359
      %v1361 = vrot.slane %v1360, 2
      %v1362 = vmax.f32 %v1360, %v1361
      %v1363 = vrot.slane %v1362, 1
      %v1364 = vmax.f32 %v1362, %v1363
      %v1365 = vsel %vm1161, %v959, -inf
      %v1366 = vrot.slane %v1365, 4
      %v1367 = vmax.f32 %v1365, %v1366
      %v1368 = vrot.slane %v1367, 2
      %v1369 = vmax.f32 %v1367, %v1368
      %v1370 = vrot.slane %v1369, 1
      %v1371 = vmax.f32 %v1369, %v1370
      %v1372 = vsel %vm1161, %v958, -inf
      %v1373 = vrot.slane %v1372, 4
      %v1374 = vmax.f32 %v1372, %v1373
      %v1375 = vrot.slane %v1374, 2
      %v1376 = vmax.f32 %v1374, %v1375
      %v1377 = vrot.slane %v1376, 1
      %v1378 = vmax.f32 %v1376, %v1377
      %v1379 = vsel %vm1161, %v960, -inf
      %v1380 = vrot.slane %v1379, 4
      %v1381 = vmax.f32 %v1379, %v1380
      %v1382 = vrot.slane %v1381, 2
      %v1383 = vmax.f32 %v1381, %v1382
      %v1384 = vrot.slane %v1383, 1
      %v1385 = vmax.f32 %v1383, %v1384
      %v1386 = vsel %vm1161, %v968, -inf
      %v1387 = vrot.slane %v1386, 4
      %v1388 = vmax.f32 %v1386, %v1387
      %v1389 = vrot.slane %v1388, 2
      %v1390 = vmax.f32 %v1388, %v1389
      %v1391 = vrot.slane %v1390, 1
      %v1392 = vmax.f32 %v1390, %v1391
      %v1393 = vsel %vm1161, %v976, -inf
      %v1394 = vrot.slane %v1393, 4
      %v1395 = vmax.f32 %v1393, %v1394
      %v1396 = vrot.slane %v1395, 2
      %v1397 = vmax.f32 %v1395, %v1396
      %v1398 = vrot.slane %v1397, 1
      %v1399 = vmax.f32 %v1397, %v1398
      %v1400 = vsel %vm1161, %v975, -inf
      %v1401 = vrot.slane %v1400, 4
      %v1402 = vmax.f32 %v1400, %v1401
      %v1403 = vrot.slane %v1402, 2
      %v1404 = vmax.f32 %v1402, %v1403
      %v1405 = vrot.slane %v1404, 1
      %v1406 = vmax.f32 %v1404, %v1405
      %v1407 = vsel %vm1161, %v977, -inf
      %v1408 = vrot.slane %v1407, 4
      %v1409 = vmax.f32 %v1407, %v1408
      %v1410 = vrot.slane %v1409, 2
      %v1411 = vmax.f32 %v1409, %v1410
      %v1412 = vrot.slane %v1411, 1
      %v1413 = vmax.f32 %v1411, %v1412
      %v1414 = vsel %vm1161, %v985, -inf
      %v1415 = vrot.slane %v1414, 4
      %v1416 = vmax.f32 %v1414, %v1415
      %v1417 = vrot.slane %v1416, 2
      %v1418 = vmax.f32 %v1416, %v1417
      %v1419 = vrot.slane %v1418, 1
      %v1420 = vmax.f32 %v1418, %v1419
      %v1421 = vsel %vm1161, %v993, -inf
      %v1422 = vrot.slane %v1421, 4
      %v1423 = vmax.f32 %v1421, %v1422
      %v1424 = vrot.slane %v1423, 2
      %v1425 = vmax.f32 %v1423, %v1424
      %v1426 = vrot.slane %v1425, 1
      %v1427 = vmax.f32 %v1425, %v1426
      %v1428 = vsel %vm1161, %v992, -inf
      %v1429 = vrot.slane %v1428, 4
      %v1430 = vmax.f32 %v1428, %v1429
      %v1431 = vrot.slane %v1430, 2
      %v1432 = vmax.f32 %v1430, %v1431
      %v1433 = vrot.slane %v1432, 1
      %v1434 = vmax.f32 %v1432, %v1433
      %v1435 = vsel %vm1161, %v994, -inf
      %v1436 = vrot.slane %v1435, 4
      %v1437 = vmax.f32 %v1435, %v1436
      %v1438 = vrot.slane %v1437, 2
      %v1439 = vmax.f32 %v1437, %v1438
      %v1440 = vrot.slane %v1439, 1
      %v1441 = vmax.f32 %v1439, %v1440
      %v1442 = vsel %vm1161, %v1002, -inf
      %v1443 = vrot.slane %v1442, 4
      %v1444 = vmax.f32 %v1442, %v1443
      %v1445 = vrot.slane %v1444, 2
      %v1446 = vmax.f32 %v1444, %v1445
      %v1447 = vrot.slane %v1446, 1
      %v1448 = vmax.f32 %v1446, %v1447
      %v1449 = vsel %vm1161, %v1010, -inf
      %v1450 = vrot.slane %v1449, 4
      %v1451 = vmax.f32 %v1449, %v1450
      %v1452 = vrot.slane %v1451, 2
      %v1453 = vmax.f32 %v1451, %v1452
      %v1454 = vrot.slane %v1453, 1
      %v1455 = vmax.f32 %v1453, %v1454
      %v1456 = vsel %vm1161, %v1009, -inf
      %v1457 = vrot.slane %v1456, 4
      %v1458 = vmax.f32 %v1456, %v1457
      %v1459 = vrot.slane %v1458, 2
      %v1460 = vmax.f32 %v1458, %v1459
      %v1461 = vrot.slane %v1460, 1
      %v1462 = vmax.f32 %v1460, %v1461
      %v1463 = vsel %vm1161, %v1011, -inf
      %v1464 = vrot.slane %v1463, 4
      %v1465 = vmax.f32 %v1463, %v1464
      %v1466 = vrot.slane %v1465, 2
      %v1467 = vmax.f32 %v1465, %v1466
      %v1468 = vrot.slane %v1467, 1
      %v1469 = vmax.f32 %v1467, %v1468
      %v1470 = vsel %vm1161, %v1019, -inf
      %v1471 = vrot.slane %v1470, 4
      %v1472 = vmax.f32 %v1470, %v1471
      %v1473 = vrot.slane %v1472, 2
      %v1474 = vmax.f32 %v1472, %v1473
      %v1475 = vrot.slane %v1474, 1
      %v1476 = vmax.f32 %v1474, %v1475
      %v1477 = vsel %vm1161, %v1027, -inf
      %v1478 = vrot.slane %v1477, 4
      %v1479 = vmax.f32 %v1477, %v1478
      %v1480 = vrot.slane %v1479, 2
      %v1481 = vmax.f32 %v1479, %v1480
      %v1482 = vrot.slane %v1481, 1
      %v1483 = vmax.f32 %v1481, %v1482
      %v1484 = vsel %vm1161, %v1026, -inf
      %v1485 = vrot.slane %v1484, 4
      %v1486 = vmax.f32 %v1484, %v1485
      %v1487 = vrot.slane %v1486, 2
      %v1488 = vmax.f32 %v1486, %v1487
      %v1489 = vrot.slane %v1488, 1
      %v1490 = vmax.f32 %v1488, %v1489
      %v1491 = vsel %vm1161, %v1028, -inf
      %v1492 = vrot.slane %v1491, 4
      %v1493 = vmax.f32 %v1491, %v1492
      %v1494 = vrot.slane %v1493, 2
      %v1495 = vmax.f32 %v1493, %v1494
      %v1496 = vrot.slane %v1495, 1
      %v1497 = vmax.f32 %v1495, %v1496
      %v1498 = vsel %vm1161, %v1036, -inf
      %v1499 = vrot.slane %v1498, 4
      %v1500 = vmax.f32 %v1498, %v1499
      %v1501 = vrot.slane %v1500, 2
      %v1502 = vmax.f32 %v1500, %v1501
      %v1503 = vrot.slane %v1502, 1
      %v1504 = vmax.f32 %v1502, %v1503
      %v1505 = vsel %vm1161, %v1044, -inf
      %v1506 = vrot.slane %v1505, 4
      %v1507 = vmax.f32 %v1505, %v1506
      %v1508 = vrot.slane %v1507, 2
      %v1509 = vmax.f32 %v1507, %v1508
      %v1510 = vrot.slane %v1509, 1
      %v1511 = vmax.f32 %v1509, %v1510
      %v1512 = vsel %vm1161, %v1043, -inf
      %v1513 = vrot.slane %v1512, 4
      %v1514 = vmax.f32 %v1512, %v1513
      %v1515 = vrot.slane %v1514, 2
      %v1516 = vmax.f32 %v1514, %v1515
      %v1517 = vrot.slane %v1516, 1
      %v1518 = vmax.f32 %v1516, %v1517
      %v1519 = vsel %vm1161, %v1045, -inf
      %v1520 = vrot.slane %v1519, 4
      %v1521 = vmax.f32 %v1519, %v1520
      %v1522 = vrot.slane %v1521, 2
      %v1523 = vmax.f32 %v1521, %v1522
      %v1524 = vrot.slane %v1523, 1
      %v1525 = vmax.f32 %v1523, %v1524
      %v1526 = vsel %vm1161, %v1053, -inf
      %v1527 = vrot.slane %v1526, 4
      %v1528 = vmax.f32 %v1526, %v1527
      %v1529 = vrot.slane %v1528, 2
      %v1530 = vmax.f32 %v1528, %v1529
      %v1531 = vrot.slane %v1530, 1
      %v1532 = vmax.f32 %v1530, %v1531
      %v1533 = vsel %vm1161, %v1061, -inf
      %v1534 = vrot.slane %v1533, 4
      %v1535 = vmax.f32 %v1533, %v1534
      %v1536 = vrot.slane %v1535, 2
      %v1537 = vmax.f32 %v1535, %v1536
      %v1538 = vrot.slane %v1537, 1
      %v1539 = vmax.f32 %v1537, %v1538
      %v1540 = vsel %vm1161, %v1060, -inf
      %v1541 = vrot.slane %v1540, 4
      %v1542 = vmax.f32 %v1540, %v1541
      %v1543 = vrot.slane %v1542, 2
      %v1544 = vmax.f32 %v1542, %v1543
      %v1545 = vrot.slane %v1544, 1
      %v1546 = vmax.f32 %v1544, %v1545
      %v1547 = vsel %vm1161, %v1062, -inf
      %v1548 = vrot.slane %v1547, 4
      %v1549 = vmax.f32 %v1547, %v1548
      %v1550 = vrot.slane %v1549, 2
      %v1551 = vmax.f32 %v1549, %v1550
      %v1552 = vrot.slane %v1551, 1
      %v1553 = vmax.f32 %v1551, %v1552
      %v1554 = vsel %vm1161, %v1070, -inf
      %v1555 = vrot.slane %v1554, 4
      %v1556 = vmax.f32 %v1554, %v1555
      %v1557 = vrot.slane %v1556, 2
      %v1558 = vmax.f32 %v1556, %v1557
      %v1559 = vrot.slane %v1558, 1
      %v1560 = vmax.f32 %v1558, %v1559
      %v1561 = vsel %vm1161, %v1078, -inf
      %v1562 = vrot.slane %v1561, 4
      %v1563 = vmax.f32 %v1561, %v1562
      %v1564 = vrot.slane %v1563, 2
      %v1565 = vmax.f32 %v1563, %v1564
      %v1566 = vrot.slane %v1565, 1
      %v1567 = vmax.f32 %v1565, %v1566
      %v1568 = vsel %vm1161, %v1077, -inf
      %v1569 = vrot.slane %v1568, 4
      %v1570 = vmax.f32 %v1568, %v1569
      %v1571 = vrot.slane %v1570, 2
      %v1572 = vmax.f32 %v1570, %v1571
      %v1573 = vrot.slane %v1572, 1
      %v1574 = vmax.f32 %v1572, %v1573
      %v1575 = vsel %vm1161, %v1079, -inf
      %v1576 = vrot.slane %v1575, 4
      %v1577 = vmax.f32 %v1575, %v1576
      %v1578 = vrot.slane %v1577, 2
      %v1579 = vmax.f32 %v1577, %v1578
      %v1580 = vrot.slane %v1579, 1
      %v1581 = vmax.f32 %v1579, %v1580
      %v1582 = vsel %vm1161, %v1087, -inf
      %v1583 = vrot.slane %v1582, 4
      %v1584 = vmax.f32 %v1582, %v1583
      %v1585 = vrot.slane %v1584, 2
      %v1586 = vmax.f32 %v1584, %v1585
      %v1587 = vrot.slane %v1586, 1
      %v1588 = vmax.f32 %v1586, %v1587
      %v1589 = vsel %vm1161, %v1095, -inf
      %v1590 = vrot.slane %v1589, 4
      %v1591 = vmax.f32 %v1589, %v1590
      %v1592 = vrot.slane %v1591, 2
      %v1593 = vmax.f32 %v1591, %v1592
      %v1594 = vrot.slane %v1593, 1
      %v1595 = vmax.f32 %v1593, %v1594
      %v1596 = vsel %vm1161, %v1094, -inf
      %v1597 = vrot.slane %v1596, 4
      %v1598 = vmax.f32 %v1596, %v1597
      %v1599 = vrot.slane %v1598, 2
      %v1600 = vmax.f32 %v1598, %v1599
      %v1601 = vrot.slane %v1600, 1
      %v1602 = vmax.f32 %v1600, %v1601
      %v1603 = vsel %vm1161, %v1096, -inf
      %v1604 = vrot.slane %v1603, 4
      %v1605 = vmax.f32 %v1603, %v1604
      %v1606 = vrot.slane %v1605, 2
      %v1607 = vmax.f32 %v1605, %v1606
      %v1608 = vrot.slane %v1607, 1
      %v1609 = vmax.f32 %v1607, %v1608
      %1610 = vst [vmem:[#allocation3] sm:$0x1] 0.0
      %1611 = vst [vmem:[#allocation3 + $0x10] sm:$0x1] 0.0
      %1612 = vst [vmem:[#allocation3 + $0x20] sm:$0x1] 0.0
      %1613 = vst [vmem:[#allocation3 + $0x30] sm:$0x1] 0.0
      %1614 = vst [vmem:[#allocation3 + $0x40] sm:$0x1] 0.0
      %1615 = vst [vmem:[#allocation3 + $0x50] sm:$0x1] 0.0
      %1616 = vst [vmem:[#allocation3 + $0x60] sm:$0x1] 0.0
      %1617 = vst [vmem:[#allocation3 + $0x70] sm:$0x1] 0.0
      %1618 = vst [vmem:[#allocation3 + $0x9] sm:$0x1] 0.0
      %1619 = vst [vmem:[#allocation3 + $0x19] sm:$0x1] 0.0
      %1620 = vst [vmem:[#allocation3 + $0x29] sm:$0x1] 0.0
      %1621 = vst [vmem:[#allocation3 + $0x39] sm:$0x1] 0.0
      %1622 = vst [vmem:[#allocation3 + $0x49] sm:$0x1] 0.0
      %1623 = vst [vmem:[#allocation3 + $0x59] sm:$0x1] 0.0
      %1624 = vst [vmem:[#allocation3 + $0x69] sm:$0x1] 0.0
      %1625 = vst [vmem:[#allocation3 + $0x79] sm:$0x1] 0.0
      %vm1690 = vcmask 1041409
      %v1691 = vsel %vm1690, %v1175, %v1168
      %vm1692 = vcmask 1042434
      %v1693 = vsel %vm1692, %v1182, %v1691
      %vm1694 = vcmask 1043459
      %v1695 = vsel %vm1694, %v1189, %v1693
      %vm1696 = vcmask 1044484
      %v1697 = vsel %vm1696, %v1196, %v1695
      %vm1698 = vcmask 1045509
      %v1699 = vsel %vm1698, %v1203, %v1697
      %vm1700 = vcmask 1046534
      %v1701 = vsel %vm1700, %v1210, %v1699
      %vm1702 = vcmask 1047559
      %v1703 = vsel %vm1702, %v1217, %v1701
      %v1704 = vsel %vm1690, %v1231, %v1224
      %v1705 = vsel %vm1692, %v1238, %v1704
      %v1706 = vsel %vm1694, %v1245, %v1705
      %v1707 = vsel %vm1696, %v1252, %v1706
      %v1708 = vsel %vm1698, %v1259, %v1707
      %v1709 = vsel %vm1700, %v1266, %v1708
      %v1710 = vsel %vm1702, %v1273, %v1709
      %v1711 = vsel %vm1690, %v1287, %v1280
      %v1712 = vsel %vm1692, %v1294, %v1711
      %v1713 = vsel %vm1694, %v1301, %v1712
      %v1714 = vsel %vm1696, %v1308, %v1713
      %v1715 = vsel %vm1698, %v1315, %v1714
      %v1716 = vsel %vm1700, %v1322, %v1715
      %v1717 = vsel %vm1702, %v1329, %v1716
      %v1718 = vsel %vm1690, %v1343, %v1336
      %v1719 = vsel %vm1692, %v1350, %v1718
      %v1720 = vsel %vm1694, %v1357, %v1719
      %v1721 = vsel %vm1696, %v1364, %v1720
      %v1722 = vsel %vm1698, %v1371, %v1721
      %v1723 = vsel %vm1700, %v1378, %v1722
      %v1724 = vsel %vm1702, %v1385, %v1723
      %v1725 = vsel %vm1690, %v1399, %v1392
      %v1726 = vsel %vm1692, %v1406, %v1725
      %v1727 = vsel %vm1694, %v1413, %v1726
      %v1728 = vsel %vm1696, %v1420, %v1727
      %v1729 = vsel %vm1698, %v1427, %v1728
      %v1730 = vsel %vm1700, %v1434, %v1729
      %v1731 = vsel %vm1702, %v1441, %v1730
      %v1732 = vsel %vm1690, %v1455, %v1448
      %v1733 = vsel %vm1692, %v1462, %v1732
      %v1734 = vsel %vm1694, %v1469, %v1733
      %v1735 = vsel %vm1696, %v1476, %v1734
      %v1736 = vsel %vm1698, %v1483, %v1735
      %v1737 = vsel %vm1700, %v1490, %v1736
      %v1738 = vsel %vm1702, %v1497, %v1737
      %v1739 = vsel %vm1690, %v1511, %v1504
      %v1740 = vsel %vm1692, %v1518, %v1739
      %v1741 = vsel %vm1694, %v1525, %v1740
      %v1742 = vsel %vm1696, %v1532, %v1741
      %v1743 = vsel %vm1698, %v1539, %v1742
      %v1744 = vsel %vm1700, %v1546, %v1743
      %v1745 = vsel %vm1702, %v1553, %v1744
      %v1746 = vsel %vm1690, %v1567, %v1560
      %v1747 = vsel %vm1692, %v1574, %v1746
      %v1748 = vsel %vm1694, %v1581, %v1747
      %v1749 = vsel %vm1696, %v1588, %v1748
      %v1750 = vsel %vm1698, %v1595, %v1749
      %v1751 = vsel %vm1700, %v1602, %v1750
      %v1752 = vsel %vm1702, %v1609, %v1751
      %1761 = vst [vmem:[#allocation3 + $0x1] sm:$0xff] %v1703
      %1762 = vst [vmem:[#allocation3 + $0x11] sm:$0xff] %v1710
      %1763 = vst [vmem:[#allocation3 + $0x21] sm:$0xff] %v1717
      %1764 = vst [vmem:[#allocation3 + $0x31] sm:$0xff] %v1724
      %1765 = vst [vmem:[#allocation3 + $0x41] sm:$0xff] %v1731
      %1766 = vst [vmem:[#allocation3 + $0x51] sm:$0xff] %v1738
      %1767 = vst [vmem:[#allocation3 + $0x61] sm:$0xff] %v1745
      %1768 = vst [vmem:[#allocation3 + $0x71] sm:$0xff] %v1752
      %v1769 = vld [vmem:[#allocation3] sm:$0xff]
      %v1770 = vld [vmem:[#allocation3 + $0x10] sm:$0xff]
      %v1771 = vld [vmem:[#allocation3 + $0x20] sm:$0xff]
      %v1772 = vld [vmem:[#allocation3 + $0x30] sm:$0xff]
      %v1773 = vld [vmem:[#allocation3 + $0x40] sm:$0xff]
      %v1774 = vld [vmem:[#allocation3 + $0x50] sm:$0xff]
      %v1775 = vld [vmem:[#allocation3 + $0x60] sm:$0xff]
      %v1776 = vld [vmem:[#allocation3 + $0x70] sm:$0xff]
      %v1777 = vld [vmem:[#allocation3 + $0x1] sm:$0xff]
      %v1778 = vld [vmem:[#allocation3 + $0x11] sm:$0xff]
      %v1779 = vld [vmem:[#allocation3 + $0x21] sm:$0xff]
      %v1780 = vld [vmem:[#allocation3 + $0x31] sm:$0xff]
      %v1781 = vld [vmem:[#allocation3 + $0x41] sm:$0xff]
      %v1782 = vld [vmem:[#allocation3 + $0x51] sm:$0xff]
      %v1783 = vld [vmem:[#allocation3 + $0x61] sm:$0xff]
      %v1784 = vld [vmem:[#allocation3 + $0x71] sm:$0xff]
      %v1785 = vld [vmem:[#allocation3 + $0x2] sm:$0xff]
      %v1786 = vld [vmem:[#allocation3 + $0x12] sm:$0xff]
      %v1787 = vld [vmem:[#allocation3 + $0x22] sm:$0xff]
      %v1788 = vld [vmem:[#allocation3 + $0x32] sm:$0xff]
      %v1789 = vld [vmem:[#allocation3 + $0x42] sm:$0xff]
      %v1790 = vld [vmem:[#allocation3 + $0x52] sm:$0xff]
      %v1791 = vld [vmem:[#allocation3 + $0x62] sm:$0xff]
      %v1792 = vld [vmem:[#allocation3 + $0x72] sm:$0xff]
      %v1793 = vpack.c.bf16 %v1770, %v1769
      %v1794 = vpack.c.bf16 %v1778, %v1777
      %v1795 = vpack.c.bf16 %v1786, %v1785
      %v1796 = vpack.c.bf16 %v1772, %v1771
      %v1797 = vpack.c.bf16 %v1780, %v1779
      %v1798 = vpack.c.bf16 %v1788, %v1787
      %v1799 = vpack.c.bf16 %v1774, %v1773
      %v1800 = vpack.c.bf16 %v1782, %v1781
      %v1801 = vpack.c.bf16 %v1790, %v1789
      %v1802 = vpack.c.bf16 %v1776, %v1775
      %v1803 = vpack.c.bf16 %v1784, %v1783
      %v1804 = vpack.c.bf16 %v1792, %v1791
      %v1805 = vld [vmem:[%s3] sm:$0xf]
      %v1806 = vld [vmem:[%s3 + $0x4] sm:$0xf]
      %v1807 = vld [vmem:[%s3 + $0x8] sm:$0xf]
      %v1808 = vld [vmem:[%s3 + $0xc] sm:$0xf]
      %v1809 = vld [vmem:[%s3 + $0x10] sm:$0xf]
      %v1810 = vld [vmem:[%s3 + $0x14] sm:$0xf]
      %v1811 = vld [vmem:[%s3 + $0x18] sm:$0xf]
      %v1812 = vld [vmem:[%s3 + $0x1c] sm:$0xf]
      %v1813 = vld [vmem:[%s3 + $0x20] sm:$0xf]
      %v1814 = vld [vmem:[%s3 + $0x24] sm:$0xf]
      %v1815 = vld [vmem:[%s3 + $0x28] sm:$0xf]
      %v1816 = vld [vmem:[%s3 + $0x2c] sm:$0xf]
      %v1817 = vld [vmem:[%s3 + $0x30] sm:$0xf]
      %v1818 = vld [vmem:[%s3 + $0x34] sm:$0xf]
      %v1819 = vld [vmem:[%s3 + $0x38] sm:$0xf]
      %v1820 = vld [vmem:[%s3 + $0x3c] sm:$0xf]
      %v1821 = vld [vmem:[%s3 + $0x40] sm:$0xf]
      %v1822 = vld [vmem:[%s3 + $0x44] sm:$0xf]
      %v1823 = vld [vmem:[%s3 + $0x48] sm:$0xf]
      %v1824 = vld [vmem:[%s3 + $0x4c] sm:$0xf]
      %v1825 = vld [vmem:[%s3 + $0x50] sm:$0xf]
      %v1826 = vld [vmem:[%s3 + $0x54] sm:$0xf]
      %v1827 = vld [vmem:[%s3 + $0x58] sm:$0xf]
      %v1828 = vld [vmem:[%s3 + $0x5c] sm:$0xf]
      %v1829 = vld [vmem:[%s3 + $0x60] sm:$0xf]
      %v1830 = vld [vmem:[%s3 + $0x64] sm:$0xf]
      %v1831 = vld [vmem:[%s3 + $0x68] sm:$0xf]
      %v1832 = vld [vmem:[%s3 + $0x6c] sm:$0xf]
      %v1833 = vld [vmem:[%s3 + $0x70] sm:$0xf]
      %v1834 = vld [vmem:[%s3 + $0x74] sm:$0xf]
      %v1835 = vld [vmem:[%s3 + $0x78] sm:$0xf]
      %v1836 = vld [vmem:[%s3 + $0x7c] sm:$0xf]
      %v1837 = vld [vmem:[%s3 + $0x80] sm:$0xf]
      %v1838 = vld [vmem:[%s3 + $0x84] sm:$0xf]
      %v1839 = vld [vmem:[%s3 + $0x88] sm:$0xf]
      %v1840 = vld [vmem:[%s3 + $0x8c] sm:$0xf]
      %v1841 = vld [vmem:[%s3 + $0x90] sm:$0xf]
      %v1842 = vld [vmem:[%s3 + $0x94] sm:$0xf]
      %v1843 = vld [vmem:[%s3 + $0x98] sm:$0xf]
      %v1844 = vld [vmem:[%s3 + $0x9c] sm:$0xf]
      %v1845 = vld [vmem:[%s3 + $0xa0] sm:$0xf]
      %v1846 = vld [vmem:[%s3 + $0xa4] sm:$0xf]
      %v1847 = vld [vmem:[%s3 + $0xa8] sm:$0xf]
      %v1848 = vld [vmem:[%s3 + $0xac] sm:$0xf]
      %v1849 = vld [vmem:[%s3 + $0xb0] sm:$0xf]
      %v1850 = vld [vmem:[%s3 + $0xb4] sm:$0xf]
      %v1851 = vld [vmem:[%s3 + $0xb8] sm:$0xf]
      %v1852 = vld [vmem:[%s3 + $0xbc] sm:$0xf]
      %v1853 = vld [vmem:[%s4] sm:$0x1]
      %v1855 = vlaneseq
      %v1856 = vshrl.u32 %v1855, 7
      %v1857 = vsub.s32 0, %v1856
      %v1858 = vrot.slane %v1853, %v1857
      %v1908 = vunpack.c.l.b16 %v1805
      %v1909 = vunpack.c.l.b16 %v1806
      %v1910 = vunpack.c.l.b16 %v1807
      %v1911 = vunpack.c.l.b16 %v1808
      %v1912 = vunpack.c.l.b16 %v1809
      %v1913 = vunpack.c.l.b16 %v1810
      %v1914 = vunpack.c.l.b16 %v1811
      %v1915 = vunpack.c.l.b16 %v1812
      %v1916 = vunpack.c.l.b16 %v1813
      %v1917 = vunpack.c.l.b16 %v1814
      %v1918 = vunpack.c.l.b16 %v1815
      %v1919 = vunpack.c.l.b16 %v1816
      %v1920 = vunpack.c.l.b16 %v1817
      %v1921 = vunpack.c.l.b16 %v1818
      %v1922 = vunpack.c.l.b16 %v1819
      %v1923 = vunpack.c.l.b16 %v1820
      %v1924 = vunpack.c.l.b16 %v1821
      %v1925 = vunpack.c.l.b16 %v1822
      %v1926 = vunpack.c.l.b16 %v1823
      %v1927 = vunpack.c.l.b16 %v1824
      %v1928 = vunpack.c.l.b16 %v1825
      %v1929 = vunpack.c.l.b16 %v1826
      %v1930 = vunpack.c.l.b16 %v1827
      %v1931 = vunpack.c.l.b16 %v1828
      %v1932 = vunpack.c.l.b16 %v1829
      %v1933 = vunpack.c.l.b16 %v1830
      %v1934 = vunpack.c.l.b16 %v1831
      %v1935 = vunpack.c.l.b16 %v1832
      %v1936 = vunpack.c.l.b16 %v1833
      %v1937 = vunpack.c.l.b16 %v1834
      %v1938 = vunpack.c.l.b16 %v1835
      %v1939 = vunpack.c.l.b16 %v1836
      %v1940 = vunpack.c.l.b16 %v1837
      %v1941 = vunpack.c.l.b16 %v1838
      %v1942 = vunpack.c.l.b16 %v1839
      %v1943 = vunpack.c.l.b16 %v1840
      %v1944 = vunpack.c.l.b16 %v1841
      %v1945 = vunpack.c.l.b16 %v1842
      %v1946 = vunpack.c.l.b16 %v1843
      %v1947 = vunpack.c.l.b16 %v1844
      %v1948 = vunpack.c.l.b16 %v1845
      %v1949 = vunpack.c.l.b16 %v1846
      %v1950 = vunpack.c.l.b16 %v1847
      %v1951 = vunpack.c.l.b16 %v1848
      %v1952 = vunpack.c.l.b16 %v1849
      %v1953 = vunpack.c.l.b16 %v1850
      %v1954 = vunpack.c.l.b16 %v1851
      %v1955 = vunpack.c.l.b16 %v1852
      %v1956 = vpack.c.b16 %v1909, %v1908
      %v1957 = vpack.c.b16 %v1911, %v1910
      %v1958 = vpack.c.b16 %v1913, %v1912
      %v1959 = vpack.c.b16 %v1915, %v1914
      %v1960 = vpack.c.b16 %v1917, %v1916
      %v1961 = vpack.c.b16 %v1919, %v1918
      %v1962 = vpack.c.b16 %v1921, %v1920
      %v1963 = vpack.c.b16 %v1923, %v1922
      %v1964 = vpack.c.b16 %v1925, %v1924
      %v1965 = vpack.c.b16 %v1927, %v1926
      %v1966 = vpack.c.b16 %v1929, %v1928
      %v1967 = vpack.c.b16 %v1931, %v1930
      %v1968 = vpack.c.b16 %v1933, %v1932
      %v1969 = vpack.c.b16 %v1935, %v1934
      %v1970 = vpack.c.b16 %v1937, %v1936
      %v1971 = vpack.c.b16 %v1939, %v1938
      %v1972 = vpack.c.b16 %v1941, %v1940
      %v1973 = vpack.c.b16 %v1943, %v1942
      %v1974 = vpack.c.b16 %v1945, %v1944
      %v1975 = vpack.c.b16 %v1947, %v1946
      %v1976 = vpack.c.b16 %v1949, %v1948
      %v1977 = vpack.c.b16 %v1951, %v1950
      %v1978 = vpack.c.b16 %v1953, %v1952
      %v1979 = vpack.c.b16 %v1955, %v1954
      %2004 = vmatprep.subr.bf16.mxu0 0
      %2005 = vmatpush1.bf16.msra.mxu0 %v1963
      %2006 = vmatprep.subr.bf16.mxu0 0
      %2007 = vmatpush1.bf16.msra.mxu0 %v1962
      %2008 = vmatprep.subr.bf16.mxu0 0
      %2009 = vmatpush1.bf16.msra.mxu0 %v1961
      %2010 = vmatprep.subr.bf16.mxu0 0
      %2011 = vmatpush1.bf16.msra.mxu0 %v1960
      %2012 = vmatprep.subr.bf16.mxu0 0
      %2013 = vmatpush1.bf16.msra.mxu0 %v1959
      %2014 = vmatprep.subr.bf16.mxu0 0
      %2015 = vmatpush1.bf16.msra.mxu0 %v1958
      %2016 = vmatprep.subr.bf16.mxu0 0
      %2017 = vmatpush1.bf16.msra.mxu0 %v1957
      %2018 = vmatprep.subr.bf16.mxu0 0
      %2019 = vmatpush1.bf16.msra.mxu0 %v1956
      %2020 = vmatprep.subr.bf16.mxu0 0
      %2021 = vmatpush2.bf16.msra.mxu0 %v1971
      %2022 = vmatprep.subr.bf16.mxu0 0
      %2023 = vmatpush2.bf16.msra.mxu0 %v1970
      %2024 = vmatprep.subr.bf16.mxu0 0
      %2025 = vmatpush2.bf16.msra.mxu0 %v1969
      %2026 = vmatprep.subr.bf16.mxu0 0
      %2027 = vmatpush2.bf16.msra.mxu0 %v1968
      %2028 = vmatprep.subr.bf16.mxu0 0
      %2029 = vmatpush2.bf16.msra.mxu0 %v1967
      %2030 = vmatprep.subr.bf16.mxu0 0
      %2031 = vmatpush2.bf16.msra.mxu0 %v1966
      %2032 = vmatprep.subr.bf16.mxu0 0
      %2033 = vmatpush2.bf16.msra.mxu0 %v1965
      %2034 = vmatprep.subr.bf16.mxu0 0
      %2035 = vmatpush2.bf16.msra.mxu0 %v1964
      %2036 = vmatprep.mubr.bf16.mxu0 %v1794
      %2037 = vmatmul.mubr.bf16.gmra.mxu0 %v1793
      %v2038 = vpop.f32.mrf.mxu0
      %v2039 = vadd.f32 %v1858, %v2038
      %v2040 = vpop.f32.mrf.mxu0
      %v2041 = vpop.f32.mrf.mxu0
      %v2042 = vadd.f32 %v1858, %v2041
      %v2043 = vpop.f32.mrf.mxu0
      %2044 = vmatprep.mubr.bf16.mxu0 %v1797
      %2045 = vmatmul.mubr.bf16.gmra.mxu0 %v1796
      %v2046 = vpop.f32.mrf.mxu0
      %v2047 = vadd.f32 %v1858, %v2046
      %v2048 = vpop.f32.mrf.mxu0
      %v2049 = vpop.f32.mrf.mxu0
      %v2050 = vadd.f32 %v1858, %v2049
      %v2051 = vpop.f32.mrf.mxu0
      %2052 = vmatprep.mubr.bf16.mxu0 %v1800
      %2053 = vmatmul.mubr.bf16.gmra.mxu0 %v1799
      %v2054 = vpop.f32.mrf.mxu0
      %v2055 = vadd.f32 %v1858, %v2054
      %v2056 = vpop.f32.mrf.mxu0
      %v2057 = vpop.f32.mrf.mxu0
      %v2058 = vadd.f32 %v1858, %v2057
      %v2059 = vpop.f32.mrf.mxu0
      %2060 = vmatprep.mubr.bf16.mxu0 %v1803
      %2061 = vmatmul.mubr.bf16.gmra.mxu0 %v1802
      %v2062 = vpop.f32.mrf.mxu0
      %v2063 = vadd.f32 %v1858, %v2062
      %v2064 = vpop.f32.mrf.mxu0
      %v2065 = vpop.f32.mrf.mxu0
      %v2066 = vadd.f32 %v1858, %v2065
      %v2067 = vpop.f32.mrf.mxu0
      %2068 = vdwg.mxu0
      %2069 = vmatprep.subr.bf16.mxu0 0
      %2070 = vmatpush1.bf16.msra.mxu0 %v1979
      %2071 = vmatprep.subr.bf16.mxu0 0
      %2072 = vmatpush1.bf16.msra.mxu0 %v1978
      %2073 = vmatprep.subr.bf16.mxu0 0
      %2074 = vmatpush1.bf16.msra.mxu0 %v1977
      %2075 = vmatprep.subr.bf16.mxu0 0
      %2076 = vmatpush1.bf16.msra.mxu0 %v1976
      %2077 = vmatprep.subr.bf16.mxu0 0
      %2078 = vmatpush1.bf16.msra.mxu0 %v1975
      %2079 = vmatprep.subr.bf16.mxu0 0
      %2080 = vmatpush1.bf16.msra.mxu0 %v1974
      %2081 = vmatprep.subr.bf16.mxu0 0
      %2082 = vmatpush1.bf16.msra.mxu0 %v1973
      %2083 = vmatprep.subr.bf16.mxu0 0
      %2084 = vmatpush1.bf16.msra.mxu0 %v1972
      %2085 = vmatprep.subr.bf16.mxu0 0
      %2086 = vmatpush2.bf16.msra.mxu0 0
      %2087 = vmatprep.subr.bf16.mxu0 0
      %2088 = vmatpush2.bf16.msra.mxu0 0
      %2089 = vmatprep.subr.bf16.mxu0 0
      %2090 = vmatpush2.bf16.msra.mxu0 0
      %2091 = vmatprep.subr.bf16.mxu0 0
      %2092 = vmatpush2.bf16.msra.mxu0 0
      %2093 = vmatprep.subr.bf16.mxu0 0
      %2094 = vmatpush2.bf16.msra.mxu0 0
      %2095 = vmatprep.subr.bf16.mxu0 0
      %2096 = vmatpush2.bf16.msra.mxu0 0
      %2097 = vmatprep.subr.bf16.mxu0 0
      %2098 = vmatpush2.bf16.msra.mxu0 0
      %2099 = vmatprep.subr.bf16.mxu0 0
      %2100 = vmatpush2.bf16.msra.mxu0 0
      %2101 = vmatprep.mubr.bf16.mxu0 0
      %2102 = vmatmul.mubr.bf16.gmra.mxu0 %v1795
      %v2103 = vpop.f32.mrf.mxu0
      %v2104 = vadd.f32 %v2039, %v2103
      %v2105 = vpop.f32.mrf.mxu0
      %v2106 = vpop.f32.mrf.mxu0
      %v2107 = vadd.f32 %v2042, %v2106
      %v2108 = vpop.f32.mrf.mxu0
      %2109 = vmatprep.mubr.bf16.mxu0 0
      %2110 = vmatmul.mubr.bf16.gmra.mxu0 %v1798
      %v2111 = vpop.f32.mrf.mxu0
      %v2112 = vadd.f32 %v2047, %v2111
      %v2113 = vpop.f32.mrf.mxu0
      %v2114 = vpop.f32.mrf.mxu0
      %v2115 = vadd.f32 %v2050, %v2114
      %v2116 = vpop.f32.mrf.mxu0
      %2117 = vmatprep.mubr.bf16.mxu0 0
      %2118 = vmatmul.mubr.bf16.gmra.mxu0 %v1801
      %v2119 = vpop.f32.mrf.mxu0
      %v2120 = vadd.f32 %v2055, %v2119
      %v2121 = vpop.f32.mrf.mxu0
      %v2122 = vpop.f32.mrf.mxu0
      %v2123 = vadd.f32 %v2058, %v2122
      %v2124 = vpop.f32.mrf.mxu0
      %2125 = vmatprep.mubr.bf16.mxu0 0
      %2126 = vmatmul.mubr.bf16.gmra.mxu0 %v1804
      %v2127 = vpop.f32.mrf.mxu0
      %v2128 = vadd.f32 %v2063, %v2127
      %v2129 = vpop.f32.mrf.mxu0
      %v2130 = vpop.f32.mrf.mxu0
      %v2131 = vadd.f32 %v2066, %v2130
      %v2132 = vpop.f32.mrf.mxu0
      %2133 = vdwg.mxu0
      %v2134 = vmax.f32 %v2104, 0.0
      %v2135 = vmax.f32 %v2107, 0.0
      %v2136 = vmax.f32 %v2112, 0.0
      %v2137 = vmax.f32 %v2115, 0.0
      %v2138 = vmax.f32 %v2120, 0.0
      %v2139 = vmax.f32 %v2123, 0.0
      %v2140 = vmax.f32 %v2128, 0.0
      %v2141 = vmax.f32 %v2131, 0.0
      %2142 = vrot.lane.b32.xlu0 %v2134, 112
      %v2143 = vpop.permute.xlu0 %2142
      %2144 = vrot.lane.b32.xlu0 %v2135, 112
      %v2145 = vpop.permute.xlu0 %2144
      %2146 = vrot.lane.b32.xlu0 %v2136, 112
      %v2147 = vpop.permute.xlu0 %2146
      %2148 = vrot.lane.b32.xlu0 %v2137, 112
      %v2149 = vpop.permute.xlu0 %2148
      %2150 = vrot.lane.b32.xlu0 %v2138, 112
      %v2151 = vpop.permute.xlu0 %2150
      %2152 = vrot.lane.b32.xlu0 %v2139, 112
      %v2153 = vpop.permute.xlu0 %2152
      %2154 = vrot.lane.b32.xlu0 %v2140, 112
      %v2155 = vpop.permute.xlu0 %2154
      %2156 = vrot.lane.b32.xlu0 %v2141, 112
      %v2157 = vpop.permute.xlu0 %2156
      %v2158 = vmax.f32 %v2134, %v2143
      %v2159 = vmax.f32 %v2135, %v2145
      %v2160 = vmax.f32 %v2136, %v2147
      %v2161 = vmax.f32 %v2137, %v2149
      %v2162 = vmax.f32 %v2138, %v2151
      %v2163 = vmax.f32 %v2139, %v2153
      %v2164 = vmax.f32 %v2140, %v2155
      %v2165 = vmax.f32 %v2141, %v2157
      %v2174 = vcombine.high %v2158, %v2158
      %v2176 = vunpack.c.l.s4 1983009808
      %v2177 = vunpack.c.0.s8 %v2176
      %v2178 = vlaneseq
      %v2179 = vshrl.u32 %v2178, 7
      %v2180 = vsub.s32 %v2177, %v2179
      %v2181 = vrot.slane %v2158, %v2180
      %v2183 = vunpack.c.l.s4 1983009808
      %v2184 = vunpack.c.0.s8 %v2183
      %v2185 = vlaneseq
      %v2186 = vshrl.u32 %v2185, 7
      %v2187 = vsub.s32 %v2184, %v2186
      %v2188 = vrot.slane %v2174, %v2187
      %v2189 = vcombine.high %v2181, %v2181
      %v2190 = vcombine.high %v2188, %v2188
      %v2191 = vcombine.high %v2159, %v2159
      %v2193 = vunpack.c.l.s4 1983009808
      %v2194 = vunpack.c.0.s8 %v2193
      %v2195 = vlaneseq
      %v2196 = vshrl.u32 %v2195, 7
      %v2197 = vsub.s32 %v2194, %v2196
      %v2198 = vrot.slane %v2159, %v2197
      %v2200 = vunpack.c.l.s4 1983009808
      %v2201 = vunpack.c.0.s8 %v2200
      %v2202 = vlaneseq
      %v2203 = vshrl.u32 %v2202, 7
      %v2204 = vsub.s32 %v2201, %v2203
      %v2205 = vrot.slane %v2191, %v2204
      %v2206 = vcombine.high %v2198, %v2198
      %v2207 = vcombine.high %v2205, %v2205
      %v2208 = vcombine.high %v2160, %v2160
      %v2210 = vunpack.c.l.s4 1983009808
      %v2211 = vunpack.c.0.s8 %v2210
      %v2212 = vlaneseq
      %v2213 = vshrl.u32 %v2212, 7
      %v2214 = vsub.s32 %v2211, %v2213
      %v2215 = vrot.slane %v2160, %v2214
      %v2217 = vunpack.c.l.s4 1983009808
      %v2218 = vunpack.c.0.s8 %v2217
      %v2219 = vlaneseq
      %v2220 = vshrl.u32 %v2219, 7
      %v2221 = vsub.s32 %v2218, %v2220
      %v2222 = vrot.slane %v2208, %v2221
      %v2223 = vcombine.high %v2215, %v2215
      %v2224 = vcombine.high %v2222, %v2222
      %v2225 = vcombine.high %v2161, %v2161
      %v2227 = vunpack.c.l.s4 1983009808
      %v2228 = vunpack.c.0.s8 %v2227
      %v2229 = vlaneseq
      %v2230 = vshrl.u32 %v2229, 7
      %v2231 = vsub.s32 %v2228, %v2230
      %v2232 = vrot.slane %v2161, %v2231
      %v2234 = vunpack.c.l.s4 1983009808
      %v2235 = vunpack.c.0.s8 %v2234
      %v2236 = vlaneseq
      %v2237 = vshrl.u32 %v2236, 7
      %v2238 = vsub.s32 %v2235, %v2237
      %v2239 = vrot.slane %v2225, %v2238
      %v2240 = vcombine.high %v2232, %v2232
      %v2241 = vcombine.high %v2239, %v2239
      %v2242 = vcombine.high %v2162, %v2162
      %v2244 = vunpack.c.l.s4 1983009808
      %v2245 = vunpack.c.0.s8 %v2244
      %v2246 = vlaneseq
      %v2247 = vshrl.u32 %v2246, 7
      %v2248 = vsub.s32 %v2245, %v2247
      %v2249 = vrot.slane %v2162, %v2248
      %v2251 = vunpack.c.l.s4 1983009808
      %v2252 = vunpack.c.0.s8 %v2251
      %v2253 = vlaneseq
      %v2254 = vshrl.u32 %v2253, 7
      %v2255 = vsub.s32 %v2252, %v2254
      %v2256 = vrot.slane %v2242, %v2255
      %v2257 = vcombine.high %v2249, %v2249
      %v2258 = vcombine.high %v2256, %v2256
      %v2259 = vcombine.high %v2163, %v2163
      %v2261 = vunpack.c.l.s4 1983009808
      %v2262 = vunpack.c.0.s8 %v2261
      %v2263 = vlaneseq
      %v2264 = vshrl.u32 %v2263, 7
      %v2265 = vsub.s32 %v2262, %v2264
      %v2266 = vrot.slane %v2163, %v2265
      %v2268 = vunpack.c.l.s4 1983009808
      %v2269 = vunpack.c.0.s8 %v2268
      %v2270 = vlaneseq
      %v2271 = vshrl.u32 %v2270, 7
      %v2272 = vsub.s32 %v2269, %v2271
      %v2273 = vrot.slane %v2259, %v2272
      %v2274 = vcombine.high %v2266, %v2266
      %v2275 = vcombine.high %v2273, %v2273
      %v2276 = vcombine.high %v2164, %v2164
      %v2278 = vunpack.c.l.s4 1983009808
      %v2279 = vunpack.c.0.s8 %v2278
      %v2280 = vlaneseq
      %v2281 = vshrl.u32 %v2280, 7
      %v2282 = vsub.s32 %v2279, %v2281
      %v2283 = vrot.slane %v2164, %v2282
      %v2285 = vunpack.c.l.s4 1983009808
      %v2286 = vunpack.c.0.s8 %v2285
      %v2287 = vlaneseq
      %v2288 = vshrl.u32 %v2287, 7
      %v2289 = vsub.s32 %v2286, %v2288
      %v2290 = vrot.slane %v2276, %v2289
      %v2291 = vcombine.high %v2283, %v2283
      %v2292 = vcombine.high %v2290, %v2290
      %v2293 = vcombine.high %v2165, %v2165
      %v2295 = vunpack.c.l.s4 1983009808
      %v2296 = vunpack.c.0.s8 %v2295
      %v2297 = vlaneseq
      %v2298 = vshrl.u32 %v2297, 7
      %v2299 = vsub.s32 %v2296, %v2298
      %v2300 = vrot.slane %v2165, %v2299
      %v2302 = vunpack.c.l.s4 1983009808
      %v2303 = vunpack.c.0.s8 %v2302
      %v2304 = vlaneseq
      %v2305 = vshrl.u32 %v2304, 7
      %v2306 = vsub.s32 %v2303, %v2305
      %v2307 = vrot.slane %v2293, %v2306
      %v2308 = vcombine.high %v2300, %v2300
      %v2309 = vcombine.high %v2307, %v2307
      %v2342 = vsel %vm1161, %v2181, -inf
      %v2343 = vrot.slane %v2342, 4
      %v2344 = vmax.f32 %v2342, %v2343
      %v2345 = vrot.slane %v2344, 2
      %v2346 = vmax.f32 %v2344, %v2345
      %v2347 = vrot.slane %v2346, 1
      %v2348 = vmax.f32 %v2346, %v2347
      %v2349 = vsel %vm1161, %v2189, -inf
      %v2350 = vrot.slane %v2349, 4
      %v2351 = vmax.f32 %v2349, %v2350
      %v2352 = vrot.slane %v2351, 2
      %v2353 = vmax.f32 %v2351, %v2352
      %v2354 = vrot.slane %v2353, 1
      %v2355 = vmax.f32 %v2353, %v2354
      %v2356 = vsel %vm1161, %v2188, -inf
      %v2357 = vrot.slane %v2356, 4
      %v2358 = vmax.f32 %v2356, %v2357
      %v2359 = vrot.slane %v2358, 2
      %v2360 = vmax.f32 %v2358, %v2359
      %v2361 = vrot.slane %v2360, 1
      %v2362 = vmax.f32 %v2360, %v2361
      %v2363 = vsel %vm1161, %v2190, -inf
      %v2364 = vrot.slane %v2363, 4
      %v2365 = vmax.f32 %v2363, %v2364
      %v2366 = vrot.slane %v2365, 2
      %v2367 = vmax.f32 %v2365, %v2366
      %v2368 = vrot.slane %v2367, 1
      %v2369 = vmax.f32 %v2367, %v2368
      %v2370 = vsel %vm1161, %v2198, -inf
      %v2371 = vrot.slane %v2370, 4
      %v2372 = vmax.f32 %v2370, %v2371
      %v2373 = vrot.slane %v2372, 2
      %v2374 = vmax.f32 %v2372, %v2373
      %v2375 = vrot.slane %v2374, 1
      %v2376 = vmax.f32 %v2374, %v2375
      %v2377 = vsel %vm1161, %v2206, -inf
      %v2378 = vrot.slane %v2377, 4
      %v2379 = vmax.f32 %v2377, %v2378
      %v2380 = vrot.slane %v2379, 2
      %v2381 = vmax.f32 %v2379, %v2380
      %v2382 = vrot.slane %v2381, 1
      %v2383 = vmax.f32 %v2381, %v2382
      %v2384 = vsel %vm1161, %v2205, -inf
      %v2385 = vrot.slane %v2384, 4
      %v2386 = vmax.f32 %v2384, %v2385
      %v2387 = vrot.slane %v2386, 2
      %v2388 = vmax.f32 %v2386, %v2387
      %v2389 = vrot.slane %v2388, 1
      %v2390 = vmax.f32 %v2388, %v2389
      %v2391 = vsel %vm1161, %v2207, -inf
      %v2392 = vrot.slane %v2391, 4
      %v2393 = vmax.f32 %v2391, %v2392
      %v2394 = vrot.slane %v2393, 2
      %v2395 = vmax.f32 %v2393, %v2394
      %v2396 = vrot.slane %v2395, 1
      %v2397 = vmax.f32 %v2395, %v2396
      %v2398 = vsel %vm1161, %v2215, -inf
      %v2399 = vrot.slane %v2398, 4
      %v2400 = vmax.f32 %v2398, %v2399
      %v2401 = vrot.slane %v2400, 2
      %v2402 = vmax.f32 %v2400, %v2401
      %v2403 = vrot.slane %v2402, 1
      %v2404 = vmax.f32 %v2402, %v2403
      %v2405 = vsel %vm1161, %v2223, -inf
      %v2406 = vrot.slane %v2405, 4
      %v2407 = vmax.f32 %v2405, %v2406
      %v2408 = vrot.slane %v2407, 2
      %v2409 = vmax.f32 %v2407, %v2408
      %v2410 = vrot.slane %v2409, 1
      %v2411 = vmax.f32 %v2409, %v2410
      %v2412 = vsel %vm1161, %v2222, -inf
      %v2413 = vrot.slane %v2412, 4
      %v2414 = vmax.f32 %v2412, %v2413
      %v2415 = vrot.slane %v2414, 2
      %v2416 = vmax.f32 %v2414, %v2415
      %v2417 = vrot.slane %v2416, 1
      %v2418 = vmax.f32 %v2416, %v2417
      %v2419 = vsel %vm1161, %v2224, -inf
      %v2420 = vrot.slane %v2419, 4
      %v2421 = vmax.f32 %v2419, %v2420
      %v2422 = vrot.slane %v2421, 2
      %v2423 = vmax.f32 %v2421, %v2422
      %v2424 = vrot.slane %v2423, 1
      %v2425 = vmax.f32 %v2423, %v2424
      %v2426 = vsel %vm1161, %v2232, -inf
      %v2427 = vrot.slane %v2426, 4
      %v2428 = vmax.f32 %v2426, %v2427
      %v2429 = vrot.slane %v2428, 2
      %v2430 = vmax.f32 %v2428, %v2429
      %v2431 = vrot.slane %v2430, 1
      %v2432 = vmax.f32 %v2430, %v2431
      %v2433 = vsel %vm1161, %v2240, -inf
      %v2434 = vrot.slane %v2433, 4
      %v2435 = vmax.f32 %v2433, %v2434
      %v2436 = vrot.slane %v2435, 2
      %v2437 = vmax.f32 %v2435, %v2436
      %v2438 = vrot.slane %v2437, 1
      %v2439 = vmax.f32 %v2437, %v2438
      %v2440 = vsel %vm1161, %v2239, -inf
      %v2441 = vrot.slane %v2440, 4
      %v2442 = vmax.f32 %v2440, %v2441
      %v2443 = vrot.slane %v2442, 2
      %v2444 = vmax.f32 %v2442, %v2443
      %v2445 = vrot.slane %v2444, 1
      %v2446 = vmax.f32 %v2444, %v2445
      %v2447 = vsel %vm1161, %v2241, -inf
      %v2448 = vrot.slane %v2447, 4
      %v2449 = vmax.f32 %v2447, %v2448
      %v2450 = vrot.slane %v2449, 2
      %v2451 = vmax.f32 %v2449, %v2450
      %v2452 = vrot.slane %v2451, 1
      %v2453 = vmax.f32 %v2451, %v2452
      %v2454 = vsel %vm1161, %v2249, -inf
      %v2455 = vrot.slane %v2454, 4
      %v2456 = vmax.f32 %v2454, %v2455
      %v2457 = vrot.slane %v2456, 2
      %v2458 = vmax.f32 %v2456, %v2457
      %v2459 = vrot.slane %v2458, 1
      %v2460 = vmax.f32 %v2458, %v2459
      %v2461 = vsel %vm1161, %v2257, -inf
      %v2462 = vrot.slane %v2461, 4
      %v2463 = vmax.f32 %v2461, %v2462
      %v2464 = vrot.slane %v2463, 2
      %v2465 = vmax.f32 %v2463, %v2464
      %v2466 = vrot.slane %v2465, 1
      %v2467 = vmax.f32 %v2465, %v2466
      %v2468 = vsel %vm1161, %v2256, -inf
      %v2469 = vrot.slane %v2468, 4
      %v2470 = vmax.f32 %v2468, %v2469
      %v2471 = vrot.slane %v2470, 2
      %v2472 = vmax.f32 %v2470, %v2471
      %v2473 = vrot.slane %v2472, 1
      %v2474 = vmax.f32 %v2472, %v2473
      %v2475 = vsel %vm1161, %v2258, -inf
      %v2476 = vrot.slane %v2475, 4
      %v2477 = vmax.f32 %v2475, %v2476
      %v2478 = vrot.slane %v2477, 2
      %v2479 = vmax.f32 %v2477, %v2478
      %v2480 = vrot.slane %v2479, 1
      %v2481 = vmax.f32 %v2479, %v2480
      %v2482 = vsel %vm1161, %v2266, -inf
      %v2483 = vrot.slane %v2482, 4
      %v2484 = vmax.f32 %v2482, %v2483
      %v2485 = vrot.slane %v2484, 2
      %v2486 = vmax.f32 %v2484, %v2485
      %v2487 = vrot.slane %v2486, 1
      %v2488 = vmax.f32 %v2486, %v2487
      %v2489 = vsel %vm1161, %v2274, -inf
      %v2490 = vrot.slane %v2489, 4
      %v2491 = vmax.f32 %v2489, %v2490
      %v2492 = vrot.slane %v2491, 2
      %v2493 = vmax.f32 %v2491, %v2492
      %v2494 = vrot.slane %v2493, 1
      %v2495 = vmax.f32 %v2493, %v2494
      %v2496 = vsel %vm1161, %v2273, -inf
      %v2497 = vrot.slane %v2496, 4
      %v2498 = vmax.f32 %v2496, %v2497
      %v2499 = vrot.slane %v2498, 2
      %v2500 = vmax.f32 %v2498, %v2499
      %v2501 = vrot.slane %v2500, 1
      %v2502 = vmax.f32 %v2500, %v2501
      %v2503 = vsel %vm1161, %v2275, -inf
      %v2504 = vrot.slane %v2503, 4
      %v2505 = vmax.f32 %v2503, %v2504
      %v2506 = vrot.slane %v2505, 2
      %v2507 = vmax.f32 %v2505, %v2506
      %v2508 = vrot.slane %v2507, 1
      %v2509 = vmax.f32 %v2507, %v2508
      %v2510 = vsel %vm1161, %v2283, -inf
      %v2511 = vrot.slane %v2510, 4
      %v2512 = vmax.f32 %v2510, %v2511
      %v2513 = vrot.slane %v2512, 2
      %v2514 = vmax.f32 %v2512, %v2513
      %v2515 = vrot.slane %v2514, 1
      %v2516 = vmax.f32 %v2514, %v2515
      %v2517 = vsel %vm1161, %v2291, -inf
      %v2518 = vrot.slane %v2517, 4
      %v2519 = vmax.f32 %v2517, %v2518
      %v2520 = vrot.slane %v2519, 2
      %v2521 = vmax.f32 %v2519, %v2520
      %v2522 = vrot.slane %v2521, 1
      %v2523 = vmax.f32 %v2521, %v2522
      %v2524 = vsel %vm1161, %v2290, -inf
      %v2525 = vrot.slane %v2524, 4
      %v2526 = vmax.f32 %v2524, %v2525
      %v2527 = vrot.slane %v2526, 2
      %v2528 = vmax.f32 %v2526, %v2527
      %v2529 = vrot.slane %v2528, 1
      %v2530 = vmax.f32 %v2528, %v2529
      %v2531 = vsel %vm1161, %v2292, -inf
      %v2532 = vrot.slane %v2531, 4
      %v2533 = vmax.f32 %v2531, %v2532
      %v2534 = vrot.slane %v2533, 2
      %v2535 = vmax.f32 %v2533, %v2534
      %v2536 = vrot.slane %v2535, 1
      %v2537 = vmax.f32 %v2535, %v2536
      %v2538 = vsel %vm1161, %v2300, -inf
      %v2539 = vrot.slane %v2538, 4
      %v2540 = vmax.f32 %v2538, %v2539
      %v2541 = vrot.slane %v2540, 2
      %v2542 = vmax.f32 %v2540, %v2541
      %v2543 = vrot.slane %v2542, 1
      %v2544 = vmax.f32 %v2542, %v2543
      %v2545 = vsel %vm1161, %v2308, -inf
      %v2546 = vrot.slane %v2545, 4
      %v2547 = vmax.f32 %v2545, %v2546
      %v2548 = vrot.slane %v2547, 2
      %v2549 = vmax.f32 %v2547, %v2548
      %v2550 = vrot.slane %v2549, 1
      %v2551 = vmax.f32 %v2549, %v2550
      %v2552 = vsel %vm1161, %v2307, -inf
      %v2553 = vrot.slane %v2552, 4
      %v2554 = vmax.f32 %v2552, %v2553
      %v2555 = vrot.slane %v2554, 2
      %v2556 = vmax.f32 %v2554, %v2555
      %v2557 = vrot.slane %v2556, 1
      %v2558 = vmax.f32 %v2556, %v2557
      %v2559 = vsel %vm1161, %v2309, -inf
      %v2560 = vrot.slane %v2559, 4
      %v2561 = vmax.f32 %v2559, %v2560
      %v2562 = vrot.slane %v2561, 2
      %v2563 = vmax.f32 %v2561, %v2562
      %v2564 = vrot.slane %v2563, 1
      %v2565 = vmax.f32 %v2563, %v2564
      %v2598 = vsel %vm1690, %v2355, %v2348
      %v2599 = vsel %vm1692, %v2362, %v2598
      %v2600 = vsel %vm1694, %v2369, %v2599
      %v2601 = vsel %vm1690, %v2383, %v2376
      %v2602 = vsel %vm1692, %v2390, %v2601
      %v2603 = vsel %vm1694, %v2397, %v2602
      %v2604 = vsel %vm1690, %v2411, %v2404
      %v2605 = vsel %vm1692, %v2418, %v2604
      %v2606 = vsel %vm1694, %v2425, %v2605
      %v2607 = vsel %vm1690, %v2439, %v2432
      %v2608 = vsel %vm1692, %v2446, %v2607
      %v2609 = vsel %vm1694, %v2453, %v2608
      %v2610 = vsel %vm1690, %v2467, %v2460
      %v2611 = vsel %vm1692, %v2474, %v2610
      %v2612 = vsel %vm1694, %v2481, %v2611
      %v2613 = vsel %vm1690, %v2495, %v2488
      %v2614 = vsel %vm1692, %v2502, %v2613
      %v2615 = vsel %vm1694, %v2509, %v2614
      %v2616 = vsel %vm1690, %v2523, %v2516
      %v2617 = vsel %vm1692, %v2530, %v2616
      %v2618 = vsel %vm1694, %v2537, %v2617
      %v2619 = vsel %vm1690, %v2551, %v2544
      %v2620 = vsel %vm1692, %v2558, %v2619
      %v2621 = vsel %vm1694, %v2565, %v2620
      %2630 = vst [vmem:[%s229] sm:$0xf] %v2600
      %2631 = vst [vmem:[%s229 + $0x4] sm:$0xf] %v2603
      %2632 = vst [vmem:[%s229 + $0x8] sm:$0xf] %v2606
      %2633 = vst [vmem:[%s229 + $0xc] sm:$0xf] %v2609
      %2634 = vst [vmem:[%s229 + $0x10] sm:$0xf] %v2612
      %2635 = vst [vmem:[%s229 + $0x14] sm:$0xf] %v2615
      %2636 = vst [vmem:[%s229 + $0x18] sm:$0xf] %v2618
      %2637 = vst [vmem:[%s229 + $0x1c] sm:$0xf] %v2621
      %s2638 = smul.u32 8, %s16
      %p2639 = scmp.lt.s32.totalorder %s2638, 15
      %s2640 = scalar_select %p2639, %s2638, 15
      %s2641 = smul.addr %s2640, 4
      %s2642 = scalar_lea.vmem %s5, %s2641
      // Predicated region
      $region41: #{video_feature_network.2} parent=39 // pred_check
        %p2643 = pneg %p144
      $region42: #{video_feature_network.2} parent=39 // pred_check_branch
        %2645 = sbr.rel (%p2643) target = $region44
      $region43: #{video_feature_network.2} parent=39 // pred_region
        %s2646 = smul.u32 8, %s16
      $region44: #{video_feature_network.2} parent=39 // pred_fallthru
        _
    $region40: #{video_feature_network.2} parent=5 // pred_fallthru
      _
    %p2647 = scmp.le.s32.totalorder 2, %s11
    // Predicated region
    $region45: #{video_feature_network.2} parent=5 // pred_check
      %p2648 = pneg %p2647
    $region46: #{video_feature_network.2} parent=5 // pred_check_branch
      %2650 = sbr.rel (%p2648) target = $region48
    $region47: #{video_feature_network.2} parent=5 // pred_region
      %s2651 = ssub.s32 %s11, 2
      // Predicated region
      $region49: #{video_feature_network.2} parent=47 // pred_check
        %p2652 = pneg %p150
      $region50: #{video_feature_network.2} parent=47 // pred_check_branch
        %2654 = sbr.rel (%p2652) target = $region52
      $region51: #{video_feature_network.2} parent=47 // pred_region
        %s2655 = smul.u32 8, %s17
        %p2656 = scmp.lt.s32.totalorder %s2655, 15
        %s2657 = scalar_select %p2656, %s2655, 15
        %s2658 = smul.addr %s2657, 4
        %s2659 = scalar_lea.vmem %s5, %s2658
      $region52: #{video_feature_network.2} parent=47 // pred_fallthru
        _
    $region48: #{video_feature_network.2} parent=5 // pred_fallthru
      _
  $region6: #{video_feature_network.2} parent=0 // loop_footer
    %s15 = sadd.s32 1, %s11
  $region7: #{video_feature_network.2} parent=0 // loop_footer_branch
    %10 = sbr.rel target = $region3
  $region8: #{video_feature_network.2} parent=0 // loop_exit
    _

// kernel: video_feature_network.3
$region0: #{video_feature_network.3}
  #allocation0 [shape = 'u32[]', space=smem, size = 0x4, offset = 0x4, fixed_abs, tag = 'smem constant byte address 0x4 - core index']
  #allocation1 [shape = 'u32[144,128]{1,0:T(1,128)}', space=vmem, size = 0x12000, scoped, tag = 'internal scratch']
  #allocation2 [shape = 'f32[16,128]{1,0:T(8,128)}', space=vmem, size = 0x2000, scoped, tag = 'scratch operand']
  #allocation3 [shape = 'f32[16,32]{1,0:T(8,128)}', space=vmem, size = 0x2000, scoped, tag = 'scratch operand']
  %s0 = inlined_call_operand.vmem [shape: f32[16,512], index: 0, kind: input, shape index: {}]
  %s1 = inlined_call_operand.vmem [shape: bf16[512,64], index: 1, kind: input, shape index: {}]
  %s2 = inlined_call_operand.vmem [shape: f32[1,64], index: 2, kind: input, shape index: {}]
  %s3 = inlined_call_operand.vmem [shape: bf16[64,64], index: 3, kind: input, shape index: {}]
  %s4 = inlined_call_operand.vmem [shape: f32[1,64], index: 4, kind: input, shape index: {}]
  %s5 = inlined_call_operand.vmem [shape: bf16[64,32], index: 5, kind: input, shape index: {}]
  %s6 = inlined_call_operand.vmem [shape: f32[1,32], index: 6, kind: input, shape index: {}]
  %s7 = inlined_call_operand.vmem [shape: f32[1,32], index: 7, kind: input, shape index: {}]
  %s8 = inlined_call_operand.vmem [shape: f32[1,32], index: 8, kind: input, shape index: {}]
  %s9 = inlined_call_operand.vmem [shape: bf16[32,128], index: 9, kind: input, shape index: {}]
  %s10 = inlined_call_operand.vmem [shape: bf16[32,128], index: 10, kind: input, shape index: {}]
  %s11 = inlined_call_operand.vmem [shape: f32[1,128], index: 11, kind: input, shape index: {}]
  %s12 = inlined_call_operand.vmem [shape: bf16[32,128], index: 12, kind: input, shape index: {}]
  %s13 = inlined_call_operand.vmem [shape: bf16[32,128], index: 13, kind: input, shape index: {}]
  %s14 = inlined_call_operand.vmem [shape: f32[1,128], index: 14, kind: input, shape index: {}]
  %s15 = inlined_call_operand.vmem [shape: f32[16,32], index: 15, kind: output, shape index: {}]
  %s16 = sld [smem:[#allocation0]]
  $region70: #{video_feature_network.3} parent=0
    _
  %s18 = ssub.s32 1, %s16
  %s19 = scalar_select 0, %s18, %s16
  // Predicated region
  $region2: #{video_feature_network.3} parent=0 // pred_check
    _
  $region3: #{video_feature_network.3} parent=0 // pred_check_branch
    %21 = sbr.rel (0) target = $region5
  $region4: #{video_feature_network.3} parent=0 // pred_region
    _
  $region5: #{video_feature_network.3} parent=0 // pred_fallthru
    _
  // Predicated region
  $region6: #{video_feature_network.3} parent=0 // pred_check
    _
  $region7: #{video_feature_network.3} parent=0 // pred_check_branch
    %23 = sbr.rel (0) target = $region9
  $region8: #{video_feature_network.3} parent=0 // pred_region
    _
  $region9: #{video_feature_network.3} parent=0 // pred_fallthru
    _
  // Predicated region
  $region10: #{video_feature_network.3} parent=0 // pred_check
    _
  $region11: #{video_feature_network.3} parent=0 // pred_check_branch
    %25 = sbr.rel (0) target = $region13
  $region12: #{video_feature_network.3} parent=0 // pred_region
    _
  $region13: #{video_feature_network.3} parent=0 // pred_fallthru
    _
  // Predicated region
  $region14: #{video_feature_network.3} parent=0 // pred_check
    _
  $region15: #{video_feature_network.3} parent=0 // pred_check_branch
    %27 = sbr.rel (0) target = $region17
  $region16: #{video_feature_network.3} parent=0 // pred_region
    _
  $region17: #{video_feature_network.3} parent=0 // pred_fallthru
    _
  // Predicated region
  $region18: #{video_feature_network.3} parent=0 // pred_check
    _
  $region19: #{video_feature_network.3} parent=0 // pred_check_branch
    %29 = sbr.rel (0) target = $region21
  $region20: #{video_feature_network.3} parent=0 // pred_region
    _
  $region21: #{video_feature_network.3} parent=0 // pred_fallthru
    _
  // Predicated region
  $region22: #{video_feature_network.3} parent=0 // pred_check
    _
  $region23: #{video_feature_network.3} parent=0 // pred_check_branch
    %31 = sbr.rel (0) target = $region25
  $region24: #{video_feature_network.3} parent=0 // pred_region
    _
  $region25: #{video_feature_network.3} parent=0 // pred_fallthru
    _
  // Predicated region
  $region26: #{video_feature_network.3} parent=0 // pred_check
    _
  $region27: #{video_feature_network.3} parent=0 // pred_check_branch
    %33 = sbr.rel (0) target = $region29
  $region28: #{video_feature_network.3} parent=0 // pred_region
    _
  $region29: #{video_feature_network.3} parent=0 // pred_fallthru
    _
  // Predicated region
  $region30: #{video_feature_network.3} parent=0 // pred_check
    _
  $region31: #{video_feature_network.3} parent=0 // pred_check_branch
    %35 = sbr.rel (0) target = $region33
  $region32: #{video_feature_network.3} parent=0 // pred_region
    _
  $region33: #{video_feature_network.3} parent=0 // pred_fallthru
    _
  // Predicated region
  $region34: #{video_feature_network.3} parent=0 // pred_check
    _
  $region35: #{video_feature_network.3} parent=0 // pred_check_branch
    %37 = sbr.rel (0) target = $region37
  $region36: #{video_feature_network.3} parent=0 // pred_region
    _
  $region37: #{video_feature_network.3} parent=0 // pred_fallthru
    _
  // Predicated region
  $region38: #{video_feature_network.3} parent=0 // pred_check
    _
  $region39: #{video_feature_network.3} parent=0 // pred_check_branch
    %39 = sbr.rel (0) target = $region41
  $region40: #{video_feature_network.3} parent=0 // pred_region
    _
  $region41: #{video_feature_network.3} parent=0 // pred_fallthru
    _
  // Predicated region
  $region42: #{video_feature_network.3} parent=0 // pred_check
    _
  $region43: #{video_feature_network.3} parent=0 // pred_check_branch
    %41 = sbr.rel (0) target = $region45
  $region44: #{video_feature_network.3} parent=0 // pred_region
    _
  $region45: #{video_feature_network.3} parent=0 // pred_fallthru
    _
  // Predicated region
  $region46: #{video_feature_network.3} parent=0 // pred_check
    _
  $region47: #{video_feature_network.3} parent=0 // pred_check_branch
    %43 = sbr.rel (0) target = $region49
  $region48: #{video_feature_network.3} parent=0 // pred_region
    _
  $region49: #{video_feature_network.3} parent=0 // pred_fallthru
    _
  // Predicated region
  $region50: #{video_feature_network.3} parent=0 // pred_check
    _
  $region51: #{video_feature_network.3} parent=0 // pred_check_branch
    %45 = sbr.rel (0) target = $region53
  $region52: #{video_feature_network.3} parent=0 // pred_region
    _
  $region53: #{video_feature_network.3} parent=0 // pred_fallthru
    _
  // Predicated region
  $region54: #{video_feature_network.3} parent=0 // pred_check
    _
  $region55: #{video_feature_network.3} parent=0 // pred_check_branch
    %47 = sbr.rel (0) target = $region57
  $region56: #{video_feature_network.3} parent=0 // pred_region
    _
  $region57: #{video_feature_network.3} parent=0 // pred_fallthru
    _
  // Predicated region
  $region58: #{video_feature_network.3} parent=0 // pred_check
    _
  $region59: #{video_feature_network.3} parent=0 // pred_check_branch
    %49 = sbr.rel (0) target = $region61
  $region60: #{video_feature_network.3} parent=0 // pred_region
    _
  $region61: #{video_feature_network.3} parent=0 // pred_fallthru
    _
  %v51 = vld [vmem:[%s0] sm:$0xff]
  %v52 = vld [vmem:[%s0 + $0x8] sm:$0xff]
  %v53 = vld [vmem:[%s0 + $0x10] sm:$0xff]
  %v54 = vld [vmem:[%s0 + $0x18] sm:$0xff]
  %v55 = vld [vmem:[%s0 + $0x20] sm:$0xff]
  %v56 = vld [vmem:[%s0 + $0x28] sm:$0xff]
  %v57 = vld [vmem:[%s0 + $0x30] sm:$0xff]
  %v58 = vld [vmem:[%s0 + $0x38] sm:$0xff]
  %v59 = vpack.c.bf16 %v55, %v51
  %v60 = vpack.c.bf16 %v56, %v52
  %v61 = vpack.c.bf16 %v57, %v53
  %v62 = vpack.c.bf16 %v58, %v54
  %v63 = vld [vmem:[%s1] sm:$0xf]
  %v64 = vld [vmem:[%s1 + $0x4] sm:$0xf]
  %v65 = vld [vmem:[%s1 + $0x8] sm:$0xf]
  %v66 = vld [vmem:[%s1 + $0xc] sm:$0xf]
  %v67 = vld [vmem:[%s1 + $0x10] sm:$0xf]
  %v68 = vld [vmem:[%s1 + $0x14] sm:$0xf]
  %v69 = vld [vmem:[%s1 + $0x18] sm:$0xf]
  %v70 = vld [vmem:[%s1 + $0x1c] sm:$0xf]
  %v71 = vld [vmem:[%s1 + $0x20] sm:$0xf]
  %v72 = vld [vmem:[%s1 + $0x24] sm:$0xf]
  %v73 = vld [vmem:[%s1 + $0x28] sm:$0xf]
  %v74 = vld [vmem:[%s1 + $0x2c] sm:$0xf]
  %v75 = vld [vmem:[%s1 + $0x30] sm:$0xf]
  %v76 = vld [vmem:[%s1 + $0x34] sm:$0xf]
  %v77 = vld [vmem:[%s1 + $0x38] sm:$0xf]
  %v78 = vld [vmem:[%s1 + $0x3c] sm:$0xf]
  %v79 = vld [vmem:[%s1 + $0x40] sm:$0xf]
  %v80 = vld [vmem:[%s1 + $0x44] sm:$0xf]
  %v81 = vld [vmem:[%s1 + $0x48] sm:$0xf]
  %v82 = vld [vmem:[%s1 + $0x4c] sm:$0xf]
  %v83 = vld [vmem:[%s1 + $0x50] sm:$0xf]
  %v84 = vld [vmem:[%s1 + $0x54] sm:$0xf]
  %v85 = vld [vmem:[%s1 + $0x58] sm:$0xf]
  %v86 = vld [vmem:[%s1 + $0x5c] sm:$0xf]
  %v87 = vld [vmem:[%s1 + $0x60] sm:$0xf]
  %v88 = vld [vmem:[%s1 + $0x64] sm:$0xf]
  %v89 = vld [vmem:[%s1 + $0x68] sm:$0xf]
  %v90 = vld [vmem:[%s1 + $0x6c] sm:$0xf]
  %v91 = vld [vmem:[%s1 + $0x70] sm:$0xf]
  %v92 = vld [vmem:[%s1 + $0x74] sm:$0xf]
  %v93 = vld [vmem:[%s1 + $0x78] sm:$0xf]
  %v94 = vld [vmem:[%s1 + $0x7c] sm:$0xf]
  %v95 = vld [vmem:[%s1 + $0x80] sm:$0xf]
  %v96 = vld [vmem:[%s1 + $0x84] sm:$0xf]
  %v97 = vld [vmem:[%s1 + $0x88] sm:$0xf]
  %v98 = vld [vmem:[%s1 + $0x8c] sm:$0xf]
  %v99 = vld [vmem:[%s1 + $0x90] sm:$0xf]
  %v100 = vld [vmem:[%s1 + $0x94] sm:$0xf]
  %v101 = vld [vmem:[%s1 + $0x98] sm:$0xf]
  %v102 = vld [vmem:[%s1 + $0x9c] sm:$0xf]
  %v103 = vld [vmem:[%s1 + $0xa0] sm:$0xf]
  %v104 = vld [vmem:[%s1 + $0xa4] sm:$0xf]
  %v105 = vld [vmem:[%s1 + $0xa8] sm:$0xf]
  %v106 = vld [vmem:[%s1 + $0xac] sm:$0xf]
  %v107 = vld [vmem:[%s1 + $0xb0] sm:$0xf]
  %v108 = vld [vmem:[%s1 + $0xb4] sm:$0xf]
  %v109 = vld [vmem:[%s1 + $0xb8] sm:$0xf]
  %v110 = vld [vmem:[%s1 + $0xbc] sm:$0xf]
  %v111 = vld [vmem:[%s1 + $0xc0] sm:$0xf]
  %v112 = vld [vmem:[%s1 + $0xc4] sm:$0xf]
  %v113 = vld [vmem:[%s1 + $0xc8] sm:$0xf]
  %v114 = vld [vmem:[%s1 + $0xcc] sm:$0xf]
  %v115 = vld [vmem:[%s1 + $0xd0] sm:$0xf]
  %v116 = vld [vmem:[%s1 + $0xd4] sm:$0xf]
  %v117 = vld [vmem:[%s1 + $0xd8] sm:$0xf]
  %v118 = vld [vmem:[%s1 + $0xdc] sm:$0xf]
  %v119 = vld [vmem:[%s1 + $0xe0] sm:$0xf]
  %v120 = vld [vmem:[%s1 + $0xe4] sm:$0xf]
  %v121 = vld [vmem:[%s1 + $0xe8] sm:$0xf]
  %v122 = vld [vmem:[%s1 + $0xec] sm:$0xf]
  %v123 = vld [vmem:[%s1 + $0xf0] sm:$0xf]
  %v124 = vld [vmem:[%s1 + $0xf4] sm:$0xf]
  %v125 = vld [vmem:[%s1 + $0xf8] sm:$0xf]
  %v126 = vld [vmem:[%s1 + $0xfc] sm:$0xf]
  %v127 = vld [vmem:[%s2] sm:$0x1]
  %v129 = vlaneseq
  %v130 = vshrl.u32 %v129, 7
  %v131 = vsub.s32 0, %v130
  %v132 = vrot.slane %v127, %v131
  %v198 = vunpack.c.l.b16 %v63
  %v199 = vunpack.c.l.b16 %v64
  %v200 = vunpack.c.l.b16 %v65
  %v201 = vunpack.c.l.b16 %v66
  %v202 = vunpack.c.l.b16 %v67
  %v203 = vunpack.c.l.b16 %v68
  %v204 = vunpack.c.l.b16 %v69
  %v205 = vunpack.c.l.b16 %v70
  %v206 = vunpack.c.l.b16 %v71
  %v207 = vunpack.c.l.b16 %v72
  %v208 = vunpack.c.l.b16 %v73
  %v209 = vunpack.c.l.b16 %v74
  %v210 = vunpack.c.l.b16 %v75
  %v211 = vunpack.c.l.b16 %v76
  %v212 = vunpack.c.l.b16 %v77
  %v213 = vunpack.c.l.b16 %v78
  %v214 = vunpack.c.l.b16 %v79
  %v215 = vunpack.c.l.b16 %v80
  %v216 = vunpack.c.l.b16 %v81
  %v217 = vunpack.c.l.b16 %v82
  %v218 = vunpack.c.l.b16 %v83
  %v219 = vunpack.c.l.b16 %v84
  %v220 = vunpack.c.l.b16 %v85
  %v221 = vunpack.c.l.b16 %v86
  %v222 = vunpack.c.l.b16 %v87
  %v223 = vunpack.c.l.b16 %v88
  %v224 = vunpack.c.l.b16 %v89
  %v225 = vunpack.c.l.b16 %v90
  %v226 = vunpack.c.l.b16 %v91
  %v227 = vunpack.c.l.b16 %v92
  %v228 = vunpack.c.l.b16 %v93
  %v229 = vunpack.c.l.b16 %v94
  %v230 = vunpack.c.l.b16 %v95
  %v231 = vunpack.c.l.b16 %v96
  %v232 = vunpack.c.l.b16 %v97
  %v233 = vunpack.c.l.b16 %v98
  %v234 = vunpack.c.l.b16 %v99
  %v235 = vunpack.c.l.b16 %v100
  %v236 = vunpack.c.l.b16 %v101
  %v237 = vunpack.c.l.b16 %v102
  %v238 = vunpack.c.l.b16 %v103
  %v239 = vunpack.c.l.b16 %v104
  %v240 = vunpack.c.l.b16 %v105
  %v241 = vunpack.c.l.b16 %v106
  %v242 = vunpack.c.l.b16 %v107
  %v243 = vunpack.c.l.b16 %v108
  %v244 = vunpack.c.l.b16 %v109
  %v245 = vunpack.c.l.b16 %v110
  %v246 = vunpack.c.l.b16 %v111
  %v247 = vunpack.c.l.b16 %v112
  %v248 = vunpack.c.l.b16 %v113
  %v249 = vunpack.c.l.b16 %v114
  %v250 = vunpack.c.l.b16 %v115
  %v251 = vunpack.c.l.b16 %v116
  %v252 = vunpack.c.l.b16 %v117
  %v253 = vunpack.c.l.b16 %v118
  %v254 = vunpack.c.l.b16 %v119
  %v255 = vunpack.c.l.b16 %v120
  %v256 = vunpack.c.l.b16 %v121
  %v257 = vunpack.c.l.b16 %v122
  %v258 = vunpack.c.l.b16 %v123
  %v259 = vunpack.c.l.b16 %v124
  %v260 = vunpack.c.l.b16 %v125
  %v261 = vunpack.c.l.b16 %v126
  %v262 = vpack.c.b16 %v199, %v198
  %v263 = vpack.c.b16 %v201, %v200
  %v264 = vpack.c.b16 %v203, %v202
  %v265 = vpack.c.b16 %v205, %v204
  %v266 = vpack.c.b16 %v207, %v206
  %v267 = vpack.c.b16 %v209, %v208
  %v268 = vpack.c.b16 %v211, %v210
  %v269 = vpack.c.b16 %v213, %v212
  %v270 = vpack.c.b16 %v215, %v214
  %v271 = vpack.c.b16 %v217, %v216
  %v272 = vpack.c.b16 %v219, %v218
  %v273 = vpack.c.b16 %v221, %v220
  %v274 = vpack.c.b16 %v223, %v222
  %v275 = vpack.c.b16 %v225, %v224
  %v276 = vpack.c.b16 %v227, %v226
  %v277 = vpack.c.b16 %v229, %v228
  %v278 = vpack.c.b16 %v231, %v230
  %v279 = vpack.c.b16 %v233, %v232
  %v280 = vpack.c.b16 %v235, %v234
  %v281 = vpack.c.b16 %v237, %v236
  %v282 = vpack.c.b16 %v239, %v238
  %v283 = vpack.c.b16 %v241, %v240
  %v284 = vpack.c.b16 %v243, %v242
  %v285 = vpack.c.b16 %v245, %v244
  %v286 = vpack.c.b16 %v247, %v246
  %v287 = vpack.c.b16 %v249, %v248
  %v288 = vpack.c.b16 %v251, %v250
  %v289 = vpack.c.b16 %v253, %v252
  %v290 = vpack.c.b16 %v255, %v254
  %v291 = vpack.c.b16 %v257, %v256
  %v292 = vpack.c.b16 %v259, %v258
  %v293 = vpack.c.b16 %v261, %v260
  %326 = vmatprep.subr.bf16.mxu0 0
  %327 = vmatpush1.bf16.msra.mxu0 %v269
  %328 = vmatprep.subr.bf16.mxu0 0
  %329 = vmatpush1.bf16.msra.mxu0 %v268
  %330 = vmatprep.subr.bf16.mxu0 0
  %331 = vmatpush1.bf16.msra.mxu0 %v267
  %332 = vmatprep.subr.bf16.mxu0 0
  %333 = vmatpush1.bf16.msra.mxu0 %v266
  %334 = vmatprep.subr.bf16.mxu0 0
  %335 = vmatpush1.bf16.msra.mxu0 %v265
  %336 = vmatprep.subr.bf16.mxu0 0
  %337 = vmatpush1.bf16.msra.mxu0 %v264
  %338 = vmatprep.subr.bf16.mxu0 0
  %339 = vmatpush1.bf16.msra.mxu0 %v263
  %340 = vmatprep.subr.bf16.mxu0 0
  %341 = vmatpush1.bf16.msra.mxu0 %v262
  %342 = vmatprep.subr.bf16.mxu0 0
  %343 = vmatpush2.bf16.msra.mxu0 %v277
  %344 = vmatprep.subr.bf16.mxu0 0
  %345 = vmatpush2.bf16.msra.mxu0 %v276
  %346 = vmatprep.subr.bf16.mxu0 0
  %347 = vmatpush2.bf16.msra.mxu0 %v275
  %348 = vmatprep.subr.bf16.mxu0 0
  %349 = vmatpush2.bf16.msra.mxu0 %v274
  %350 = vmatprep.subr.bf16.mxu0 0
  %351 = vmatpush2.bf16.msra.mxu0 %v273
  %352 = vmatprep.subr.bf16.mxu0 0
  %353 = vmatpush2.bf16.msra.mxu0 %v272
  %354 = vmatprep.subr.bf16.mxu0 0
  %355 = vmatpush2.bf16.msra.mxu0 %v271
  %356 = vmatprep.subr.bf16.mxu0 0
  %357 = vmatpush2.bf16.msra.mxu0 %v270
  %358 = vmatprep.mubr.bf16.mxu0 %v60
  %359 = vmatmul.mubr.bf16.gmra.mxu0 %v59
  %v360 = vpop.f32.mrf.mxu0
  %v361 = vadd.f32 %v132, %v360
  %v362 = vpop.f32.mrf.mxu0
  %v363 = vpop.f32.mrf.mxu0
  %v364 = vadd.f32 %v132, %v363
  %v365 = vpop.f32.mrf.mxu0
  %366 = vdwg.mxu0
  %367 = vmatprep.subr.bf16.mxu0 0
  %368 = vmatpush1.bf16.msra.mxu0 %v285
  %369 = vmatprep.subr.bf16.mxu0 0
  %370 = vmatpush1.bf16.msra.mxu0 %v284
  %371 = vmatprep.subr.bf16.mxu0 0
  %372 = vmatpush1.bf16.msra.mxu0 %v283
  %373 = vmatprep.subr.bf16.mxu0 0
  %374 = vmatpush1.bf16.msra.mxu0 %v282
  %375 = vmatprep.subr.bf16.mxu0 0
  %376 = vmatpush1.bf16.msra.mxu0 %v281
  %377 = vmatprep.subr.bf16.mxu0 0
  %378 = vmatpush1.bf16.msra.mxu0 %v280
  %379 = vmatprep.subr.bf16.mxu0 0
  %380 = vmatpush1.bf16.msra.mxu0 %v279
  %381 = vmatprep.subr.bf16.mxu0 0
  %382 = vmatpush1.bf16.msra.mxu0 %v278
  %383 = vmatprep.subr.bf16.mxu0 0
  %384 = vmatpush2.bf16.msra.mxu0 %v293
  %385 = vmatprep.subr.bf16.mxu0 0
  %386 = vmatpush2.bf16.msra.mxu0 %v292
  %387 = vmatprep.subr.bf16.mxu0 0
  %388 = vmatpush2.bf16.msra.mxu0 %v291
  %389 = vmatprep.subr.bf16.mxu0 0
  %390 = vmatpush2.bf16.msra.mxu0 %v290
  %391 = vmatprep.subr.bf16.mxu0 0
  %392 = vmatpush2.bf16.msra.mxu0 %v289
  %393 = vmatprep.subr.bf16.mxu0 0
  %394 = vmatpush2.bf16.msra.mxu0 %v288
  %395 = vmatprep.subr.bf16.mxu0 0
  %396 = vmatpush2.bf16.msra.mxu0 %v287
  %397 = vmatprep.subr.bf16.mxu0 0
  %398 = vmatpush2.bf16.msra.mxu0 %v286
  %399 = vmatprep.mubr.bf16.mxu0 %v62
  %400 = vmatmul.mubr.bf16.gmra.mxu0 %v61
  %v401 = vpop.f32.mrf.mxu0
  %v402 = vadd.f32 %v361, %v401
  %v403 = vpop.f32.mrf.mxu0
  %v404 = vpop.f32.mrf.mxu0
  %v405 = vadd.f32 %v364, %v404
  %v406 = vpop.f32.mrf.mxu0
  %407 = vdwg.mxu0
  %v408 = vmax.f32 %v402, 0.0
  %v409 = vmax.f32 %v405, 0.0
  %v410 = vpack.c.bf16 %v409, %v408
  %v411 = vld [vmem:[%s3] sm:$0xf]
  %v412 = vld [vmem:[%s3 + $0x4] sm:$0xf]
  %v413 = vld [vmem:[%s3 + $0x8] sm:$0xf]
  %v414 = vld [vmem:[%s3 + $0xc] sm:$0xf]
  %v415 = vld [vmem:[%s3 + $0x10] sm:$0xf]
  %v416 = vld [vmem:[%s3 + $0x14] sm:$0xf]
  %v417 = vld [vmem:[%s3 + $0x18] sm:$0xf]
  %v418 = vld [vmem:[%s3 + $0x1c] sm:$0xf]
  %v419 = vld [vmem:[%s4] sm:$0x1]
  %v421 = vlaneseq
  %v422 = vshrl.u32 %v421, 7
  %v423 = vsub.s32 0, %v422
  %v424 = vrot.slane %v419, %v423
  %v434 = vunpack.c.l.b16 %v411
  %v435 = vunpack.c.l.b16 %v412
  %v436 = vunpack.c.l.b16 %v413
  %v437 = vunpack.c.l.b16 %v414
  %v438 = vunpack.c.l.b16 %v415
  %v439 = vunpack.c.l.b16 %v416
  %v440 = vunpack.c.l.b16 %v417
  %v441 = vunpack.c.l.b16 %v418
  %v442 = vpack.c.b16 %v435, %v434
  %v443 = vpack.c.b16 %v437, %v436
  %v444 = vpack.c.b16 %v439, %v438
  %v445 = vpack.c.b16 %v441, %v440
  %vm450 = vcmask 523264
  %v452 = vsel %vm450, %v410, 0
  %454 = vmatprep.subr.bf16.mxu0 0
  %455 = vmatpush1.bf16.msra.mxu0 0
  %456 = vmatprep.subr.bf16.mxu0 0
  %457 = vmatpush1.bf16.msra.mxu0 0
  %458 = vmatprep.subr.bf16.mxu0 0
  %459 = vmatpush1.bf16.msra.mxu0 0
  %460 = vmatprep.subr.bf16.mxu0 0
  %461 = vmatpush1.bf16.msra.mxu0 0
  %462 = vmatprep.subr.bf16.mxu0 0
  %463 = vmatpush1.bf16.msra.mxu0 %v445
  %464 = vmatprep.subr.bf16.mxu0 0
  %465 = vmatpush1.bf16.msra.mxu0 %v444
  %466 = vmatprep.subr.bf16.mxu0 0
  %467 = vmatpush1.bf16.msra.mxu0 %v443
  %468 = vmatprep.subr.bf16.mxu0 0
  %469 = vmatpush1.bf16.msra.mxu0 %v442
  %470 = vmatprep.subr.bf16.mxu0 0
  %471 = vmatpush2.bf16.msra.mxu0 0
  %472 = vmatprep.subr.bf16.mxu0 0
  %473 = vmatpush2.bf16.msra.mxu0 0
  %474 = vmatprep.subr.bf16.mxu0 0
  %475 = vmatpush2.bf16.msra.mxu0 0
  %476 = vmatprep.subr.bf16.mxu0 0
  %477 = vmatpush2.bf16.msra.mxu0 0
  %478 = vmatprep.subr.bf16.mxu0 0
  %479 = vmatpush2.bf16.msra.mxu0 0
  %480 = vmatprep.subr.bf16.mxu0 0
  %481 = vmatpush2.bf16.msra.mxu0 0
  %482 = vmatprep.subr.bf16.mxu0 0
  %483 = vmatpush2.bf16.msra.mxu0 0
  %484 = vmatprep.subr.bf16.mxu0 0
  %485 = vmatpush2.bf16.msra.mxu0 0
  %486 = vmatprep.mubr.bf16.mxu0 0
  %487 = vmatmul.mubr.bf16.gmra.mxu0 %v452
  %v488 = vpop.f32.mrf.mxu0
  %v489 = vadd.f32 %v424, %v488
  %v490 = vpop.f32.mrf.mxu0
  %v491 = vpop.f32.mrf.mxu0
  %v492 = vadd.f32 %v424, %v491
  %v493 = vpop.f32.mrf.mxu0
  %494 = vdwg.mxu0
  %v495 = vmax.f32 %v489, 0.0
  %v496 = vmax.f32 %v492, 0.0
  %v497 = vpack.c.bf16 %v496, %v495
  %v498 = vld [vmem:[%s5] sm:$0xf]
  %v499 = vld [vmem:[%s5 + $0x4] sm:$0xf]
  %v500 = vld [vmem:[%s5 + $0x8] sm:$0xf]
  %v501 = vld [vmem:[%s5 + $0xc] sm:$0xf]
  %v502 = vld [vmem:[%s5 + $0x10] sm:$0xf]
  %v503 = vld [vmem:[%s5 + $0x14] sm:$0xf]
  %v504 = vld [vmem:[%s5 + $0x18] sm:$0xf]
  %v505 = vld [vmem:[%s5 + $0x1c] sm:$0xf]
  %v506 = vld [vmem:[%s6] sm:$0x1]
  %v508 = vlaneseq
  %v509 = vshrl.u32 %v508, 7
  %v510 = vsub.s32 0, %v509
  %v511 = vrot.slane %v506, %v510
  %v521 = vunpack.c.l.b16 %v498
  %v522 = vunpack.c.l.b16 %v499
  %v523 = vunpack.c.l.b16 %v500
  %v524 = vunpack.c.l.b16 %v501
  %v525 = vunpack.c.l.b16 %v502
  %v526 = vunpack.c.l.b16 %v503
  %v527 = vunpack.c.l.b16 %v504
  %v528 = vunpack.c.l.b16 %v505
  %v529 = vpack.c.b16 %v522, %v521
  %v530 = vpack.c.b16 %v524, %v523
  %v531 = vpack.c.b16 %v526, %v525
  %v532 = vpack.c.b16 %v528, %v527
  %v538 = vsel %vm450, %v497, 0
  %540 = vmatprep.subr.bf16.mxu0 0
  %541 = vmatpush1.bf16.msra.mxu0 0
  %542 = vmatprep.subr.bf16.mxu0 0
  %543 = vmatpush1.bf16.msra.mxu0 0
  %544 = vmatprep.subr.bf16.mxu0 0
  %545 = vmatpush1.bf16.msra.mxu0 0
  %546 = vmatprep.subr.bf16.mxu0 0
  %547 = vmatpush1.bf16.msra.mxu0 0
  %548 = vmatprep.subr.bf16.mxu0 0
  %549 = vmatpush1.bf16.msra.mxu0 %v532
  %550 = vmatprep.subr.bf16.mxu0 0
  %551 = vmatpush1.bf16.msra.mxu0 %v531
  %552 = vmatprep.subr.bf16.mxu0 0
  %553 = vmatpush1.bf16.msra.mxu0 %v530
  %554 = vmatprep.subr.bf16.mxu0 0
  %555 = vmatpush1.bf16.msra.mxu0 %v529
  %556 = vmatprep.subr.bf16.mxu0 0
  %557 = vmatpush2.bf16.msra.mxu0 0
  %558 = vmatprep.subr.bf16.mxu0 0
  %559 = vmatpush2.bf16.msra.mxu0 0
  %560 = vmatprep.subr.bf16.mxu0 0
  %561 = vmatpush2.bf16.msra.mxu0 0
  %562 = vmatprep.subr.bf16.mxu0 0
  %563 = vmatpush2.bf16.msra.mxu0 0
  %564 = vmatprep.subr.bf16.mxu0 0
  %565 = vmatpush2.bf16.msra.mxu0 0
  %566 = vmatprep.subr.bf16.mxu0 0
  %567 = vmatpush2.bf16.msra.mxu0 0
  %568 = vmatprep.subr.bf16.mxu0 0
  %569 = vmatpush2.bf16.msra.mxu0 0
  %570 = vmatprep.subr.bf16.mxu0 0
  %571 = vmatpush2.bf16.msra.mxu0 0
  %572 = vmatprep.mubr.bf16.mxu0 0
  %573 = vmatmul.mubr.bf16.gmra.mxu0 %v538
  %v574 = vpop.f32.mrf.mxu0
  %v575 = vadd.f32 %v511, %v574
  %v576 = vpop.f32.mrf.mxu0
  %v577 = vpop.f32.mrf.mxu0
  %v578 = vadd.f32 %v511, %v577
  %v579 = vpop.f32.mrf.mxu0
  %580 = vdwg.mxu0
  %vm581 = vcmask 261120
  %v582 = vsel %vm581, %v575, 0.0
  %v583 = vsel %vm581, %v578, 0.0
  %v584 = vadd.f32 %v582, %v583
  %v585 = vrot.slane %v584, 4
  %v586 = vadd.f32 %v584, %v585
  %v587 = vrot.slane %v586, 2
  %v588 = vadd.f32 %v586, %v587
  %v589 = vrot.slane %v588, 1
  %v590 = vadd.f32 %v588, %v589
  %v591 = vrcp.pop 16.0
  %v592 = vmul.f32 %v590, %v591
  %v593 = vsub.f32 %v575, %v592
  %v594 = vsub.f32 %v578, %v592
  %v595 = vmul.f32 %v593, %v593
  %v596 = vmul.f32 %v594, %v594
  %v597 = vsel %vm581, %v595, 0.0
  %v598 = vsel %vm581, %v596, 0.0
  %v599 = vadd.f32 %v597, %v598
  %v600 = vrot.slane %v599, 4
  %v601 = vadd.f32 %v599, %v600
  %v602 = vrot.slane %v601, 2
  %v603 = vadd.f32 %v601, %v602
  %v604 = vrot.slane %v603, 1
  %v605 = vadd.f32 %v603, %v604
  %v606 = vmul.f32 %v605, %v591
  %v607 = vadd.f32 %v606, 1e-05
  %v608 = vrsqrt.pop %v607
  %v609 = vmul.f32 %v593, %v608
  %v610 = vmul.f32 %v594, %v608
  %v611 = vld [vmem:[%s7] sm:$0x1]
  %v613 = vlaneseq
  %v614 = vshrl.u32 %v613, 7
  %v615 = vsub.s32 0, %v614
  %v616 = vrot.slane %v611, %v615
  %v618 = vmul.f32 %v609, %v616
  %v619 = vmul.f32 %v610, %v616
  %v620 = vld [vmem:[%s8] sm:$0x1]
  %v622 = vlaneseq
  %v623 = vshrl.u32 %v622, 7
  %v624 = vsub.s32 0, %v623
  %v625 = vrot.slane %v620, %v624
  %v627 = vadd.f32 %v618, %v625
  %v628 = vadd.f32 %v619, %v625
  %v629 = vpack.c.bf16 %v628, %v627
  %v630 = vld [vmem:[%s9] sm:$0xf]
  %v631 = vld [vmem:[%s9 + $0x4] sm:$0xf]
  %v632 = vld [vmem:[%s9 + $0x8] sm:$0xf]
  %v633 = vld [vmem:[%s9 + $0xc] sm:$0xf]
  %v634 = vld [vmem:[%s11] sm:$0x1]
  %v636 = vlaneseq
  %v637 = vshrl.u32 %v636, 7
  %v638 = vsub.s32 0, %v637
  %v639 = vrot.slane %v634, %v638
  %v645 = vunpack.c.l.b16 %v630
  %v646 = vunpack.c.l.b16 %v631
  %v647 = vunpack.c.l.b16 %v632
  %v648 = vunpack.c.l.b16 %v633
  %v649 = vpack.c.b16 %v646, %v645
  %v650 = vpack.c.b16 %v648, %v647
  %v654 = vsel %vm581, %v629, 0
  %656 = vmatprep.subr.bf16.mxu0 0
  %657 = vmatpush1.bf16.msra.mxu0 0
  %658 = vmatprep.subr.bf16.mxu0 0
  %659 = vmatpush1.bf16.msra.mxu0 0
  %660 = vmatprep.subr.bf16.mxu0 0
  %661 = vmatpush1.bf16.msra.mxu0 0
  %662 = vmatprep.subr.bf16.mxu0 0
  %663 = vmatpush1.bf16.msra.mxu0 0
  %664 = vmatprep.subr.bf16.mxu0 0
  %665 = vmatpush1.bf16.msra.mxu0 0
  %666 = vmatprep.subr.bf16.mxu0 0
  %667 = vmatpush1.bf16.msra.mxu0 0
  %668 = vmatprep.subr.bf16.mxu0 0
  %669 = vmatpush1.bf16.msra.mxu0 %v650
  %670 = vmatprep.subr.bf16.mxu0 0
  %671 = vmatpush1.bf16.msra.mxu0 %v649
  %672 = vmatprep.subr.bf16.mxu0 0
  %673 = vmatpush2.bf16.msra.mxu0 0
  %674 = vmatprep.subr.bf16.mxu0 0
  %675 = vmatpush2.bf16.msra.mxu0 0
  %676 = vmatprep.subr.bf16.mxu0 0
  %677 = vmatpush2.bf16.msra.mxu0 0
  %678 = vmatprep.subr.bf16.mxu0 0
  %679 = vmatpush2.bf16.msra.mxu0 0
  %680 = vmatprep.subr.bf16.mxu0 0
  %681 = vmatpush2.bf16.msra.mxu0 0
  %682 = vmatprep.subr.bf16.mxu0 0
  %683 = vmatpush2.bf16.msra.mxu0 0
  %684 = vmatprep.subr.bf16.mxu0 0
  %685 = vmatpush2.bf16.msra.mxu0 0
  %686 = vmatprep.subr.bf16.mxu0 0
  %687 = vmatpush2.bf16.msra.mxu0 0
  %688 = vmatprep.mubr.bf16.mxu0 0
  %689 = vmatmul.mubr.bf16.gmra.mxu0 %v654
  %v690 = vpop.f32.mrf.mxu0
  %v691 = vadd.f32 %v639, %v690
  %v692 = vpop.f32.mrf.mxu0
  %v693 = vpop.f32.mrf.mxu0
  %v694 = vadd.f32 %v639, %v693
  %v695 = vpop.f32.mrf.mxu0
  %696 = vdwg.mxu0
  %697 = vst [vmem:[#allocation2] sm:$0xff] %v691
  %698 = vst [vmem:[#allocation2 + $0x8] sm:$0xff] %v694
  %v699 = vld [vmem:[#allocation2] ss:$4 sm:$0xf]
  %v700 = vld [vmem:[%s10] sm:$0xf]
  %v701 = vld [vmem:[%s10 + $0x4] sm:$0xf]
  %v702 = vld [vmem:[%s10 + $0x8] sm:$0xf]
  %v703 = vld [vmem:[%s10 + $0xc] sm:$0xf]
  %v708 = vunpack.c.l.b16 %v700
  %v709 = vunpack.c.l.b16 %v701
  %v710 = vunpack.c.l.b16 %v702
  %v711 = vunpack.c.l.b16 %v703
  %v712 = vpack.c.b16 %v709, %v708
  %v713 = vpack.c.b16 %v711, %v710
  %v717 = vsel %vm581, 0, 0
  %719 = vmatprep.subr.bf16.mxu0 0
  %720 = vmatpush1.bf16.msra.mxu0 0
  %721 = vmatprep.subr.bf16.mxu0 0
  %722 = vmatpush1.bf16.msra.mxu0 0
  %723 = vmatprep.subr.bf16.mxu0 0
  %724 = vmatpush1.bf16.msra.mxu0 0
  %725 = vmatprep.subr.bf16.mxu0 0
  %726 = vmatpush1.bf16.msra.mxu0 0
  %727 = vmatprep.subr.bf16.mxu0 0
  %728 = vmatpush1.bf16.msra.mxu0 0
  %729 = vmatprep.subr.bf16.mxu0 0
  %730 = vmatpush1.bf16.msra.mxu0 0
  %731 = vmatprep.subr.bf16.mxu0 0
  %732 = vmatpush1.bf16.msra.mxu0 %v713
  %733 = vmatprep.subr.bf16.mxu0 0
  %734 = vmatpush1.bf16.msra.mxu0 %v712
  %735 = vmatprep.subr.bf16.mxu0 0
  %736 = vmatpush2.bf16.msra.mxu0 0
  %737 = vmatprep.subr.bf16.mxu0 0
  %738 = vmatpush2.bf16.msra.mxu0 0
  %739 = vmatprep.subr.bf16.mxu0 0
  %740 = vmatpush2.bf16.msra.mxu0 0
  %741 = vmatprep.subr.bf16.mxu0 0
  %742 = vmatpush2.bf16.msra.mxu0 0
  %743 = vmatprep.subr.bf16.mxu0 0
  %744 = vmatpush2.bf16.msra.mxu0 0
  %745 = vmatprep.subr.bf16.mxu0 0
  %746 = vmatpush2.bf16.msra.mxu0 0
  %747 = vmatprep.subr.bf16.mxu0 0
  %748 = vmatpush2.bf16.msra.mxu0 0
  %749 = vmatprep.subr.bf16.mxu0 0
  %750 = vmatpush2.bf16.msra.mxu0 0
  %751 = vmatprep.mubr.bf16.mxu0 0
  %752 = vmatmul.mubr.bf16.gmra.mxu0 %v717
  %v753 = vpop.f32.mrf.mxu0
  %v754 = vadd.f32 0.0, %v753
  %v755 = vpop.f32.mrf.mxu0
  %v756 = vpop.f32.mrf.mxu0
  %v757 = vpop.f32.mrf.mxu0
  %758 = vdwg.mxu0
  %v759 = vadd.f32 %v699, %v754
  %v760 = vxor.u32 %v759, 2147483648
  %v761 = vmul.f32 %v760, 1.442695
  %v762 = vpow.pop %v761
  %v763 = vadd.f32 %v762, 1.0
  %v764 = vrcp.pop %v763
  %v765 = vmul.f32 1.0, %v764
  %v766 = vtanh.pop %v759
  %v767 = vmul.f32 %v765, 0.0
  %769 = vrot.lane.b32.xlu0 %v766, 32
  %v770 = vpop.permute.xlu0 %769
  %v772 = vmul.f32 %v765, %v770
  %774 = vrot.lane.b32.xlu0 %v772, 32
  %v775 = vpop.permute.xlu0 %774
  %v777 = vadd.f32 %v767, %v775
  %v778 = vtanh.pop %v777
  %780 = vrot.lane.b32.xlu0 %v778, 32
  %v781 = vpop.permute.xlu0 %780
  %v783 = vmul.f32 %v765, %v781
  %785 = vrot.lane.b32.xlu0 %v783, 64
  %v786 = vpop.permute.xlu0 %785
  %vm788 = vcmask 257024
  %789 = vst.msk [vmem:[#allocation3] sm:$0xf] %vm788, %v786
  %s790 = scalar_lea.vmem [#allocation2], 1
  %v791 = vld [vmem:[%s790] ss:$4 sm:$0xf]
  %v792 = vpack.c.bf16 %v783, %v783
  %v793 = vld [vmem:[%s10] sm:$0xf]
  %v794 = vld [vmem:[%s10 + $0x4] sm:$0xf]
  %v795 = vld [vmem:[%s10 + $0x8] sm:$0xf]
  %v796 = vld [vmem:[%s10 + $0xc] sm:$0xf]
  %798 = vrot.lane.b32.xlu0 %v792, 64
  %v799 = vpop.permute.xlu0 %798
  %v804 = vunpack.c.l.b16 %v793
  %v805 = vunpack.c.l.b16 %v794
  %v806 = vunpack.c.l.b16 %v795
  %v807 = vunpack.c.l.b16 %v796
  %v808 = vpack.c.b16 %v805, %v804
  %v809 = vpack.c.b16 %v807, %v806
  %v813 = vsel %vm581, %v799, 0
  %815 = vmatprep.subr.bf16.mxu0 0
  %816 = vmatpush1.bf16.msra.mxu0 0
  %817 = vmatprep.subr.bf16.mxu0 0
  %818 = vmatpush1.bf16.msra.mxu0 0
  %819 = vmatprep.subr.bf16.mxu0 0
  %820 = vmatpush1.bf16.msra.mxu0 0
  %821 = vmatprep.subr.bf16.mxu0 0
  %822 = vmatpush1.bf16.msra.mxu0 0
  %823 = vmatprep.subr.bf16.mxu0 0
  %824 = vmatpush1.bf16.msra.mxu0 0
  %825 = vmatprep.subr.bf16.mxu0 0
  %826 = vmatpush1.bf16.msra.mxu0 0
  %827 = vmatprep.subr.bf16.mxu0 0
  %828 = vmatpush1.bf16.msra.mxu0 %v809
  %829 = vmatprep.subr.bf16.mxu0 0
  %830 = vmatpush1.bf16.msra.mxu0 %v808
  %831 = vmatprep.subr.bf16.mxu0 0
  %832 = vmatpush2.bf16.msra.mxu0 0
  %833 = vmatprep.subr.bf16.mxu0 0
  %834 = vmatpush2.bf16.msra.mxu0 0
  %835 = vmatprep.subr.bf16.mxu0 0
  %836 = vmatpush2.bf16.msra.mxu0 0
  %837 = vmatprep.subr.bf16.mxu0 0
  %838 = vmatpush2.bf16.msra.mxu0 0
  %839 = vmatprep.subr.bf16.mxu0 0
  %840 = vmatpush2.bf16.msra.mxu0 0
  %841 = vmatprep.subr.bf16.mxu0 0
  %842 = vmatpush2.bf16.msra.mxu0 0
  %843 = vmatprep.subr.bf16.mxu0 0
  %844 = vmatpush2.bf16.msra.mxu0 0
  %845 = vmatprep.subr.bf16.mxu0 0
  %846 = vmatpush2.bf16.msra.mxu0 0
  %847 = vmatprep.mubr.bf16.mxu0 0
  %848 = vmatmul.mubr.bf16.gmra.mxu0 %v813
  %v849 = vpop.f32.mrf.mxu0
  %v850 = vadd.f32 0.0, %v849
  %v851 = vpop.f32.mrf.mxu0
  %v852 = vpop.f32.mrf.mxu0
  %v853 = vpop.f32.mrf.mxu0
  %854 = vdwg.mxu0
  %v855 = vadd.f32 %v791, %v850
  %v856 = vxor.u32 %v855, 2147483648
  %v857 = vmul.f32 %v856, 1.442695
  %v858 = vpow.pop %v857
  %v859 = vadd.f32 %v858, 1.0
  %v860 = vrcp.pop %v859
  %v861 = vmul.f32 1.0, %v860
  %v862 = vtanh.pop %v855
  %v863 = vmul.f32 %v861, %v777
  %865 = vrot.lane.b32.xlu0 %v862, 32
  %v866 = vpop.permute.xlu0 %865
  %v868 = vmul.f32 %v861, %v866
  %870 = vrot.lane.b32.xlu0 %v868, 32
  %v871 = vpop.permute.xlu0 %870
  %v873 = vadd.f32 %v863, %v871
  %v874 = vtanh.pop %v873
  %876 = vrot.lane.b32.xlu0 %v874, 32
  %v877 = vpop.permute.xlu0 %876
  %v879 = vmul.f32 %v861, %v877
  %881 = vrot.lane.b32.xlu0 %v879, 64
  %v882 = vpop.permute.xlu0 %881
  %884 = vst.msk [vmem:[#allocation3 + $0x4] sm:$0xf] %vm788, %v882
  %s885 = scalar_lea.vmem [#allocation2], 2
  %v886 = vld [vmem:[%s885] ss:$4 sm:$0xf]
  %v887 = vpack.c.bf16 %v879, %v879
  %v888 = vld [vmem:[%s10] sm:$0xf]
  %v889 = vld [vmem:[%s10 + $0x4] sm:$0xf]
  %v890 = vld [vmem:[%s10 + $0x8] sm:$0xf]
  %v891 = vld [vmem:[%s10 + $0xc] sm:$0xf]
  %893 = vrot.lane.b32.xlu0 %v887, 64
  %v894 = vpop.permute.xlu0 %893
  %v899 = vunpack.c.l.b16 %v888
  %v900 = vunpack.c.l.b16 %v889
  %v901 = vunpack.c.l.b16 %v890
  %v902 = vunpack.c.l.b16 %v891
  %v903 = vpack.c.b16 %v900, %v899
  %v904 = vpack.c.b16 %v902, %v901
  %v908 = vsel %vm581, %v894, 0
  %910 = vmatprep.subr.bf16.mxu0 0
  %911 = vmatpush1.bf16.msra.mxu0 0
  %912 = vmatprep.subr.bf16.mxu0 0
  %913 = vmatpush1.bf16.msra.mxu0 0
  %914 = vmatprep.subr.bf16.mxu0 0
  %915 = vmatpush1.bf16.msra.mxu0 0
  %916 = vmatprep.subr.bf16.mxu0 0
  %917 = vmatpush1.bf16.msra.mxu0 0
  %918 = vmatprep.subr.bf16.mxu0 0
  %919 = vmatpush1.bf16.msra.mxu0 0
  %920 = vmatprep.subr.bf16.mxu0 0
  %921 = vmatpush1.bf16.msra.mxu0 0
  %922 = vmatprep.subr.bf16.mxu0 0
  %923 = vmatpush1.bf16.msra.mxu0 %v904
  %924 = vmatprep.subr.bf16.mxu0 0
  %925 = vmatpush1.bf16.msra.mxu0 %v903
  %926 = vmatprep.subr.bf16.mxu0 0
  %927 = vmatpush2.bf16.msra.mxu0 0
  %928 = vmatprep.subr.bf16.mxu0 0
  %929 = vmatpush2.bf16.msra.mxu0 0
  %930 = vmatprep.subr.bf16.mxu0 0
  %931 = vmatpush2.bf16.msra.mxu0 0
  %932 = vmatprep.subr.bf16.mxu0 0
  %933 = vmatpush2.bf16.msra.mxu0 0
  %934 = vmatprep.subr.bf16.mxu0 0
  %935 = vmatpush2.bf16.msra.mxu0 0
  %936 = vmatprep.subr.bf16.mxu0 0
  %937 = vmatpush2.bf16.msra.mxu0 0
  %938 = vmatprep.subr.bf16.mxu0 0
  %939 = vmatpush2.bf16.msra.mxu0 0
  %940 = vmatprep.subr.bf16.mxu0 0
  %941 = vmatpush2.bf16.msra.mxu0 0
  %942 = vmatprep.mubr.bf16.mxu0 0
  %943 = vmatmul.mubr.bf16.gmra.mxu0 %v908
  %v944 = vpop.f32.mrf.mxu0
  %v945 = vadd.f32 0.0, %v944
  %v946 = vpop.f32.mrf.mxu0
  %v947 = vpop.f32.mrf.mxu0
  %v948 = vpop.f32.mrf.mxu0
  %949 = vdwg.mxu0
  %v950 = vadd.f32 %v886, %v945
  %v951 = vxor.u32 %v950, 2147483648
  %v952 = vmul.f32 %v951, 1.442695
  %v953 = vpow.pop %v952
  %v954 = vadd.f32 %v953, 1.0
  %v955 = vrcp.pop %v954
  %v956 = vmul.f32 1.0, %v955
  %v957 = vtanh.pop %v950
  %v958 = vmul.f32 %v956, %v873
  %960 = vrot.lane.b32.xlu0 %v957, 32
  %v961 = vpop.permute.xlu0 %960
  %v963 = vmul.f32 %v956, %v961
  %965 = vrot.lane.b32.xlu0 %v963, 32
  %v966 = vpop.permute.xlu0 %965
  %v968 = vadd.f32 %v958, %v966
  %v969 = vtanh.pop %v968
  %971 = vrot.lane.b32.xlu0 %v969, 32
  %v972 = vpop.permute.xlu0 %971
  %v974 = vmul.f32 %v956, %v972
  %976 = vrot.lane.b32.xlu0 %v974, 64
  %v977 = vpop.permute.xlu0 %976
  %979 = vst.msk [vmem:[#allocation3 + $0x8] sm:$0xf] %vm788, %v977
  %s980 = scalar_lea.vmem [#allocation2], 3
  %v981 = vld [vmem:[%s980] ss:$4 sm:$0xf]
  %v982 = vpack.c.bf16 %v974, %v974
  %v983 = vld [vmem:[%s10] sm:$0xf]
  %v984 = vld [vmem:[%s10 + $0x4] sm:$0xf]
  %v985 = vld [vmem:[%s10 + $0x8] sm:$0xf]
  %v986 = vld [vmem:[%s10 + $0xc] sm:$0xf]
  %988 = vrot.lane.b32.xlu0 %v982, 64
  %v989 = vpop.permute.xlu0 %988
  %v994 = vunpack.c.l.b16 %v983
  %v995 = vunpack.c.l.b16 %v984
  %v996 = vunpack.c.l.b16 %v985
  %v997 = vunpack.c.l.b16 %v986
  %v998 = vpack.c.b16 %v995, %v994
  %v999 = vpack.c.b16 %v997, %v996
  %v1003 = vsel %vm581, %v989, 0
  %1005 = vmatprep.subr.bf16.mxu0 0
  %1006 = vmatpush1.bf16.msra.mxu0 0
  %1007 = vmatprep.subr.bf16.mxu0 0
  %1008 = vmatpush1.bf16.msra.mxu0 0
  %1009 = vmatprep.subr.bf16.mxu0 0
  %1010 = vmatpush1.bf16.msra.mxu0 0
  %1011 = vmatprep.subr.bf16.mxu0 0
  %1012 = vmatpush1.bf16.msra.mxu0 0
  %1013 = vmatprep.subr.bf16.mxu0 0
  %1014 = vmatpush1.bf16.msra.mxu0 0
  %1015 = vmatprep.subr.bf16.mxu0 0
  %1016 = vmatpush1.bf16.msra.mxu0 0
  %1017 = vmatprep.subr.bf16.mxu0 0
  %1018 = vmatpush1.bf16.msra.mxu0 %v999
  %1019 = vmatprep.subr.bf16.mxu0 0
  %1020 = vmatpush1.bf16.msra.mxu0 %v998
  %1021 = vmatprep.subr.bf16.mxu0 0
  %1022 = vmatpush2.bf16.msra.mxu0 0
  %1023 = vmatprep.subr.bf16.mxu0 0
  %1024 = vmatpush2.bf16.msra.mxu0 0
  %1025 = vmatprep.subr.bf16.mxu0 0
  %1026 = vmatpush2.bf16.msra.mxu0 0
  %1027 = vmatprep.subr.bf16.mxu0 0
  %1028 = vmatpush2.bf16.msra.mxu0 0
  %1029 = vmatprep.subr.bf16.mxu0 0
  %1030 = vmatpush2.bf16.msra.mxu0 0
  %1031 = vmatprep.subr.bf16.mxu0 0
  %1032 = vmatpush2.bf16.msra.mxu0 0
  %1033 = vmatprep.subr.bf16.mxu0 0
  %1034 = vmatpush2.bf16.msra.mxu0 0
  %1035 = vmatprep.subr.bf16.mxu0 0
  %1036 = vmatpush2.bf16.msra.mxu0 0
  %1037 = vmatprep.mubr.bf16.mxu0 0
  %1038 = vmatmul.mubr.bf16.gmra.mxu0 %v1003
  %v1039 = vpop.f32.mrf.mxu0
  %v1040 = vadd.f32 0.0, %v1039
  %v1041 = vpop.f32.mrf.mxu0
  %v1042 = vpop.f32.mrf.mxu0
  %v1043 = vpop.f32.mrf.mxu0
  %1044 = vdwg.mxu0
  %v1045 = vadd.f32 %v981, %v1040
  %v1046 = vxor.u32 %v1045, 2147483648
  %v1047 = vmul.f32 %v1046, 1.442695
  %v1048 = vpow.pop %v1047
  %v1049 = vadd.f32 %v1048, 1.0
  %v1050 = vrcp.pop %v1049
  %v1051 = vmul.f32 1.0, %v1050
  %v1052 = vtanh.pop %v1045
  %v1053 = vmul.f32 %v1051, %v968
  %1055 = vrot.lane.b32.xlu0 %v1052, 32
  %v1056 = vpop.permute.xlu0 %1055
  %v1058 = vmul.f32 %v1051, %v1056
  %1060 = vrot.lane.b32.xlu0 %v1058, 32
  %v1061 = vpop.permute.xlu0 %1060
  %v1063 = vadd.f32 %v1053, %v1061
  %v1064 = vtanh.pop %v1063
  %1066 = vrot.lane.b32.xlu0 %v1064, 32
  %v1067 = vpop.permute.xlu0 %1066
  %v1069 = vmul.f32 %v1051, %v1067
  %1071 = vrot.lane.b32.xlu0 %v1069, 64
  %v1072 = vpop.permute.xlu0 %1071
  %1074 = vst.msk [vmem:[#allocation3 + $0xc] sm:$0xf] %vm788, %v1072
  %v1075 = vld [vmem:[#allocation3] sm:$0xff]
  %v1076 = vld [vmem:[#allocation3 + $0x8] sm:$0xff]
  %v1077 = vpack.c.bf16 %v1076, %v1075
  %v1078 = vld [vmem:[%s12] sm:$0xf]
  %v1079 = vld [vmem:[%s12 + $0x4] sm:$0xf]
  %v1080 = vld [vmem:[%s12 + $0x8] sm:$0xf]
  %v1081 = vld [vmem:[%s12 + $0xc] sm:$0xf]
  %v1082 = vld [vmem:[%s14] sm:$0x1]
  %v1084 = vlaneseq
  %v1085 = vshrl.u32 %v1084, 7
  %v1086 = vsub.s32 0, %v1085
  %v1087 = vrot.slane %v1082, %v1086
  %v1093 = vunpack.c.l.b16 %v1078
  %v1094 = vunpack.c.l.b16 %v1079
  %v1095 = vunpack.c.l.b16 %v1080
  %v1096 = vunpack.c.l.b16 %v1081
  %v1097 = vpack.c.b16 %v1094, %v1093
  %v1098 = vpack.c.b16 %v1096, %v1095
  %v1102 = vsel %vm581, %v1077, 0
  %1104 = vmatprep.subr.bf16.mxu0 0
  %1105 = vmatpush1.bf16.msra.mxu0 0
  %1106 = vmatprep.subr.bf16.mxu0 0
  %1107 = vmatpush1.bf16.msra.mxu0 0
  %1108 = vmatprep.subr.bf16.mxu0 0
  %1109 = vmatpush1.bf16.msra.mxu0 0
  %1110 = vmatprep.subr.bf16.mxu0 0
  %1111 = vmatpush1.bf16.msra.mxu0 0
  %1112 = vmatprep.subr.bf16.mxu0 0
  %1113 = vmatpush1.bf16.msra.mxu0 0
  %1114 = vmatprep.subr.bf16.mxu0 0
  %1115 = vmatpush1.bf16.msra.mxu0 0
  %1116 = vmatprep.subr.bf16.mxu0 0
  %1117 = vmatpush1.bf16.msra.mxu0 %v1098
  %1118 = vmatprep.subr.bf16.mxu0 0
  %1119 = vmatpush1.bf16.msra.mxu0 %v1097
  %1120 = vmatprep.subr.bf16.mxu0 0
  %1121 = vmatpush2.bf16.msra.mxu0 0
  %1122 = vmatprep.subr.bf16.mxu0 0
  %1123 = vmatpush2.bf16.msra.mxu0 0
  %1124 = vmatprep.subr.bf16.mxu0 0
  %1125 = vmatpush2.bf16.msra.mxu0 0
  %1126 = vmatprep.subr.bf16.mxu0 0
  %1127 = vmatpush2.bf16.msra.mxu0 0
  %1128 = vmatprep.subr.bf16.mxu0 0
  %1129 = vmatpush2.bf16.msra.mxu0 0
  %1130 = vmatprep.subr.bf16.mxu0 0
  %1131 = vmatpush2.bf16.msra.mxu0 0
  %1132 = vmatprep.subr.bf16.mxu0 0
  %1133 = vmatpush2.bf16.msra.mxu0 0
  %1134 = vmatprep.subr.bf16.mxu0 0
  %1135 = vmatpush2.bf16.msra.mxu0 0
  %1136 = vmatprep.mubr.bf16.mxu0 0
  %1137 = vmatmul.mubr.bf16.gmra.mxu0 %v1102
  %v1138 = vpop.f32.mrf.mxu0
  %v1139 = vadd.f32 %v1087, %v1138
  %v1140 = vpop.f32.mrf.mxu0
  %v1141 = vpop.f32.mrf.mxu0
  %v1142 = vadd.f32 %v1087, %v1141
  %v1143 = vpop.f32.mrf.mxu0
  %1144 = vdwg.mxu0
  %1145 = vst [vmem:[#allocation2] sm:$0xff] %v1139
  %1146 = vst [vmem:[#allocation2 + $0x8] sm:$0xff] %v1142
  %v1147 = vld [vmem:[#allocation2] sm:$0xf]
  %v1148 = vld [vmem:[%s13] sm:$0xf]
  %v1149 = vld [vmem:[%s13 + $0x4] sm:$0xf]
  %v1150 = vld [vmem:[%s13 + $0x8] sm:$0xf]
  %v1151 = vld [vmem:[%s13 + $0xc] sm:$0xf]
  %v1156 = vunpack.c.l.b16 %v1148
  %v1157 = vunpack.c.l.b16 %v1149
  %v1158 = vunpack.c.l.b16 %v1150
  %v1159 = vunpack.c.l.b16 %v1151
  %v1160 = vpack.c.b16 %v1157, %v1156
  %v1161 = vpack.c.b16 %v1159, %v1158
  %1164 = vmatprep.subr.bf16.mxu0 0
  %1165 = vmatpush1.bf16.msra.mxu0 0
  %1166 = vmatprep.subr.bf16.mxu0 0
  %1167 = vmatpush1.bf16.msra.mxu0 0
  %1168 = vmatprep.subr.bf16.mxu0 0
  %1169 = vmatpush1.bf16.msra.mxu0 0
  %1170 = vmatprep.subr.bf16.mxu0 0
  %1171 = vmatpush1.bf16.msra.mxu0 0
  %1172 = vmatprep.subr.bf16.mxu0 0
  %1173 = vmatpush1.bf16.msra.mxu0 0
  %1174 = vmatprep.subr.bf16.mxu0 0
  %1175 = vmatpush1.bf16.msra.mxu0 0
  %1176 = vmatprep.subr.bf16.mxu0 0
  %1177 = vmatpush1.bf16.msra.mxu0 %v1161
  %1178 = vmatprep.subr.bf16.mxu0 0
  %1179 = vmatpush1.bf16.msra.mxu0 %v1160
  %1180 = vmatprep.subr.bf16.mxu0 0
  %1181 = vmatpush2.bf16.msra.mxu0 0
  %1182 = vmatprep.subr.bf16.mxu0 0
  %1183 = vmatpush2.bf16.msra.mxu0 0
  %1184 = vmatprep.subr.bf16.mxu0 0
  %1185 = vmatpush2.bf16.msra.mxu0 0
  %1186 = vmatprep.subr.bf16.mxu0 0
  %1187 = vmatpush2.bf16.msra.mxu0 0
  %1188 = vmatprep.subr.bf16.mxu0 0
  %1189 = vmatpush2.bf16.msra.mxu0 0
  %1190 = vmatprep.subr.bf16.mxu0 0
  %1191 = vmatpush2.bf16.msra.mxu0 0
  %1192 = vmatprep.subr.bf16.mxu0 0
  %1193 = vmatpush2.bf16.msra.mxu0 0
  %1194 = vmatprep.subr.bf16.mxu0 0
  %1195 = vmatpush2.bf16.msra.mxu0 0
  %1196 = vmatprep.mubr.bf16.mxu0 0
  %1197 = vmatmul.mubr.bf16.gmra.mxu0 %v717
  %v1198 = vpop.f32.mrf.mxu0
  %v1199 = vadd.f32 0.0, %v1198
  %v1200 = vpop.f32.mrf.mxu0
  %v1201 = vpop.f32.mrf.mxu0
  %v1202 = vpop.f32.mrf.mxu0
  %1203 = vdwg.mxu0
  %v1204 = vadd.f32 %v1147, %v1199
  %v1205 = vxor.u32 %v1204, 2147483648
  %v1206 = vmul.f32 %v1205, 1.442695
  %v1207 = vpow.pop %v1206
  %v1208 = vadd.f32 %v1207, 1.0
  %v1209 = vrcp.pop %v1208
  %v1210 = vmul.f32 1.0, %v1209
  %v1211 = vtanh.pop %v1204
  %v1212 = vmul.f32 %v1210, 0.0
  %1214 = vrot.lane.b32.xlu0 %v1211, 32
  %v1215 = vpop.permute.xlu0 %1214
  %v1217 = vmul.f32 %v1210, %v1215
  %1219 = vrot.lane.b32.xlu0 %v1217, 32
  %v1220 = vpop.permute.xlu0 %1219
  %v1222 = vadd.f32 %v1212, %v1220
  %v1223 = vtanh.pop %v1222
  %1225 = vrot.lane.b32.xlu0 %v1223, 32
  %v1226 = vpop.permute.xlu0 %1225
  %v1228 = vmul.f32 %v1210, %v1226
  %1230 = vrot.lane.b32.xlu0 %v1228, 64
  %v1231 = vpop.permute.xlu0 %1230
  %1233 = vst.msk [vmem:[%s15] sm:$0xf] %vm788, %v1231
  %v1234 = vld [vmem:[#allocation2 + $0x4] sm:$0xf]
  %v1235 = vpack.c.bf16 %v1228, %v1228
  %v1236 = vld [vmem:[%s13] sm:$0xf]
  %v1237 = vld [vmem:[%s13 + $0x4] sm:$0xf]
  %v1238 = vld [vmem:[%s13 + $0x8] sm:$0xf]
  %v1239 = vld [vmem:[%s13 + $0xc] sm:$0xf]
  %1241 = vrot.lane.b32.xlu0 %v1235, 64
  %v1242 = vpop.permute.xlu0 %1241
  %v1247 = vunpack.c.l.b16 %v1236
  %v1248 = vunpack.c.l.b16 %v1237
  %v1249 = vunpack.c.l.b16 %v1238
  %v1250 = vunpack.c.l.b16 %v1239
  %v1251 = vpack.c.b16 %v1248, %v1247
  %v1252 = vpack.c.b16 %v1250, %v1249
  %v1256 = vsel %vm581, %v1242, 0
  %1258 = vmatprep.subr.bf16.mxu0 0
  %1259 = vmatpush1.bf16.msra.mxu0 0
  %1260 = vmatprep.subr.bf16.mxu0 0
  %1261 = vmatpush1.bf16.msra.mxu0 0
  %1262 = vmatprep.subr.bf16.mxu0 0
  %1263 = vmatpush1.bf16.msra.mxu0 0
  %1264 = vmatprep.subr.bf16.mxu0 0
  %1265 = vmatpush1.bf16.msra.mxu0 0
  %1266 = vmatprep.subr.bf16.mxu0 0
  %1267 = vmatpush1.bf16.msra.mxu0 0
  %1268 = vmatprep.subr.bf16.mxu0 0
  %1269 = vmatpush1.bf16.msra.mxu0 0
  %1270 = vmatprep.subr.bf16.mxu0 0
  %1271 = vmatpush1.bf16.msra.mxu0 %v1252
  %1272 = vmatprep.subr.bf16.mxu0 0
  %1273 = vmatpush1.bf16.msra.mxu0 %v1251
  %1274 = vmatprep.subr.bf16.mxu0 0
  %1275 = vmatpush2.bf16.msra.mxu0 0
  %1276 = vmatprep.subr.bf16.mxu0 0
  %1277 = vmatpush2.bf16.msra.mxu0 0
  %1278 = vmatprep.subr.bf16.mxu0 0
  %1279 = vmatpush2.bf16.msra.mxu0 0
  %1280 = vmatprep.subr.bf16.mxu0 0
  %1281 = vmatpush2.bf16.msra.mxu0 0
  %1282 = vmatprep.subr.bf16.mxu0 0
  %1283 = vmatpush2.bf16.msra.mxu0 0
  %1284 = vmatprep.subr.bf16.mxu0 0
  %1285 = vmatpush2.bf16.msra.mxu0 0
  %1286 = vmatprep.subr.bf16.mxu0 0
  %1287 = vmatpush2.bf16.msra.mxu0 0
  %1288 = vmatprep.subr.bf16.mxu0 0
  %1289 = vmatpush2.bf16.msra.mxu0 0
  %1290 = vmatprep.mubr.bf16.mxu0 0
  %1291 = vmatmul.mubr.bf16.gmra.mxu0 %v1256
  %v1292 = vpop.f32.mrf.mxu0
  %v1293 = vadd.f32 0.0, %v1292
  %v1294 = vpop.f32.mrf.mxu0
  %v1295 = vpop.f32.mrf.mxu0
  %v1296 = vpop.f32.mrf.mxu0
  %1297 = vdwg.mxu0
  %v1298 = vadd.f32 %v1234, %v1293
  %v1299 = vxor.u32 %v1298, 2147483648
  %v1300 = vmul.f32 %v1299, 1.442695
  %v1301 = vpow.pop %v1300
  %v1302 = vadd.f32 %v1301, 1.0
  %v1303 = vrcp.pop %v1302
  %v1304 = vmul.f32 1.0, %v1303
  %v1305 = vtanh.pop %v1298
  %v1306 = vmul.f32 %v1304, %v1222
  %1308 = vrot.lane.b32.xlu0 %v1305, 32
  %v1309 = vpop.permute.xlu0 %1308
  %v1311 = vmul.f32 %v1304, %v1309
  %1313 = vrot.lane.b32.xlu0 %v1311, 32
  %v1314 = vpop.permute.xlu0 %1313
  %v1316 = vadd.f32 %v1306, %v1314
  %v1317 = vtanh.pop %v1316
  %1319 = vrot.lane.b32.xlu0 %v1317, 32
  %v1320 = vpop.permute.xlu0 %1319
  %v1322 = vmul.f32 %v1304, %v1320
  %1324 = vrot.lane.b32.xlu0 %v1322, 64
  %v1325 = vpop.permute.xlu0 %1324
  %1327 = vst.msk [vmem:[%s15 + $0x4] sm:$0xf] %vm788, %v1325
  %v1328 = vld [vmem:[#allocation2 + $0x8] sm:$0xf]
  %v1329 = vpack.c.bf16 %v1322, %v1322
  %v1330 = vld [vmem:[%s13] sm:$0xf]
  %v1331 = vld [vmem:[%s13 + $0x4] sm:$0xf]
  %v1332 = vld [vmem:[%s13 + $0x8] sm:$0xf]
  %v1333 = vld [vmem:[%s13 + $0xc] sm:$0xf]
  %1335 = vrot.lane.b32.xlu0 %v1329, 64
  %v1336 = vpop.permute.xlu0 %1335
  %v1341 = vunpack.c.l.b16 %v1330
  %v1342 = vunpack.c.l.b16 %v1331
  %v1343 = vunpack.c.l.b16 %v1332
  %v1344 = vunpack.c.l.b16 %v1333
  %v1345 = vpack.c.b16 %v1342, %v1341
  %v1346 = vpack.c.b16 %v1344, %v1343
  %v1350 = vsel %vm581, %v1336, 0
  %1352 = vmatprep.subr.bf16.mxu0 0
  %1353 = vmatpush1.bf16.msra.mxu0 0
  %1354 = vmatprep.subr.bf16.mxu0 0
  %1355 = vmatpush1.bf16.msra.mxu0 0
  %1356 = vmatprep.subr.bf16.mxu0 0
  %1357 = vmatpush1.bf16.msra.mxu0 0
  %1358 = vmatprep.subr.bf16.mxu0 0
  %1359 = vmatpush1.bf16.msra.mxu0 0
  %1360 = vmatprep.subr.bf16.mxu0 0
  %1361 = vmatpush1.bf16.msra.mxu0 0
  %1362 = vmatprep.subr.bf16.mxu0 0
  %1363 = vmatpush1.bf16.msra.mxu0 0
  %1364 = vmatprep.subr.bf16.mxu0 0
  %1365 = vmatpush1.bf16.msra.mxu0 %v1346
  %1366 = vmatprep.subr.bf16.mxu0 0
  %1367 = vmatpush1.bf16.msra.mxu0 %v1345
  %1368 = vmatprep.subr.bf16.mxu0 0
  %1369 = vmatpush2.bf16.msra.mxu0 0
  %1370 = vmatprep.subr.bf16.mxu0 0
  %1371 = vmatpush2.bf16.msra.mxu0 0
  %1372 = vmatprep.subr.bf16.mxu0 0
  %1373 = vmatpush2.bf16.msra.mxu0 0
  %1374 = vmatprep.subr.bf16.mxu0 0
  %1375 = vmatpush2.bf16.msra.mxu0 0
  %1376 = vmatprep.subr.bf16.mxu0 0
  %1377 = vmatpush2.bf16.msra.mxu0 0
  %1378 = vmatprep.subr.bf16.mxu0 0
  %1379 = vmatpush2.bf16.msra.mxu0 0
  %1380 = vmatprep.subr.bf16.mxu0 0
  %1381 = vmatpush2.bf16.msra.mxu0 0
  %1382 = vmatprep.subr.bf16.mxu0 0
  %1383 = vmatpush2.bf16.msra.mxu0 0
  %1384 = vmatprep.mubr.bf16.mxu0 0
  %1385 = vmatmul.mubr.bf16.gmra.mxu0 %v1350
  %v1386 = vpop.f32.mrf.mxu0
  %v1387 = vadd.f32 0.0, %v1386
  %v1388 = vpop.f32.mrf.mxu0
  %v1389 = vpop.f32.mrf.mxu0
  %v1390 = vpop.f32.mrf.mxu0
  %1391 = vdwg.mxu0
  %v1392 = vadd.f32 %v1328, %v1387
  %v1393 = vxor.u32 %v1392, 2147483648
  %v1394 = vmul.f32 %v1393, 1.442695
  %v1395 = vpow.pop %v1394
  %v1396 = vadd.f32 %v1395, 1.0
  %v1397 = vrcp.pop %v1396
  %v1398 = vmul.f32 1.0, %v1397
  %v1399 = vtanh.pop %v1392
  %v1400 = vmul.f32 %v1398, %v1316
  %1402 = vrot.lane.b32.xlu0 %v1399, 32
  %v1403 = vpop.permute.xlu0 %1402
  %v1405 = vmul.f32 %v1398, %v1403
  %1407 = vrot.lane.b32.xlu0 %v1405, 32
  %v1408 = vpop.permute.xlu0 %1407
  %v1410 = vadd.f32 %v1400, %v1408
  %v1411 = vtanh.pop %v1410
  %1413 = vrot.lane.b32.xlu0 %v1411, 32
  %v1414 = vpop.permute.xlu0 %1413
  %v1416 = vmul.f32 %v1398, %v1414
  %1418 = vrot.lane.b32.xlu0 %v1416, 64
  %v1419 = vpop.permute.xlu0 %1418
  %1421 = vst.msk [vmem:[%s15 + $0x8] sm:$0xf] %vm788, %v1419
  %v1422 = vld [vmem:[#allocation2 + $0xc] sm:$0xf]
  %v1423 = vpack.c.bf16 %v1416, %v1416
  %v1424 = vld [vmem:[%s13] sm:$0xf]
  %v1425 = vld [vmem:[%s13 + $0x4] sm:$0xf]
  %v1426 = vld [vmem:[%s13 + $0x8] sm:$0xf]
  %v1427 = vld [vmem:[%s13 + $0xc] sm:$0xf]
  %1429 = vrot.lane.b32.xlu0 %v1423, 64
  %v1430 = vpop.permute.xlu0 %1429
  %v1435 = vunpack.c.l.b16 %v1424
  %v1436 = vunpack.c.l.b16 %v1425
  %v1437 = vunpack.c.l.b16 %v1426
  %v1438 = vunpack.c.l.b16 %v1427
  %v1439 = vpack.c.b16 %v1436, %v1435
  %v1440 = vpack.c.b16 %v1438, %v1437
  %v1444 = vsel %vm581, %v1430, 0
  %1446 = vmatprep.subr.bf16.mxu0 0
  %1447 = vmatpush1.bf16.msra.mxu0 0
  %1448 = vmatprep.subr.bf16.mxu0 0
  %1449 = vmatpush1.bf16.msra.mxu0 0
  %1450 = vmatprep.subr.bf16.mxu0 0
  %1451 = vmatpush1.bf16.msra.mxu0 0
  %1452 = vmatprep.subr.bf16.mxu0 0
  %1453 = vmatpush1.bf16.msra.mxu0 0
  %1454 = vmatprep.subr.bf16.mxu0 0
  %1455 = vmatpush1.bf16.msra.mxu0 0
  %1456 = vmatprep.subr.bf16.mxu0 0
  %1457 = vmatpush1.bf16.msra.mxu0 0
  %1458 = vmatprep.subr.bf16.mxu0 0
  %1459 = vmatpush1.bf16.msra.mxu0 %v1440
  %1460 = vmatprep.subr.bf16.mxu0 0
  %1461 = vmatpush1.bf16.msra.mxu0 %v1439
  %1462 = vmatprep.subr.bf16.mxu0 0
  %1463 = vmatpush2.bf16.msra.mxu0 0
  %1464 = vmatprep.subr.bf16.mxu0 0
  %1465 = vmatpush2.bf16.msra.mxu0 0
  %1466 = vmatprep.subr.bf16.mxu0 0
  %1467 = vmatpush2.bf16.msra.mxu0 0
  %1468 = vmatprep.subr.bf16.mxu0 0
  %1469 = vmatpush2.bf16.msra.mxu0 0
  %1470 = vmatprep.subr.bf16.mxu0 0
  %1471 = vmatpush2.bf16.msra.mxu0 0
  %1472 = vmatprep.subr.bf16.mxu0 0
  %1473 = vmatpush2.bf16.msra.mxu0 0
  %1474 = vmatprep.subr.bf16.mxu0 0
  %1475 = vmatpush2.bf16.msra.mxu0 0
  %1476 = vmatprep.subr.bf16.mxu0 0
  %1477 = vmatpush2.bf16.msra.mxu0 0
  %1478 = vmatprep.mubr.bf16.mxu0 0
  %1479 = vmatmul.mubr.bf16.gmra.mxu0 %v1444
  %v1480 = vpop.f32.mrf.mxu0
  %v1481 = vadd.f32 0.0, %v1480
  %v1482 = vpop.f32.mrf.mxu0
  %v1483 = vpop.f32.mrf.mxu0
  %v1484 = vpop.f32.mrf.mxu0
  %1485 = vdwg.mxu0
  %v1486 = vadd.f32 %v1422, %v1481
  %v1487 = vxor.u32 %v1486, 2147483648
  %v1488 = vmul.f32 %v1487, 1.442695
  %v1489 = vpow.pop %v1488
  %v1490 = vadd.f32 %v1489, 1.0
  %v1491 = vrcp.pop %v1490
  %v1492 = vmul.f32 1.0, %v1491
  %v1493 = vtanh.pop %v1486
  %v1494 = vmul.f32 %v1492, %v1410
  %1496 = vrot.lane.b32.xlu0 %v1493, 32
  %v1497 = vpop.permute.xlu0 %1496
  %v1499 = vmul.f32 %v1492, %v1497
  %1501 = vrot.lane.b32.xlu0 %v1499, 32
  %v1502 = vpop.permute.xlu0 %1501
  %v1504 = vadd.f32 %v1494, %v1502
  %v1505 = vtanh.pop %v1504
  %1507 = vrot.lane.b32.xlu0 %v1505, 32
  %v1508 = vpop.permute.xlu0 %1507
  %v1510 = vmul.f32 %v1492, %v1508
  %1512 = vrot.lane.b32.xlu0 %v1510, 64
  %v1513 = vpop.permute.xlu0 %1512
  %1515 = vst.msk [vmem:[%s15 + $0xc] sm:$0xf] %vm788, %v1513
  // Predicated region
  $region62: #{video_feature_network.3} parent=0 // pred_check
    _
  $region63: #{video_feature_network.3} parent=0 // pred_check_branch
    %1517 = sbr.rel (0) target = $region65
  $region64: #{video_feature_network.3} parent=0 // pred_region
    _
  $region65: #{video_feature_network.3} parent=0 // pred_fallthru
    _
  // Predicated region
  $region66: #{video_feature_network.3} parent=0 // pred_check
    _
  $region67: #{video_feature_network.3} parent=0 // pred_check_branch
    %1519 = sbr.rel (0) target = $region69
  $region68: #{video_feature_network.3} parent=0 // pred_region
    _
  $region69: #{video_feature_network.3} parent=0 // pred_fallthru
    _

</llo_original>
